<compile_context>
chip_gen: v5e
topology: v5e:2x2
jax: 0.10.0
libtpu: 0.0.40
codegen_flags: <defaults>
</compile_context>

<pallas_src>
import functools

import jax
import jax.numpy as jnp
from jax import lax
from jax.experimental import pallas as pl
from jax.experimental.pallas import tpu as pltpu


def _round_up(x, m):
    return -(-x // m) * m


def _pick_row_tile(H, W, k_lanes, itemsize, budget=6 << 20):
    """Largest divisor of H whose colw scratch fits `budget`, preferring >=2
    row tiles (pipeline depth / megacore sharding)."""
    fits = [t for t in range(1, H + 1)
            if H % t == 0 and (t + 2) * W * k_lanes * itemsize <= budget]
    if not fits:
        return 1
    multi = [t for t in fits if H // t >= 2]
    return max(multi) if multi else max(fits)


# ----------------------------------------------------------------------------
# Conv kernel: one (batch n, row-tile r) step of a 3x3 "same" conv.
#   - horizontal taps packed on lanes of a small haloed scratch (3 stores),
#   - vertical taps = free static row offsets into that scratch (3 matmuls),
#   - fused per-step partial BatchNorm statistics,
#   - optional fused previous-stage BN scale/shift + ReLU prologue.
# ----------------------------------------------------------------------------
def _make_conv_kernel(H, W, TH, Cin, Cp, R, fuse_bn_relu, compute_dtype):
    cdt = compute_dtype

    def kernel(*refs):
        if fuse_bn_relu:
            x_ref, scale_ref, shift_ref, w_ref, y_ref, sum_ref, sq_ref, colw = refs
        else:
            x_ref, w_ref, y_ref, sum_ref, sq_ref, colw = refs

        r = pl.program_id(1)
        row0 = pl.multiple_of(r * TH, TH)       # first image row of this tile

        if fuse_bn_relu:
            sc = scale_ref[...].reshape(1, 1, Cp)
            sh = shift_ref[...].reshape(1, 1, Cp)

        def prep(v):
            # Previous-stage BN + ReLU prologue in f32 (returns f32).  The
            # padding positions of colw stay exactly zero, which matches
            # PyTorch zero-padding applied AFTER BN+ReLU.
            v = v.astype(jnp.float32)
            if fuse_bn_relu:
                v = jnp.maximum(v * sc + sh, 0.0)
            return v

        keep_top = (r > 0).astype(jnp.float32)       # 0 at the image top
        keep_bot = (r < R - 1).astype(jnp.float32)   # 0 at the image bottom

        # ---- build the haloed, horizontally pre-shifted patch scratch ------
        for g in range(3):                           # horizontal tap, ox = g-1
            ox = g - 1
            jlo, jhi = max(0, -ox), W - max(0, ox)   # dest cols   (static)
            slo, shi = jlo + ox, jhi + ox            # source cols (static)
            lane = slice(g * Cin, (g + 1) * Cin)

            # interior rows of the tile (always valid)
            colw[1:TH + 1, jlo:jhi, lane] = prep(
                x_ref[pl.ds(row0, TH), slo:shi, :]).astype(cdt)

            # top / bottom halo rows: neighbour rows, or zero at image edges
            vt = prep(x_ref[pl.ds(jnp.maximum(row0 - 1, 0), 1), slo:shi, :])
            colw[0:1, jlo:jhi, lane] = (vt * keep_top).astype(cdt)
            vb = prep(x_ref[pl.ds(jnp.minimum(row0 + TH, H - 1), 1), slo:shi, :])
            colw[TH + 1:TH + 2, jlo:jhi, lane] = (vb * keep_bot).astype(cdt)

            # The single padding column this tap never writes.  Zeroed every
            # step (tiny strip): the scratch persists across grid steps and
            # across TensorCores, so a "zero only at program_id==0" shortcut
            # would be incorrect under megacore grid sharding.
            if ox == -1:
                colw[:, 0:1, lane] = jnp.zeros((TH + 2, 1, Cin), cdt)
            elif ox == 1:
                colw[:, W - 1:W, lane] = jnp.zeros((TH + 2, 1, Cin), cdt)

        # ---- three MXU matmuls: vertical taps are free row offsets ---------
        acc = None
        for ky in range(3):
            # free view: W % 8 == 0 keeps this (TH, W) -> TH*W merge a no-op
            patch = colw[ky:ky + TH].reshape(TH * W, 3 * Cin)
            d = jnp.dot(patch, w_ref[ky], preferred_element_type=jnp.float32)
            acc = d if acc is None else acc + d

        y_ref[...] = acc.astype(y_ref.dtype)          # lane-dense (TH*W, Cp)
        # fused per-(n, r) partial BatchNorm statistics (f32)
        sum_ref[...] = jnp.sum(acc, axis=0, keepdims=True)
        sq_ref[...] = jnp.sum(acc * acc, axis=0, keepdims=True)

    return kernel


def conv3x3_bn_stats(x_nhwc, w_slab, scale=None, shift=None, *,
                     row_tile=None, out_dtype=jnp.float32,
                     compute_dtype=jnp.float32):
    """3x3 'same' conv (no bias) + fused per-tile BN partial statistics.

    x_nhwc : (N, H, W, Cin)
    w_slab : (3, 3*Cin, Cp) -- HWIO weights with the horizontal taps folded
             into the contraction axis, Cout zero-padded to lane-dense Cp.
    scale/shift : optional (1, Cp) previous-stage BN affine, fused (with ReLU)
             into the conv prologue.
    Returns y (N, H*W, Cp) [out_dtype], psum (N, R, 1, Cp), psq (N, R, 1, Cp).
    """
    N, H, W, Cin = x_nhwc.shape
    _, K, Cp = w_slab.shape
    assert K == 3 * Cin
    # Guard the (TH, W) -> TH*W merge so it stays a free metadata reshape.
    assert W % 8 == 0, "W must be a multiple of 8 (sublane alignment)"
    if row_tile is None:
        row_tile = _pick_row_tile(H, W, 3 * Cin, jnp.dtype(compute_dtype).itemsize)
    TH = row_tile
    assert H % TH == 0, "row_tile must divide H"
    R = H // TH
    fuse = scale is not None

    kernel = _make_conv_kernel(H, W, TH, Cin, Cp, R, fuse, compute_dtype)

    in_specs = [pl.BlockSpec((None, H, W, Cin), lambda n, r: (n, 0, 0, 0))]
    args = [x_nhwc]
    if fuse:
        in_specs += [pl.BlockSpec((1, Cp), lambda n, r: (0, 0)),
                     pl.BlockSpec((1, Cp), lambda n, r: (0, 0))]
        args += [scale, shift]
    in_specs += [pl.BlockSpec((3, 3 * Cin, Cp), lambda n, r: (0, 0, 0))]
    args += [w_slab]

    out_shape = (jax.ShapeDtypeStruct((N, H * W, Cp), out_dtype),
                 jax.ShapeDtypeStruct((N, R, 1, Cp), jnp.float32),
                 jax.ShapeDtypeStruct((N, R, 1, Cp), jnp.float32))
    out_specs = [pl.BlockSpec((None, TH * W, Cp), lambda n, r: (n, r, 0)),
                 pl.BlockSpec((None, None, 1, Cp), lambda n, r: (n, r, 0, 0)),
                 pl.BlockSpec((None, None, 1, Cp), lambda n, r: (n, r, 0, 0))]

    return pl.pallas_call(
        kernel,
        out_shape=out_shape,
        grid_spec=pltpu.PrefetchScalarGridSpec(
            num_scalar_prefetch=0,
            grid=(N, R),
            in_specs=in_specs,
            out_specs=out_specs,
            scratch_shapes=[pltpu.VMEM((TH + 2, W, 3 * Cin), compute_dtype)]),
        compiler_params=pltpu.CompilerParams(
            # Both axes independent -> megacore (v7x 2-TC) can shard the grid.
            dimension_semantics=("parallel", "parallel"),
            # v5e/v6e: physical VMEM is 128 MiB, only the scoped default
            # (16/32 MiB) needed raising.  v7x: 64 MiB is the *physical* cap --
            # keep row_tile sized so scratch + double-buffered blocks stay well
            # under it (bf16 compute dtype halves the footprint).
            vmem_limit_bytes=64 * 1024 * 1024),
    )(*args)


# ----------------------------------------------------------------------------
# Wrapper-side BN statistics reduction (tiny, per-channel, plain XLA).
# ----------------------------------------------------------------------------
def _bn_scale_shift(psum, psq, count, gamma_p, beta_p, eps=1e-5):
    # psum/psq: (N, R, 1, Cp) per-(batch, row-tile) partials.
    # NOTE: E[x^2] - mean^2 in f32 is fine at these sizes; for very large
    # N*H*W switch to a shifted two-pass / Welford accumulation.
    s = jnp.sum(psum, axis=(0, 1, 2))
    q = jnp.sum(psq, axis=(0, 1, 2))
    mean = s / count
    var = jnp.maximum(q / count - mean * mean, 0.0)   # biased var (PyTorch BN)
    scale = gamma_p * lax.rsqrt(var + eps)
    shift = beta_p - mean * scale
    return scale.reshape(1, -1), shift.reshape(1, -1)


# ----------------------------------------------------------------------------
# DoubleConv forward (Pallas path) and a pure-JAX reference for validation.
# ----------------------------------------------------------------------------
@functools.partial(jax.jit,
                   static_argnames=("compute_dtype", "interm_dtype", "row_tile"))
def double_conv_pallas(x_nchw, p, *, compute_dtype=jnp.float32,
                       interm_dtype=jnp.float32, row_tile=None):
    N, Cin, H, W = x_nchw.shape
    Cout = p["w1"].shape[-1]
    Cp = _round_up(Cout, 128)                 # lane-dense padded channel count
    eps = 1e-5
    count = N * H * W

    x = jnp.transpose(x_nchw, (0, 2, 3, 1)).astype(compute_dtype)  # NCHW->NHWC

    # Weight prep: (3, 3*Cin, Cp) slabs (horizontal taps folded into K), output
    # (and conv2's input) channels zero-padded to Cp.  Conv biases are dropped:
    # a bias feeding training-mode BatchNorm is cancelled by the mean
    # subtraction (output-equivalent).
    w1p = jnp.pad(p["w1"], ((0, 0), (0, 0), (0, 0), (0, Cp - Cout)))
    w1p = w1p.reshape(3, 3 * Cin, Cp).astype(compute_dtype)
    w2p = jnp.pad(p["w2"], ((0, 0), (0, 0), (0, Cp - Cout), (0, Cp - Cout)))
    w2p = w2p.reshape(3, 3 * Cp, Cp).astype(compute_dtype)
    g1 = jnp.pad(p["g1"], (0, Cp - Cout))      # gamma padded with 0 keeps the
    b1 = jnp.pad(p["beta1"], (0, Cp - Cout))   # padded channels exactly zero
    g2 = jnp.pad(p["g2"], (0, Cp - Cout))
    b2 = jnp.pad(p["beta2"], (0, Cp - Cout))

    # Stage 1: conv1 + fused BN1 partial statistics.
    y1, s1, q1 = conv3x3_bn_stats(x, w1p, row_tile=row_tile,
                                  out_dtype=interm_dtype,
                                  compute_dtype=compute_dtype)
    scale1, shift1 = _bn_scale_shift(s1, q1, count, g1, b1, eps)

    # Stage 2: BN1+ReLU fused into conv2's prologue + fused BN2 statistics.
    y1 = y1.reshape(N, H, W, Cp)                      # free metadata reshape
    y2, s2, q2 = conv3x3_bn_stats(y1, w2p, scale1, shift1, row_tile=row_tile,
                                  out_dtype=jnp.float32,
                                  compute_dtype=compute_dtype)
    scale2, shift2 = _bn_scale_shift(s2, q2, count, g2, b2, eps)

    # BN2 apply + ReLU + channel slice as plain XLA ops so they fuse with the
    # final reshape/transpose (single HBM pass over the activation).
    out = jnp.maximum(y2 * scale2.reshape(1, 1, Cp) + shift2.reshape(1, 1, Cp),
                      0.0)
    out = out.reshape(N, H, W, Cp)[..., :Cout]
    return jnp.transpose(out, (0, 3, 1, 2)).astype(jnp.float32)  # NHWC -> NCHW


def double_conv_ref(x_nchw, p):
    def conv(x, w_hwio, b):
        w_oihw = jnp.transpose(w_hwio, (3, 2, 0, 1))
        y = lax.conv_general_dilated(
            x, w_oihw, (1, 1), "SAME",
            dimension_numbers=("NCHW", "OIHW", "NCHW"))
        return y + b.reshape(1, -1, 1, 1)

    def bn_relu(x, g, bb):
        mean = jnp.mean(x, axis=(0, 2, 3), keepdims=True)
        var = jnp.mean((x - mean) ** 2, axis=(0, 2, 3), keepdims=True)
        y = (x - mean) / jnp.sqrt(var + 1e-5)
        y = y * g.reshape(1, -1, 1, 1) + bb.reshape(1, -1, 1, 1)
        return jnp.maximum(y, 0.0)

    x = bn_relu(conv(x_nchw, p["w1"], p["b1"]), p["g1"], p["beta1"])
    x = bn_relu(conv(x, p["w2"], p["b2"]), p["g2"], p["beta2"])
    return x


if __name__ == "__main__":
    N, Cin, Cout, H, W = 2, 4, 8, 16, 16

    key = jax.random.PRNGKey(0)
    k_x, k_w1, k_b1, k_w2, k_b2 = jax.random.split(key, 5)

    x = jax.random.normal(k_x, (N, Cin, H, W), dtype=jnp.float32)

    # Weights stored HWIO (3, 3, Cin, Cout); BN params match PyTorch defaults
    # (gamma=1, beta=0).  Conv biases exist only in the reference path -- the
    # Pallas path drops them (output-equivalent under training-mode BN).
    params = {
        "w1": 0.1 * jax.random.normal(k_w1, (3, 3, Cin, Cout), jnp.float32),
        "b1": 0.1 * jax.random.normal(k_b1, (Cout,), jnp.float32),
        "g1": jnp.ones((Cout,), jnp.float32),
        "beta1": jnp.zeros((Cout,), jnp.float32),
        "w2": 0.1 * jax.random.normal(k_w2, (3, 3, Cout, Cout), jnp.float32),
        "b2": 0.1 * jax.random.normal(k_b2, (Cout,), jnp.float32),
        "g2": jnp.ones((Cout,), jnp.float32),
        "beta2": jnp.zeros((Cout,), jnp.float32),
    }

    ref = jax.block_until_ready(double_conv_ref(x, params))

    # f32 path: tight numerical validation (row_tile=8 -> grid (2, 2)).
    out = jax.block_until_ready(double_conv_pallas(x, params, row_tile=8))
    assert out.shape == (N, Cout, H, W)
    max_err = float(jnp.max(jnp.abs(out - ref)))
    assert jnp.allclose(out, ref, atol=3e-4, rtol=3e-4), \
        f"f32 path max abs err {max_err}"

    # bf16 MXU path (production setting for v6e/v7x: bf16 operands + bf16
    # intermediate, f32 accumulation / BN math).  Loose sanity check only.
    out_bf16 = jax.block_until_ready(double_conv_pallas(
        x, params, compute_dtype=jnp.bfloat16, interm_dtype=jnp.bfloat16,
        row_tile=8))
    assert out_bf16.shape == (N, Cout, H, W)
    assert jnp.allclose(out_bf16, ref, atol=0.2, rtol=0.1), \
        f"bf16 path max abs err {float(jnp.max(jnp.abs(out_bf16 - ref)))}"

    print("KERNEL_OK")
</pallas_src>

<mosaic_0001>
module attributes {stable_mosaic.version = 11 : i64} {
  func.func @kernel(%arg0: i32, %arg1: i32, %arg2: memref<1x16x16x4xf32, #tpu.memory_space<vmem>>, %arg3: memref<3x12x128xf32, #tpu.memory_space<vmem>>, %arg4: memref<1x128x128xf32, #tpu.memory_space<vmem>>, %arg5: memref<1x1x1x128xf32, #tpu.memory_space<vmem>>, %arg6: memref<1x1x1x128xf32, #tpu.memory_space<vmem>>, %arg7: memref<10x16x12xf32, #tpu.memory_space<vmem>>) attributes {dimension_semantics = [#tpu.dimension_semantics<parallel>, #tpu.dimension_semantics<parallel>], iteration_bounds = array<i64: 2, 2>, scalar_prefetch = 0 : i64, scratch_operands = 1 : i64, tpu.core_type = #tpu.core_type<tc>, window_params = [{transform_indices = @transform_0, window_bounds = array<i64: 1, 16, 16, 4>}, {pipeline_mode = #tpu.pipeline_mode<synchronous>, transform_indices = @transform_1, window_bounds = array<i64: 3, 12, 128>}, {transform_indices = @transform_2, window_bounds = array<i64: 1, 128, 128>}, {transform_indices = @transform_3, window_bounds = array<i64: 1, 1, 1, 128>}, {transform_indices = @transform_4, window_bounds = array<i64: 1, 1, 1, 128>}]} {
    %c8_i32 = arith.constant 8 : i32
    %0 = arith.muli %arg1, %c8_i32 : i32
    %1 = tpu.assume_multiple %0, 8 : i32
    %c0_i32 = arith.constant 0 : i32
    %2 = arith.cmpi sgt, %arg1, %c0_i32 : i32
    %3 = arith.extui %2 : i1 to i32
    %4 = arith.sitofp %3 : i32 to f32
    %c1_i32 = arith.constant 1 : i32
    %5 = arith.cmpi slt, %arg1, %c1_i32 : i32
    %6 = arith.extui %5 : i1 to i32
    %7 = arith.sitofp %6 : i32 to f32
    %c0 = arith.constant 0 : index
    %8 = arith.index_cast %1 : i32 to index
    %c0_0 = arith.constant 0 : index
    %c0_1 = arith.constant 0 : index
    %9 = vector.load %arg2[%c0, %8, %c0_0, %c0_1] : memref<1x16x16x4xf32, #tpu.memory_space<vmem>>, vector<1x8x15x4xf32>
    %10 = vector.shape_cast %9 : vector<1x8x15x4xf32> to vector<8x15x4xf32>
    %c1 = arith.constant 1 : index
    %c1_2 = arith.constant 1 : index
    %c0_3 = arith.constant 0 : index
    %11 = vector.load %arg7[%c1, %c1_2, %c0_3] : memref<10x16x12xf32, #tpu.memory_space<vmem>>, vector<8x15x4xf32>
    tpu.vector_store %arg7[%c1, %c1_2, %c0_3], %10 {strides = array<i32>} : memref<10x16x12xf32, #tpu.memory_space<vmem>>, vector<8x15x4xf32>,
    %c1_i32_4 = arith.constant 1 : i32
    %12 = arith.subi %1, %c1_i32_4 : i32
    %c0_i32_5 = arith.constant 0 : i32
    %13 = arith.maxsi %12, %c0_i32_5 : i32
    %c0_6 = arith.constant 0 : index
    %14 = arith.index_cast %13 : i32 to index
    %c0_7 = arith.constant 0 : index
    %c0_8 = arith.constant 0 : index
    %15 = vector.load %arg2[%c0_6, %14, %c0_7, %c0_8] : memref<1x16x16x4xf32, #tpu.memory_space<vmem>>, vector<1x1x15x4xf32>
    %16 = vector.shape_cast %15 : vector<1x1x15x4xf32> to vector<1x15x4xf32>
    %17 = vector.broadcast %4 : f32 to vector<1x15x4xf32>
    %18 = arith.mulf %16, %17 : vector<1x15x4xf32>
    %c0_9 = arith.constant 0 : index
    %c1_10 = arith.constant 1 : index
    %c0_11 = arith.constant 0 : index
    %19 = vector.load %arg7[%c0_9, %c1_10, %c0_11] : memref<10x16x12xf32, #tpu.memory_space<vmem>>, vector<1x15x4xf32>
    tpu.vector_store %arg7[%c0_9, %c1_10, %c0_11], %18 {strides = array<i32>} : memref<10x16x12xf32, #tpu.memory_space<vmem>>, vector<1x15x4xf32>,
    %c8_i32_12 = arith.constant 8 : i32
    %20 = arith.addi %1, %c8_i32_12 : i32
    %c15_i32 = arith.constant 15 : i32
    %21 = arith.minsi %20, %c15_i32 : i32
    %c0_13 = arith.constant 0 : index
    %22 = arith.index_cast %21 : i32 to index
    %c0_14 = arith.constant 0 : index
    %c0_15 = arith.constant 0 : index
    %23 = vector.load %arg2[%c0_13, %22, %c0_14, %c0_15] : memref<1x16x16x4xf32, #tpu.memory_space<vmem>>, vector<1x1x15x4xf32>
    %24 = vector.shape_cast %23 : vector<1x1x15x4xf32> to vector<1x15x4xf32>
    %25 = vector.broadcast %7 : f32 to vector<1x15x4xf32>
    %26 = arith.mulf %24, %25 : vector<1x15x4xf32>
    %c9 = arith.constant 9 : index
    %c1_16 = arith.constant 1 : index
    %c0_17 = arith.constant 0 : index
    %27 = vector.load %arg7[%c9, %c1_16, %c0_17] : memref<10x16x12xf32, #tpu.memory_space<vmem>>, vector<1x15x4xf32>
    tpu.vector_store %arg7[%c9, %c1_16, %c0_17], %26 {strides = array<i32>} : memref<10x16x12xf32, #tpu.memory_space<vmem>>, vector<1x15x4xf32>,
    %cst = arith.constant 0.000000e+00 : f32
    %28 = vector.broadcast %cst : f32 to vector<10x1x4xf32>
    %c0_18 = arith.constant 0 : index
    %c0_19 = arith.constant 0 : index
    %c0_20 = arith.constant 0 : index
    %29 = vector.load %arg7[%c0_18, %c0_19, %c0_20] : memref<10x16x12xf32, #tpu.memory_space<vmem>>, vector<10x1x4xf32>
    tpu.vector_store %arg7[%c0_18, %c0_19, %c0_20], %28 {strides = array<i32>} : memref<10x16x12xf32, #tpu.memory_space<vmem>>, vector<10x1x4xf32>,
    %c0_21 = arith.constant 0 : index
    %30 = arith.index_cast %1 : i32 to index
    %c0_22 = arith.constant 0 : index
    %c0_23 = arith.constant 0 : index
    %31 = vector.load %arg2[%c0_21, %30, %c0_22, %c0_23] : memref<1x16x16x4xf32, #tpu.memory_space<vmem>>, vector<1x8x16x4xf32>
    %32 = vector.shape_cast %31 : vector<1x8x16x4xf32> to vector<8x16x4xf32>
    %c1_24 = arith.constant 1 : index
    %c0_25 = arith.constant 0 : index
    %c4 = arith.constant 4 : index
    %33 = vector.load %arg7[%c1_24, %c0_25, %c4] : memref<10x16x12xf32, #tpu.memory_space<vmem>>, vector<8x16x4xf32>
    tpu.vector_store %arg7[%c1_24, %c0_25, %c4], %32 {strides = array<i32>} : memref<10x16x12xf32, #tpu.memory_space<vmem>>, vector<8x16x4xf32>,
    %c1_i32_26 = arith.constant 1 : i32
    %34 = arith.subi %1, %c1_i32_26 : i32
    %c0_i32_27 = arith.constant 0 : i32
    %35 = arith.maxsi %34, %c0_i32_27 : i32
    %c0_28 = arith.constant 0 : index
    %36 = arith.index_cast %35 : i32 to index
    %c0_29 = arith.constant 0 : index
    %c0_30 = arith.constant 0 : index
    %37 = vector.load %arg2[%c0_28, %36, %c0_29, %c0_30] : memref<1x16x16x4xf32, #tpu.memory_space<vmem>>, vector<1x1x16x4xf32>
    %38 = vector.shape_cast %37 : vector<1x1x16x4xf32> to vector<1x16x4xf32>
    %39 = vector.broadcast %4 : f32 to vector<1x16x4xf32>
    %40 = arith.mulf %38, %39 : vector<1x16x4xf32>
    %c0_31 = arith.constant 0 : index
    %c0_32 = arith.constant 0 : index
    %c4_33 = arith.constant 4 : index
    %41 = vector.load %arg7[%c0_31, %c0_32, %c4_33] : memref<10x16x12xf32, #tpu.memory_space<vmem>>, vector<1x16x4xf32>
    tpu.vector_store %arg7[%c0_31, %c0_32, %c4_33], %40 {strides = array<i32>} : memref<10x16x12xf32, #tpu.memory_space<vmem>>, vector<1x16x4xf32>,
    %c8_i32_34 = arith.constant 8 : i32
    %42 = arith.addi %1, %c8_i32_34 : i32
    %c15_i32_35 = arith.constant 15 : i32
    %43 = arith.minsi %42, %c15_i32_35 : i32
    %c0_36 = arith.constant 0 : index
    %44 = arith.index_cast %43 : i32 to index
    %c0_37 = arith.constant 0 : index
    %c0_38 = arith.constant 0 : index
    %45 = vector.load %arg2[%c0_36, %44, %c0_37, %c0_38] : memref<1x16x16x4xf32, #tpu.memory_space<vmem>>, vector<1x1x16x4xf32>
    %46 = vector.shape_cast %45 : vector<1x1x16x4xf32> to vector<1x16x4xf32>
    %47 = vector.broadcast %7 : f32 to vector<1x16x4xf32>
    %48 = arith.mulf %46, %47 : vector<1x16x4xf32>
    %c9_39 = arith.constant 9 : index
    %c0_40 = arith.constant 0 : index
    %c4_41 = arith.constant 4 : index
    %49 = vector.load %arg7[%c9_39, %c0_40, %c4_41] : memref<10x16x12xf32, #tpu.memory_space<vmem>>, vector<1x16x4xf32>
    tpu.vector_store %arg7[%c9_39, %c0_40, %c4_41], %48 {strides = array<i32>} : memref<10x16x12xf32, #tpu.memory_space<vmem>>, vector<1x16x4xf32>,
    %c0_42 = arith.constant 0 : index
    %50 = arith.index_cast %1 : i32 to index
    %c1_43 = arith.constant 1 : index
    %c0_44 = arith.constant 0 : index
    %51 = vector.load %arg2[%c0_42, %50, %c1_43, %c0_44] : memref<1x16x16x4xf32, #tpu.memory_space<vmem>>, vector<1x8x15x4xf32>
    %52 = vector.shape_cast %51 : vector<1x8x15x4xf32> to vector<8x15x4xf32>
    %c1_45 = arith.constant 1 : index
    %c0_46 = arith.constant 0 : index
    %c8 = arith.constant 8 : index
    %53 = vector.load %arg7[%c1_45, %c0_46, %c8] : memref<10x16x12xf32, #tpu.memory_space<vmem>>, vector<8x15x4xf32>
    tpu.vector_store %arg7[%c1_45, %c0_46, %c8], %52 {strides = array<i32>} : memref<10x16x12xf32, #tpu.memory_space<vmem>>, vector<8x15x4xf32>,
    %c1_i32_47 = arith.constant 1 : i32
    %54 = arith.subi %1, %c1_i32_47 : i32
    %c0_i32_48 = arith.constant 0 : i32
    %55 = arith.maxsi %54, %c0_i32_48 : i32
    %c0_49 = arith.constant 0 : index
    %56 = arith.index_cast %55 : i32 to index
    %c1_50 = arith.constant 1 : index
    %c0_51 = arith.constant 0 : index
    %57 = vector.load %arg2[%c0_49, %56, %c1_50, %c0_51] : memref<1x16x16x4xf32, #tpu.memory_space<vmem>>, vector<1x1x15x4xf32>
    %58 = vector.shape_cast %57 : vector<1x1x15x4xf32> to vector<1x15x4xf32>
    %59 = vector.broadcast %4 : f32 to vector<1x15x4xf32>
    %60 = arith.mulf %58, %59 : vector<1x15x4xf32>
    %c0_52 = arith.constant 0 : index
    %c0_53 = arith.constant 0 : index
    %c8_54 = arith.constant 8 : index
    %61 = vector.load %arg7[%c0_52, %c0_53, %c8_54] : memref<10x16x12xf32, #tpu.memory_space<vmem>>, vector<1x15x4xf32>
    tpu.vector_store %arg7[%c0_52, %c0_53, %c8_54], %60 {strides = array<i32>} : memref<10x16x12xf32, #tpu.memory_space<vmem>>, vector<1x15x4xf32>,
    %c8_i32_55 = arith.constant 8 : i32
    %62 = arith.addi %1, %c8_i32_55 : i32
    %c15_i32_56 = arith.constant 15 : i32
    %63 = arith.minsi %62, %c15_i32_56 : i32
    %c0_57 = arith.constant 0 : index
    %64 = arith.index_cast %63 : i32 to index
    %c1_58 = arith.constant 1 : index
    %c0_59 = arith.constant 0 : index
    %65 = vector.load %arg2[%c0_57, %64, %c1_58, %c0_59] : memref<1x16x16x4xf32, #tpu.memory_space<vmem>>, vector<1x1x15x4xf32>
    %66 = vector.shape_cast %65 : vector<1x1x15x4xf32> to vector<1x15x4xf32>
    %67 = vector.broadcast %7 : f32 to vector<1x15x4xf32>
    %68 = arith.mulf %66, %67 : vector<1x15x4xf32>
    %c9_60 = arith.constant 9 : index
    %c0_61 = arith.constant 0 : index
    %c8_62 = arith.constant 8 : index
    %69 = vector.load %arg7[%c9_60, %c0_61, %c8_62] : memref<10x16x12xf32, #tpu.memory_space<vmem>>, vector<1x15x4xf32>
    tpu.vector_store %arg7[%c9_60, %c0_61, %c8_62], %68 {strides = array<i32>} : memref<10x16x12xf32, #tpu.memory_space<vmem>>, vector<1x15x4xf32>,
    %cst_63 = arith.constant 0.000000e+00 : f32
    %70 = vector.broadcast %cst_63 : f32 to vector<10x1x4xf32>
    %c0_64 = arith.constant 0 : index
    %c15 = arith.constant 15 : index
    %c8_65 = arith.constant 8 : index
    %71 = vector.load %arg7[%c0_64, %c15, %c8_65] : memref<10x16x12xf32, #tpu.memory_space<vmem>>, vector<10x1x4xf32>
    tpu.vector_store %arg7[%c0_64, %c15, %c8_65], %70 {strides = array<i32>} : memref<10x16x12xf32, #tpu.memory_space<vmem>>, vector<10x1x4xf32>,
    %c0_66 = arith.constant 0 : index
    %c0_67 = arith.constant 0 : index
    %c0_68 = arith.constant 0 : index
    %72 = vector.load %arg7[%c0_66, %c0_67, %c0_68] : memref<10x16x12xf32, #tpu.memory_space<vmem>>, vector<8x16x12xf32>
    %73 = vector.shape_cast %72 : vector<8x16x12xf32> to vector<128x12xf32>
    %c0_69 = arith.constant 0 : index
    %c0_70 = arith.constant 0 : index
    %c0_71 = arith.constant 0 : index
    %74 = vector.load %arg3[%c0_69, %c0_70, %c0_71] : memref<3x12x128xf32, #tpu.memory_space<vmem>>, vector<1x12x128xf32>
    %75 = vector.shape_cast %74 : vector<1x12x128xf32> to vector<12x128xf32>
    %cst_72 = arith.constant dense<0.000000e+00> : vector<128x128xf32>
    %76 = tpu.matmul %73, %75, %cst_72 {dimension_numbers = #tpu.dot_dimension_numbers<[1], [0], [0], [1], [0, 0, 1, 1], [], []>} : vector<128x12xf32>, vector<12x128xf32>, vector<128x128xf32> -> vector<128x128xf32>
    %c1_73 = arith.constant 1 : index
    %c0_74 = arith.constant 0 : index
    %c0_75 = arith.constant 0 : index
    %77 = vector.load %arg7[%c1_73, %c0_74, %c0_75] : memref<10x16x12xf32, #tpu.memory_space<vmem>>, vector<8x16x12xf32>
    %78 = vector.shape_cast %77 : vector<8x16x12xf32> to vector<128x12xf32>
    %c1_76 = arith.constant 1 : index
    %c0_77 = arith.constant 0 : index
    %c0_78 = arith.constant 0 : index
    %79 = vector.load %arg3[%c1_76, %c0_77, %c0_78] : memref<3x12x128xf32, #tpu.memory_space<vmem>>, vector<1x12x128xf32>
    %80 = vector.shape_cast %79 : vector<1x12x128xf32> to vector<12x128xf32>
    %cst_79 = arith.constant dense<0.000000e+00> : vector<128x128xf32>
    %81 = tpu.matmul %78, %80, %cst_79 {dimension_numbers = #tpu.dot_dimension_numbers<[1], [0], [0], [1], [0, 0, 1, 1], [], []>} : vector<128x12xf32>, vector<12x128xf32>, vector<128x128xf32> -> vector<128x128xf32>
    %82 = arith.addf %76, %81 : vector<128x128xf32>
    %c2 = arith.constant 2 : index
    %c0_80 = arith.constant 0 : index
    %c0_81 = arith.constant 0 : index
    %83 = vector.load %arg7[%c2, %c0_80, %c0_81] : memref<10x16x12xf32, #tpu.memory_space<vmem>>, vector<8x16x12xf32>
    %84 = vector.shape_cast %83 : vector<8x16x12xf32> to vector<128x12xf32>
    %c2_82 = arith.constant 2 : index
    %c0_83 = arith.constant 0 : index
    %c0_84 = arith.constant 0 : index
    %85 = vector.load %arg3[%c2_82, %c0_83, %c0_84] : memref<3x12x128xf32, #tpu.memory_space<vmem>>, vector<1x12x128xf32>
    %86 = vector.shape_cast %85 : vector<1x12x128xf32> to vector<12x128xf32>
    %cst_85 = arith.constant dense<0.000000e+00> : vector<128x128xf32>
    %87 = tpu.matmul %84, %86, %cst_85 {dimension_numbers = #tpu.dot_dimension_numbers<[1], [0], [0], [1], [0, 0, 1, 1], [], []>} : vector<128x12xf32>, vector<12x128xf32>, vector<128x128xf32> -> vector<128x128xf32>
    %88 = arith.addf %82, %87 : vector<128x128xf32>
    %c0_86 = arith.constant 0 : index
    %c0_87 = arith.constant 0 : index
    %c0_88 = arith.constant 0 : index
    %89 = vector.load %arg4[%c0_86, %c0_87, %c0_88] : memref<1x128x128xf32, #tpu.memory_space<vmem>>, vector<1x128x128xf32>
    %90 = vector.shape_cast %89 : vector<1x128x128xf32> to vector<128x128xf32>
    %91 = vector.shape_cast %88 : vector<128x128xf32> to vector<1x128x128xf32>
    tpu.vector_store %arg4[%c0_86, %c0_87, %c0_88], %91 {strides = array<i32>} : memref<1x128x128xf32, #tpu.memory_space<vmem>>, vector<1x128x128xf32>,
    %cst_89 = arith.constant dense<0.000000e+00> : vector<128xf32>
    %92 = vector.multi_reduction <add>, %88, %cst_89 [0] : vector<128x128xf32> to vector<128xf32>
    %93 = vector.shape_cast %92 : vector<128xf32> to vector<1x128xf32>
    %c0_90 = arith.constant 0 : index
    %c0_91 = arith.constant 0 : index
    %c0_92 = arith.constant 0 : index
    %c0_93 = arith.constant 0 : index
    %94 = vector.load %arg5[%c0_90, %c0_91, %c0_92, %c0_93] : memref<1x1x1x128xf32, #tpu.memory_space<vmem>>, vector<1x1x1x128xf32>
    %95 = vector.shape_cast %94 : vector<1x1x1x128xf32> to vector<1x128xf32>
    %96 = vector.shape_cast %93 : vector<1x128xf32> to vector<1x1x1x128xf32>
    tpu.vector_store %arg5[%c0_90, %c0_91, %c0_92, %c0_93], %96 {strides = array<i32>} : memref<1x1x1x128xf32, #tpu.memory_space<vmem>>, vector<1x1x1x128xf32>,
    %97 = arith.mulf %88, %88 : vector<128x128xf32>
    %cst_94 = arith.constant dense<0.000000e+00> : vector<128xf32>
    %98 = vector.multi_reduction <add>, %97, %cst_94 [0] : vector<128x128xf32> to vector<128xf32>
    %99 = vector.shape_cast %98 : vector<128xf32> to vector<1x128xf32>
    %c0_95 = arith.constant 0 : index
    %c0_96 = arith.constant 0 : index
    %c0_97 = arith.constant 0 : index
    %c0_98 = arith.constant 0 : index
    %100 = vector.load %arg6[%c0_95, %c0_96, %c0_97, %c0_98] : memref<1x1x1x128xf32, #tpu.memory_space<vmem>>, vector<1x1x1x128xf32>
    %101 = vector.shape_cast %100 : vector<1x1x1x128xf32> to vector<1x128xf32>
    %102 = vector.shape_cast %99 : vector<1x128xf32> to vector<1x1x1x128xf32>
    tpu.vector_store %arg6[%c0_95, %c0_96, %c0_97, %c0_98], %102 {strides = array<i32>} : memref<1x1x1x128xf32, #tpu.memory_space<vmem>>, vector<1x1x1x128xf32>,
    return
  }
  func.func @transform_0(%arg0: i32, %arg1: i32) -> (i32, i32, i32, i32) {
    %c0_i32 = arith.constant 0 : i32
    %c0_i32_0 = arith.constant 0 : i32
    %c0_i32_1 = arith.constant 0 : i32
    %c0_i32_2 = arith.constant 0 : i32
    return %arg0, %c0_i32, %c0_i32_0, %c0_i32_1 : i32, i32, i32, i32
  }
  func.func @transform_1(%arg0: i32, %arg1: i32) -> (i32, i32, i32) {
    %c0_i32 = arith.constant 0 : i32
    %c0_i32_0 = arith.constant 0 : i32
    %c0_i32_1 = arith.constant 0 : i32
    %c0_i32_2 = arith.constant 0 : i32
    return %c0_i32, %c0_i32_0, %c0_i32_1 : i32, i32, i32
  }
  func.func @transform_2(%arg0: i32, %arg1: i32) -> (i32, i32, i32) {
    %c0_i32 = arith.constant 0 : i32
    %c0_i32_0 = arith.constant 0 : i32
    return %arg0, %arg1, %c0_i32 : i32, i32, i32
  }
  func.func @transform_3(%arg0: i32, %arg1: i32) -> (i32, i32, i32, i32) {
    %c0_i32 = arith.constant 0 : i32
    %c0_i32_0 = arith.constant 0 : i32
    %c0_i32_1 = arith.constant 0 : i32
    return %arg0, %arg1, %c0_i32, %c0_i32_0 : i32, i32, i32, i32
  }
  func.func @transform_4(%arg0: i32, %arg1: i32) -> (i32, i32, i32, i32) {
    %c0_i32 = arith.constant 0 : i32
    %c0_i32_0 = arith.constant 0 : i32
    %c0_i32_1 = arith.constant 0 : i32
    return %arg0, %arg1, %c0_i32, %c0_i32_0 : i32, i32, i32, i32
  }
}

module attributes {stable_mosaic.version = 11 : i64} {
  func.func @kernel(%arg0: i32, %arg1: i32, %arg2: memref<1x16x16x128xf32, #tpu.memory_space<vmem>>, %arg3: memref<1x128xf32, #tpu.memory_space<vmem>>, %arg4: memref<1x128xf32, #tpu.memory_space<vmem>>, %arg5: memref<3x384x128xf32, #tpu.memory_space<vmem>>, %arg6: memref<1x128x128xf32, #tpu.memory_space<vmem>>, %arg7: memref<1x1x1x128xf32, #tpu.memory_space<vmem>>, %arg8: memref<1x1x1x128xf32, #tpu.memory_space<vmem>>, %arg9: memref<10x16x384xf32, #tpu.memory_space<vmem>>) attributes {dimension_semantics = [#tpu.dimension_semantics<parallel>, #tpu.dimension_semantics<parallel>], iteration_bounds = array<i64: 2, 2>, scalar_prefetch = 0 : i64, scratch_operands = 1 : i64, tpu.core_type = #tpu.core_type<tc>, window_params = [{transform_indices = @transform_0, window_bounds = array<i64: 1, 16, 16, 128>}, {pipeline_mode = #tpu.pipeline_mode<synchronous>, transform_indices = @transform_1, window_bounds = array<i64: 1, 128>}, {pipeline_mode = #tpu.pipeline_mode<synchronous>, transform_indices = @transform_2, window_bounds = array<i64: 1, 128>}, {pipeline_mode = #tpu.pipeline_mode<synchronous>, transform_indices = @transform_3, window_bounds = array<i64: 3, 384, 128>}, {transform_indices = @transform_4, window_bounds = array<i64: 1, 128, 128>}, {transform_indices = @transform_5, window_bounds = array<i64: 1, 1, 1, 128>}, {transform_indices = @transform_6, window_bounds = array<i64: 1, 1, 1, 128>}]} {
    %c8_i32 = arith.constant 8 : i32
    %0 = arith.muli %arg1, %c8_i32 : i32
    %1 = tpu.assume_multiple %0, 8 : i32
    %c0 = arith.constant 0 : index
    %c0_0 = arith.constant 0 : index
    %2 = vector.load %arg3[%c0, %c0_0] : memref<1x128xf32, #tpu.memory_space<vmem>>, vector<1x128xf32>
    %3 = vector.shape_cast %2 : vector<1x128xf32> to vector<1x1x128xf32>
    %c0_1 = arith.constant 0 : index
    %c0_2 = arith.constant 0 : index
    %4 = vector.load %arg4[%c0_1, %c0_2] : memref<1x128xf32, #tpu.memory_space<vmem>>, vector<1x128xf32>
    %5 = vector.shape_cast %4 : vector<1x128xf32> to vector<1x1x128xf32>
    %c0_i32 = arith.constant 0 : i32
    %6 = arith.cmpi sgt, %arg1, %c0_i32 : i32
    %7 = arith.extui %6 : i1 to i32
    %8 = arith.sitofp %7 : i32 to f32
    %c1_i32 = arith.constant 1 : i32
    %9 = arith.cmpi slt, %arg1, %c1_i32 : i32
    %10 = arith.extui %9 : i1 to i32
    %11 = arith.sitofp %10 : i32 to f32
    %c0_3 = arith.constant 0 : index
    %12 = arith.index_cast %1 : i32 to index
    %c0_4 = arith.constant 0 : index
    %c0_5 = arith.constant 0 : index
    %13 = vector.load %arg2[%c0_3, %12, %c0_4, %c0_5] : memref<1x16x16x128xf32, #tpu.memory_space<vmem>>, vector<1x8x15x128xf32>
    %14 = vector.shape_cast %13 : vector<1x8x15x128xf32> to vector<8x15x128xf32>
    %15 = vector.broadcast %3 : vector<1x1x128xf32> to vector<8x15x128xf32>
    %16 = arith.mulf %14, %15 : vector<8x15x128xf32>
    %17 = vector.broadcast %5 : vector<1x1x128xf32> to vector<8x15x128xf32>
    %18 = arith.addf %16, %17 : vector<8x15x128xf32>
    %cst = arith.constant 0.000000e+00 : f32
    %19 = vector.broadcast %cst : f32 to vector<8x15x128xf32>
    %20 = arith.maximumf %18, %19 : vector<8x15x128xf32>
    %c1 = arith.constant 1 : index
    %c1_6 = arith.constant 1 : index
    %c0_7 = arith.constant 0 : index
    %21 = vector.load %arg9[%c1, %c1_6, %c0_7] : memref<10x16x384xf32, #tpu.memory_space<vmem>>, vector<8x15x128xf32>
    tpu.vector_store %arg9[%c1, %c1_6, %c0_7], %20 {strides = array<i32>} : memref<10x16x384xf32, #tpu.memory_space<vmem>>, vector<8x15x128xf32>,
    %c1_i32_8 = arith.constant 1 : i32
    %22 = arith.subi %1, %c1_i32_8 : i32
    %c0_i32_9 = arith.constant 0 : i32
    %23 = arith.maxsi %22, %c0_i32_9 : i32
    %c0_10 = arith.constant 0 : index
    %24 = arith.index_cast %23 : i32 to index
    %c0_11 = arith.constant 0 : index
    %c0_12 = arith.constant 0 : index
    %25 = vector.load %arg2[%c0_10, %24, %c0_11, %c0_12] : memref<1x16x16x128xf32, #tpu.memory_space<vmem>>, vector<1x1x15x128xf32>
    %26 = vector.shape_cast %25 : vector<1x1x15x128xf32> to vector<1x15x128xf32>
    %27 = vector.broadcast %3 : vector<1x1x128xf32> to vector<1x15x128xf32>
    %28 = arith.mulf %26, %27 : vector<1x15x128xf32>
    %29 = vector.broadcast %5 : vector<1x1x128xf32> to vector<1x15x128xf32>
    %30 = arith.addf %28, %29 : vector<1x15x128xf32>
    %cst_13 = arith.constant 0.000000e+00 : f32
    %31 = vector.broadcast %cst_13 : f32 to vector<1x15x128xf32>
    %32 = arith.maximumf %30, %31 : vector<1x15x128xf32>
    %33 = vector.broadcast %8 : f32 to vector<1x15x128xf32>
    %34 = arith.mulf %32, %33 : vector<1x15x128xf32>
    %c0_14 = arith.constant 0 : index
    %c1_15 = arith.constant 1 : index
    %c0_16 = arith.constant 0 : index
    %35 = vector.load %arg9[%c0_14, %c1_15, %c0_16] : memref<10x16x384xf32, #tpu.memory_space<vmem>>, vector<1x15x128xf32>
    tpu.vector_store %arg9[%c0_14, %c1_15, %c0_16], %34 {strides = array<i32>} : memref<10x16x384xf32, #tpu.memory_space<vmem>>, vector<1x15x128xf32>,
    %c8_i32_17 = arith.constant 8 : i32
    %36 = arith.addi %1, %c8_i32_17 : i32
    %c15_i32 = arith.constant 15 : i32
    %37 = arith.minsi %36, %c15_i32 : i32
    %c0_18 = arith.constant 0 : index
    %38 = arith.index_cast %37 : i32 to index
    %c0_19 = arith.constant 0 : index
    %c0_20 = arith.constant 0 : index
    %39 = vector.load %arg2[%c0_18, %38, %c0_19, %c0_20] : memref<1x16x16x128xf32, #tpu.memory_space<vmem>>, vector<1x1x15x128xf32>
    %40 = vector.shape_cast %39 : vector<1x1x15x128xf32> to vector<1x15x128xf32>
    %41 = vector.broadcast %3 : vector<1x1x128xf32> to vector<1x15x128xf32>
    %42 = arith.mulf %40, %41 : vector<1x15x128xf32>
    %43 = vector.broadcast %5 : vector<1x1x128xf32> to vector<1x15x128xf32>
    %44 = arith.addf %42, %43 : vector<1x15x128xf32>
    %cst_21 = arith.constant 0.000000e+00 : f32
    %45 = vector.broadcast %cst_21 : f32 to vector<1x15x128xf32>
    %46 = arith.maximumf %44, %45 : vector<1x15x128xf32>
    %47 = vector.broadcast %11 : f32 to vector<1x15x128xf32>
    %48 = arith.mulf %46, %47 : vector<1x15x128xf32>
    %c9 = arith.constant 9 : index
    %c1_22 = arith.constant 1 : index
    %c0_23 = arith.constant 0 : index
    %49 = vector.load %arg9[%c9, %c1_22, %c0_23] : memref<10x16x384xf32, #tpu.memory_space<vmem>>, vector<1x15x128xf32>
    tpu.vector_store %arg9[%c9, %c1_22, %c0_23], %48 {strides = array<i32>} : memref<10x16x384xf32, #tpu.memory_space<vmem>>, vector<1x15x128xf32>,
    %cst_24 = arith.constant 0.000000e+00 : f32
    %50 = vector.broadcast %cst_24 : f32 to vector<10x1x128xf32>
    %c0_25 = arith.constant 0 : index
    %c0_26 = arith.constant 0 : index
    %c0_27 = arith.constant 0 : index
    %51 = vector.load %arg9[%c0_25, %c0_26, %c0_27] : memref<10x16x384xf32, #tpu.memory_space<vmem>>, vector<10x1x128xf32>
    tpu.vector_store %arg9[%c0_25, %c0_26, %c0_27], %50 {strides = array<i32>} : memref<10x16x384xf32, #tpu.memory_space<vmem>>, vector<10x1x128xf32>,
    %c0_28 = arith.constant 0 : index
    %52 = arith.index_cast %1 : i32 to index
    %c0_29 = arith.constant 0 : index
    %c0_30 = arith.constant 0 : index
    %53 = vector.load %arg2[%c0_28, %52, %c0_29, %c0_30] : memref<1x16x16x128xf32, #tpu.memory_space<vmem>>, vector<1x8x16x128xf32>
    %54 = vector.shape_cast %53 : vector<1x8x16x128xf32> to vector<8x16x128xf32>
    %55 = vector.broadcast %3 : vector<1x1x128xf32> to vector<8x16x128xf32>
    %56 = arith.mulf %54, %55 : vector<8x16x128xf32>
    %57 = vector.broadcast %5 : vector<1x1x128xf32> to vector<8x16x128xf32>
    %58 = arith.addf %56, %57 : vector<8x16x128xf32>
    %cst_31 = arith.constant 0.000000e+00 : f32
    %59 = vector.broadcast %cst_31 : f32 to vector<8x16x128xf32>
    %60 = arith.maximumf %58, %59 : vector<8x16x128xf32>
    %c1_32 = arith.constant 1 : index
    %c0_33 = arith.constant 0 : index
    %c128 = arith.constant 128 : index
    %61 = vector.load %arg9[%c1_32, %c0_33, %c128] : memref<10x16x384xf32, #tpu.memory_space<vmem>>, vector<8x16x128xf32>
    tpu.vector_store %arg9[%c1_32, %c0_33, %c128], %60 {strides = array<i32>} : memref<10x16x384xf32, #tpu.memory_space<vmem>>, vector<8x16x128xf32>,
    %c1_i32_34 = arith.constant 1 : i32
    %62 = arith.subi %1, %c1_i32_34 : i32
    %c0_i32_35 = arith.constant 0 : i32
    %63 = arith.maxsi %62, %c0_i32_35 : i32
    %c0_36 = arith.constant 0 : index
    %64 = arith.index_cast %63 : i32 to index
    %c0_37 = arith.constant 0 : index
    %c0_38 = arith.constant 0 : index
    %65 = vector.load %arg2[%c0_36, %64, %c0_37, %c0_38] : memref<1x16x16x128xf32, #tpu.memory_space<vmem>>, vector<1x1x16x128xf32>
    %66 = vector.shape_cast %65 : vector<1x1x16x128xf32> to vector<1x16x128xf32>
    %67 = vector.broadcast %3 : vector<1x1x128xf32> to vector<1x16x128xf32>
    %68 = arith.mulf %66, %67 : vector<1x16x128xf32>
    %69 = vector.broadcast %5 : vector<1x1x128xf32> to vector<1x16x128xf32>
    %70 = arith.addf %68, %69 : vector<1x16x128xf32>
    %cst_39 = arith.constant 0.000000e+00 : f32
    %71 = vector.broadcast %cst_39 : f32 to vector<1x16x128xf32>
    %72 = arith.maximumf %70, %71 : vector<1x16x128xf32>
    %73 = vector.broadcast %8 : f32 to vector<1x16x128xf32>
    %74 = arith.mulf %72, %73 : vector<1x16x128xf32>
    %c0_40 = arith.constant 0 : index
    %c0_41 = arith.constant 0 : index
    %c128_42 = arith.constant 128 : index
    %75 = vector.load %arg9[%c0_40, %c0_41, %c128_42] : memref<10x16x384xf32, #tpu.memory_space<vmem>>, vector<1x16x128xf32>
    tpu.vector_store %arg9[%c0_40, %c0_41, %c128_42], %74 {strides = array<i32>} : memref<10x16x384xf32, #tpu.memory_space<vmem>>, vector<1x16x128xf32>,
    %c8_i32_43 = arith.constant 8 : i32
    %76 = arith.addi %1, %c8_i32_43 : i32
    %c15_i32_44 = arith.constant 15 : i32
    %77 = arith.minsi %76, %c15_i32_44 : i32
    %c0_45 = arith.constant 0 : index
    %78 = arith.index_cast %77 : i32 to index
    %c0_46 = arith.constant 0 : index
    %c0_47 = arith.constant 0 : index
    %79 = vector.load %arg2[%c0_45, %78, %c0_46, %c0_47] : memref<1x16x16x128xf32, #tpu.memory_space<vmem>>, vector<1x1x16x128xf32>
    %80 = vector.shape_cast %79 : vector<1x1x16x128xf32> to vector<1x16x128xf32>
    %81 = vector.broadcast %3 : vector<1x1x128xf32> to vector<1x16x128xf32>
    %82 = arith.mulf %80, %81 : vector<1x16x128xf32>
    %83 = vector.broadcast %5 : vector<1x1x128xf32> to vector<1x16x128xf32>
    %84 = arith.addf %82, %83 : vector<1x16x128xf32>
    %cst_48 = arith.constant 0.000000e+00 : f32
    %85 = vector.broadcast %cst_48 : f32 to vector<1x16x128xf32>
    %86 = arith.maximumf %84, %85 : vector<1x16x128xf32>
    %87 = vector.broadcast %11 : f32 to vector<1x16x128xf32>
    %88 = arith.mulf %86, %87 : vector<1x16x128xf32>
    %c9_49 = arith.constant 9 : index
    %c0_50 = arith.constant 0 : index
    %c128_51 = arith.constant 128 : index
    %89 = vector.load %arg9[%c9_49, %c0_50, %c128_51] : memref<10x16x384xf32, #tpu.memory_space<vmem>>, vector<1x16x128xf32>
    tpu.vector_store %arg9[%c9_49, %c0_50, %c128_51], %88 {strides = array<i32>} : memref<10x16x384xf32, #tpu.memory_space<vmem>>, vector<1x16x128xf32>,
    %c0_52 = arith.constant 0 : index
    %90 = arith.index_cast %1 : i32 to index
    %c1_53 = arith.constant 1 : index
    %c0_54 = arith.constant 0 : index
    %91 = vector.load %arg2[%c0_52, %90, %c1_53, %c0_54] : memref<1x16x16x128xf32, #tpu.memory_space<vmem>>, vector<1x8x15x128xf32>
    %92 = vector.shape_cast %91 : vector<1x8x15x128xf32> to vector<8x15x128xf32>
    %93 = vector.broadcast %3 : vector<1x1x128xf32> to vector<8x15x128xf32>
    %94 = arith.mulf %92, %93 : vector<8x15x128xf32>
    %95 = vector.broadcast %5 : vector<1x1x128xf32> to vector<8x15x128xf32>
    %96 = arith.addf %94, %95 : vector<8x15x128xf32>
    %cst_55 = arith.constant 0.000000e+00 : f32
    %97 = vector.broadcast %cst_55 : f32 to vector<8x15x128xf32>
    %98 = arith.maximumf %96, %97 : vector<8x15x128xf32>
    %c1_56 = arith.constant 1 : index
    %c0_57 = arith.constant 0 : index
    %c256 = arith.constant 256 : index
    %99 = vector.load %arg9[%c1_56, %c0_57, %c256] : memref<10x16x384xf32, #tpu.memory_space<vmem>>, vector<8x15x128xf32>
    tpu.vector_store %arg9[%c1_56, %c0_57, %c256], %98 {strides = array<i32>} : memref<10x16x384xf32, #tpu.memory_space<vmem>>, vector<8x15x128xf32>,
    %c1_i32_58 = arith.constant 1 : i32
    %100 = arith.subi %1, %c1_i32_58 : i32
    %c0_i32_59 = arith.constant 0 : i32
    %101 = arith.maxsi %100, %c0_i32_59 : i32
    %c0_60 = arith.constant 0 : index
    %102 = arith.index_cast %101 : i32 to index
    %c1_61 = arith.constant 1 : index
    %c0_62 = arith.constant 0 : index
    %103 = vector.load %arg2[%c0_60, %102, %c1_61, %c0_62] : memref<1x16x16x128xf32, #tpu.memory_space<vmem>>, vector<1x1x15x128xf32>
    %104 = vector.shape_cast %103 : vector<1x1x15x128xf32> to vector<1x15x128xf32>
    %105 = vector.broadcast %3 : vector<1x1x128xf32> to vector<1x15x128xf32>
    %106 = arith.mulf %104, %105 : vector<1x15x128xf32>
    %107 = vector.broadcast %5 : vector<1x1x128xf32> to vector<1x15x128xf32>
    %108 = arith.addf %106, %107 : vector<1x15x128xf32>
    %cst_63 = arith.constant 0.000000e+00 : f32
    %109 = vector.broadcast %cst_63 : f32 to vector<1x15x128xf32>
    %110 = arith.maximumf %108, %109 : vector<1x15x128xf32>
    %111 = vector.broadcast %8 : f32 to vector<1x15x128xf32>
    %112 = arith.mulf %110, %111 : vector<1x15x128xf32>
    %c0_64 = arith.constant 0 : index
    %c0_65 = arith.constant 0 : index
    %c256_66 = arith.constant 256 : index
    %113 = vector.load %arg9[%c0_64, %c0_65, %c256_66] : memref<10x16x384xf32, #tpu.memory_space<vmem>>, vector<1x15x128xf32>
    tpu.vector_store %arg9[%c0_64, %c0_65, %c256_66], %112 {strides = array<i32>} : memref<10x16x384xf32, #tpu.memory_space<vmem>>, vector<1x15x128xf32>,
    %c8_i32_67 = arith.constant 8 : i32
    %114 = arith.addi %1, %c8_i32_67 : i32
    %c15_i32_68 = arith.constant 15 : i32
    %115 = arith.minsi %114, %c15_i32_68 : i32
    %c0_69 = arith.constant 0 : index
    %116 = arith.index_cast %115 : i32 to index
    %c1_70 = arith.constant 1 : index
    %c0_71 = arith.constant 0 : index
    %117 = vector.load %arg2[%c0_69, %116, %c1_70, %c0_71] : memref<1x16x16x128xf32, #tpu.memory_space<vmem>>, vector<1x1x15x128xf32>
    %118 = vector.shape_cast %117 : vector<1x1x15x128xf32> to vector<1x15x128xf32>
    %119 = vector.broadcast %3 : vector<1x1x128xf32> to vector<1x15x128xf32>
    %120 = arith.mulf %118, %119 : vector<1x15x128xf32>
    %121 = vector.broadcast %5 : vector<1x1x128xf32> to vector<1x15x128xf32>
    %122 = arith.addf %120, %121 : vector<1x15x128xf32>
    %cst_72 = arith.constant 0.000000e+00 : f32
    %123 = vector.broadcast %cst_72 : f32 to vector<1x15x128xf32>
    %124 = arith.maximumf %122, %123 : vector<1x15x128xf32>
    %125 = vector.broadcast %11 : f32 to vector<1x15x128xf32>
    %126 = arith.mulf %124, %125 : vector<1x15x128xf32>
    %c9_73 = arith.constant 9 : index
    %c0_74 = arith.constant 0 : index
    %c256_75 = arith.constant 256 : index
    %127 = vector.load %arg9[%c9_73, %c0_74, %c256_75] : memref<10x16x384xf32, #tpu.memory_space<vmem>>, vector<1x15x128xf32>
    tpu.vector_store %arg9[%c9_73, %c0_74, %c256_75], %126 {strides = array<i32>} : memref<10x16x384xf32, #tpu.memory_space<vmem>>, vector<1x15x128xf32>,
    %cst_76 = arith.constant 0.000000e+00 : f32
    %128 = vector.broadcast %cst_76 : f32 to vector<10x1x128xf32>
    %c0_77 = arith.constant 0 : index
    %c15 = arith.constant 15 : index
    %c256_78 = arith.constant 256 : index
    %129 = vector.load %arg9[%c0_77, %c15, %c256_78] : memref<10x16x384xf32, #tpu.memory_space<vmem>>, vector<10x1x128xf32>
    tpu.vector_store %arg9[%c0_77, %c15, %c256_78], %128 {strides = array<i32>} : memref<10x16x384xf32, #tpu.memory_space<vmem>>, vector<10x1x128xf32>,
    %c0_79 = arith.constant 0 : index
    %c0_80 = arith.constant 0 : index
    %c0_81 = arith.constant 0 : index
    %130 = vector.load %arg9[%c0_79, %c0_80, %c0_81] : memref<10x16x384xf32, #tpu.memory_space<vmem>>, vector<8x16x384xf32>
    %131 = vector.shape_cast %130 : vector<8x16x384xf32> to vector<128x384xf32>
    %c0_82 = arith.constant 0 : index
    %c0_83 = arith.constant 0 : index
    %c0_84 = arith.constant 0 : index
    %132 = vector.load %arg5[%c0_82, %c0_83, %c0_84] : memref<3x384x128xf32, #tpu.memory_space<vmem>>, vector<1x384x128xf32>
    %133 = vector.shape_cast %132 : vector<1x384x128xf32> to vector<384x128xf32>
    %cst_85 = arith.constant dense<0.000000e+00> : vector<128x128xf32>
    %134 = tpu.matmul %131, %133, %cst_85 {dimension_numbers = #tpu.dot_dimension_numbers<[1], [0], [0], [1], [0, 0, 1, 1], [], []>} : vector<128x384xf32>, vector<384x128xf32>, vector<128x128xf32> -> vector<128x128xf32>
    %c1_86 = arith.constant 1 : index
    %c0_87 = arith.constant 0 : index
    %c0_88 = arith.constant 0 : index
    %135 = vector.load %arg9[%c1_86, %c0_87, %c0_88] : memref<10x16x384xf32, #tpu.memory_space<vmem>>, vector<8x16x384xf32>
    %136 = vector.shape_cast %135 : vector<8x16x384xf32> to vector<128x384xf32>
    %c1_89 = arith.constant 1 : index
    %c0_90 = arith.constant 0 : index
    %c0_91 = arith.constant 0 : index
    %137 = vector.load %arg5[%c1_89, %c0_90, %c0_91] : memref<3x384x128xf32, #tpu.memory_space<vmem>>, vector<1x384x128xf32>
    %138 = vector.shape_cast %137 : vector<1x384x128xf32> to vector<384x128xf32>
    %cst_92 = arith.constant dense<0.000000e+00> : vector<128x128xf32>
    %139 = tpu.matmul %136, %138, %cst_92 {dimension_numbers = #tpu.dot_dimension_numbers<[1], [0], [0], [1], [0, 0, 1, 1], [], []>} : vector<128x384xf32>, vector<384x128xf32>, vector<128x128xf32> -> vector<128x128xf32>
    %140 = arith.addf %134, %139 : vector<128x128xf32>
    %c2 = arith.constant 2 : index
    %c0_93 = arith.constant 0 : index
    %c0_94 = arith.constant 0 : index
    %141 = vector.load %arg9[%c2, %c0_93, %c0_94] : memref<10x16x384xf32, #tpu.memory_space<vmem>>, vector<8x16x384xf32>
    %142 = vector.shape_cast %141 : vector<8x16x384xf32> to vector<128x384xf32>
    %c2_95 = arith.constant 2 : index
    %c0_96 = arith.constant 0 : index
    %c0_97 = arith.constant 0 : index
    %143 = vector.load %arg5[%c2_95, %c0_96, %c0_97] : memref<3x384x128xf32, #tpu.memory_space<vmem>>, vector<1x384x128xf32>
    %144 = vector.shape_cast %143 : vector<1x384x128xf32> to vector<384x128xf32>
    %cst_98 = arith.constant dense<0.000000e+00> : vector<128x128xf32>
    %145 = tpu.matmul %142, %144, %cst_98 {dimension_numbers = #tpu.dot_dimension_numbers<[1], [0], [0], [1], [0, 0, 1, 1], [], []>} : vector<128x384xf32>, vector<384x128xf32>, vector<128x128xf32> -> vector<128x128xf32>
    %146 = arith.addf %140, %145 : vector<128x128xf32>
    %c0_99 = arith.constant 0 : index
    %c0_100 = arith.constant 0 : index
    %c0_101 = arith.constant 0 : index
    %147 = vector.load %arg6[%c0_99, %c0_100, %c0_101] : memref<1x128x128xf32, #tpu.memory_space<vmem>>, vector<1x128x128xf32>
    %148 = vector.shape_cast %147 : vector<1x128x128xf32> to vector<128x128xf32>
    %149 = vector.shape_cast %146 : vector<128x128xf32> to vector<1x128x128xf32>
    tpu.vector_store %arg6[%c0_99, %c0_100, %c0_101], %149 {strides = array<i32>} : memref<1x128x128xf32, #tpu.memory_space<vmem>>, vector<1x128x128xf32>,
    %cst_102 = arith.constant dense<0.000000e+00> : vector<128xf32>
    %150 = vector.multi_reduction <add>, %146, %cst_102 [0] : vector<128x128xf32> to vector<128xf32>
    %151 = vector.shape_cast %150 : vector<128xf32> to vector<1x128xf32>
    %c0_103 = arith.constant 0 : index
    %c0_104 = arith.constant 0 : index
    %c0_105 = arith.constant 0 : index
    %c0_106 = arith.constant 0 : index
    %152 = vector.load %arg7[%c0_103, %c0_104, %c0_105, %c0_106] : memref<1x1x1x128xf32, #tpu.memory_space<vmem>>, vector<1x1x1x128xf32>
    %153 = vector.shape_cast %152 : vector<1x1x1x128xf32> to vector<1x128xf32>
    %154 = vector.shape_cast %151 : vector<1x128xf32> to vector<1x1x1x128xf32>
    tpu.vector_store %arg7[%c0_103, %c0_104, %c0_105, %c0_106], %154 {strides = array<i32>} : memref<1x1x1x128xf32, #tpu.memory_space<vmem>>, vector<1x1x1x128xf32>,
    %155 = arith.mulf %146, %146 : vector<128x128xf32>
    %cst_107 = arith.constant dense<0.000000e+00> : vector<128xf32>
    %156 = vector.multi_reduction <add>, %155, %cst_107 [0] : vector<128x128xf32> to vector<128xf32>
    %157 = vector.shape_cast %156 : vector<128xf32> to vector<1x128xf32>
    %c0_108 = arith.constant 0 : index
    %c0_109 = arith.constant 0 : index
    %c0_110 = arith.constant 0 : index
    %c0_111 = arith.constant 0 : index
    %158 = vector.load %arg8[%c0_108, %c0_109, %c0_110, %c0_111] : memref<1x1x1x128xf32, #tpu.memory_space<vmem>>, vector<1x1x1x128xf32>
    %159 = vector.shape_cast %158 : vector<1x1x1x128xf32> to vector<1x128xf32>
    %160 = vector.shape_cast %157 : vector<1x128xf32> to vector<1x1x1x128xf32>
    tpu.vector_store %arg8[%c0_108, %c0_109, %c0_110, %c0_111], %160 {strides = array<i32>} : memref<1x1x1x128xf32, #tpu.memory_space<vmem>>, vector<1x1x1x128xf32>,
    return
  }
  func.func @transform_0(%arg0: i32, %arg1: i32) -> (i32, i32, i32, i32) {
    %c0_i32 = arith.constant 0 : i32
    %c0_i32_0 = arith.constant 0 : i32
    %c0_i32_1 = arith.constant 0 : i32
    %c0_i32_2 = arith.constant 0 : i32
    return %arg0, %c0_i32, %c0_i32_0, %c0_i32_1 : i32, i32, i32, i32
  }
  func.func @transform_1(%arg0: i32, %arg1: i32) -> (i32, i32) {
    %c0_i32 = arith.constant 0 : i32
    %c0_i32_0 = arith.constant 0 : i32
    %c0_i32_1 = arith.constant 0 : i32
    return %c0_i32, %c0_i32_0 : i32, i32
  }
  func.func @transform_2(%arg0: i32, %arg1: i32) -> (i32, i32) {
    %c0_i32 = arith.constant 0 : i32
    %c0_i32_0 = arith.constant 0 : i32
    %c0_i32_1 = arith.constant 0 : i32
    return %c0_i32, %c0_i32_0 : i32, i32
  }
  func.func @transform_3(%arg0: i32, %arg1: i32) -> (i32, i32, i32) {
    %c0_i32 = arith.constant 0 : i32
    %c0_i32_0 = arith.constant 0 : i32
    %c0_i32_1 = arith.constant 0 : i32
    %c0_i32_2 = arith.constant 0 : i32
    return %c0_i32, %c0_i32_0, %c0_i32_1 : i32, i32, i32
  }
  func.func @transform_4(%arg0: i32, %arg1: i32) -> (i32, i32, i32) {
    %c0_i32 = arith.constant 0 : i32
    %c0_i32_0 = arith.constant 0 : i32
    return %arg0, %arg1, %c0_i32 : i32, i32, i32
  }
  func.func @transform_5(%arg0: i32, %arg1: i32) -> (i32, i32, i32, i32) {
    %c0_i32 = arith.constant 0 : i32
    %c0_i32_0 = arith.constant 0 : i32
    %c0_i32_1 = arith.constant 0 : i32
    return %arg0, %arg1, %c0_i32, %c0_i32_0 : i32, i32, i32, i32
  }
  func.func @transform_6(%arg0: i32, %arg1: i32) -> (i32, i32, i32, i32) {
    %c0_i32 = arith.constant 0 : i32
    %c0_i32_0 = arith.constant 0 : i32
    %c0_i32_1 = arith.constant 0 : i32
    return %arg0, %arg1, %c0_i32, %c0_i32_0 : i32, i32, i32, i32
  }
}

</mosaic_0001>

<llo_original>
// kernel: double_conv_pallas.2
$region0: #{double_conv_pallas.2}
  #allocation0 [shape = 'u32[]', space=smem, size = 0x4, offset = 0x4, fixed_abs, tag = 'smem constant byte address 0x4 - core index']
  #allocation1 [shape = 'u32[72,128]{1,0:T(1,128)}', space=vmem, size = 0x9000, scoped, tag = 'internal scratch']
  #allocation2 [shape = 'f32[10,16,12]{2,1,0:T(8,128)}', space=vmem, size = 0x14000, scoped, tag = 'scratch operand']
  %s0 = inlined_call_operand.vmem [shape: f32[2,16,16,4], index: 0, kind: input, shape index: {}]
  %s1 = inlined_call_operand.vmem [shape: f32[3,12,128], index: 1, kind: input, shape index: {}]
  %s2 = inlined_call_operand.vmem [shape: f32[2,256,128], index: 2, kind: output, shape index: {0}]
  %s3 = inlined_call_operand.vmem [shape: f32[2,2,1,128], index: 3, kind: output, shape index: {1}]
  %s4 = inlined_call_operand.vmem [shape: f32[2,2,1,128], index: 4, kind: output, shape index: {2}]
  %5 = xla_tuple %s2, %s3, %s4
  %s6 = sld [smem:[#allocation0]]
  $region57: #{double_conv_pallas.2} parent=0
    _
  %s8 = ssub.s32 1, %s6
  %s9 = scalar_select 0, %s8, %s6
  loop: start=0, step=1, limit=6
  $region2: #{double_conv_pallas.2} parent=0 // loop_pre_header
    _
  $region3: #{double_conv_pallas.2} parent=0 // loop_header
    %s11 = sphi 0, %s15
    %p12 = scmp.ge.s32.totalorder %s11, 6
    %s18 = sphi 0, %s30
    %s19 = sphi 0, %s26
    %s20 = sphi 0, %s18
    %s21 = sphi 0, %s19
    %s22 = sphi 0, %s20
    %s23 = sphi 0, %s21
    %s33 = sphi 0, %s35
    %s36 = sphi 0, %s33
    %s37 = sphi 0, %s36
    %s53 = sphi 0, %s37
    %s57 = sphi 0, %s57
    %s59 = sphi 0, %s57
    %s60 = sphi 0, %s59
    %s74 = sphi 0, %s60
    %s82 = sphi 0, %s84
    %s85 = sphi 0, %s82
    %s86 = sphi 0, %s85
    %s102 = sphi 0, %s86
    %s110 = sphi 0, %s112
    %s113 = sphi 0, %s110
    %s114 = sphi 0, %s113
    %s130 = sphi 0, %s114
    %s138 = sphi 0, %s140
    %s141 = sphi 0, %s138
    %s142 = sphi 0, %s141
    %s158 = sphi 0, %s142
  $region4: #{double_conv_pallas.2} parent=0 // loop_header_branch
    %14 = sbr.rel (%p12) target = $region8
  $region5: #{double_conv_pallas.2} parent=0 // loop_body
    %s16 = ssub.s32 %s11, 1
    %s17 = ssub.s32 %s11, 2
    %s24 = sadd.s32 1, %s19
    %p25 = scmp.ge.s32.totalorder %s24, 2
    %s26 = scalar_select %p25, 0, %s24
    %s27 = sadd.s32 1, %s18
    %s28 = scalar_select %p25, %s27, %s18
    %p29 = scmp.ge.s32.totalorder %s28, 2
    %s30 = scalar_select %p29, 0, %s28
    %s31 = ssub.s32 %s18, %s30
    %p32 = scmp.eq.s32.totalorder %s31, 0
    %s34 = sadd.s32 %s33, 1
    %s35 = scalar_select %p32, %s33, %s34
    %p38 = pneg %p32
    %p39 = scmp.eq.s32.totalorder %s11, 3
    %p40 = por %p38, %p39
    %p41 = scmp.ne.s32.totalorder %s33, %s36
    %p42 = scmp.eq.s32.totalorder %s11, 0
    %p43 = por %p41, %p42
    %p44 = scmp.ne.s32.totalorder %s33, %s36
    %p45 = scmp.eq.s32.totalorder %s16, 3
    %p46 = por %p44, %p45
    %p47 = scmp.ne.s32.totalorder %s36, %s37
    %p48 = scmp.eq.s32.totalorder %s16, 0
    %p49 = por %p47, %p48
    %p50 = scmp.ne.s32.totalorder %s36, %s37
    %p51 = scmp.eq.s32.totalorder %s17, 3
    %p52 = por %p50, %p51
    %p54 = scmp.ne.s32.totalorder %s37, %s53
    %p55 = scmp.eq.s32.totalorder %s17, 0
    %p56 = por %p54, %p55
    %s58 = sadd.s32 %s57, 1
    %p61 = scmp.eq.s32.totalorder %s11, 3
    %p62 = scmp.ne.s32.totalorder %s57, %s59
    %p63 = scmp.eq.s32.totalorder %s11, 0
    %p64 = por %p62, %p63
    %p65 = scmp.ne.s32.totalorder %s57, %s59
    %p66 = scmp.eq.s32.totalorder %s16, 3
    %p67 = por %p65, %p66
    %p68 = scmp.ne.s32.totalorder %s59, %s60
    %p69 = scmp.eq.s32.totalorder %s16, 0
    %p70 = por %p68, %p69
    %p71 = scmp.ne.s32.totalorder %s59, %s60
    %p72 = scmp.eq.s32.totalorder %s17, 3
    %p73 = por %p71, %p72
    %p75 = scmp.ne.s32.totalorder %s60, %s74
    %p76 = scmp.eq.s32.totalorder %s17, 0
    %p77 = por %p75, %p76
    %s78 = ssub.s32 %s18, %s30
    %s79 = ssub.s32 %s19, %s26
    %s80 = sor.u32 %s78, %s79
    %p81 = scmp.eq.s32.totalorder %s80, 0
    %s83 = sadd.s32 %s82, 1
    %s84 = scalar_select %p81, %s82, %s83
    %p87 = pneg %p81
    %p88 = scmp.eq.s32.totalorder %s11, 3
    %p89 = por %p87, %p88
    %p90 = scmp.ne.s32.totalorder %s82, %s85
    %p91 = scmp.eq.s32.totalorder %s11, 0
    %p92 = por %p90, %p91
    %p93 = scmp.ne.s32.totalorder %s82, %s85
    %p94 = scmp.eq.s32.totalorder %s16, 3
    %p95 = por %p93, %p94
    %p96 = scmp.ne.s32.totalorder %s85, %s86
    %p97 = scmp.eq.s32.totalorder %s16, 0
    %p98 = por %p96, %p97
    %p99 = scmp.ne.s32.totalorder %s85, %s86
    %p100 = scmp.eq.s32.totalorder %s17, 3
    %p101 = por %p99, %p100
    %p103 = scmp.ne.s32.totalorder %s86, %s102
    %p104 = scmp.eq.s32.totalorder %s17, 0
    %p105 = por %p103, %p104
    %s106 = ssub.s32 %s18, %s30
    %s107 = ssub.s32 %s19, %s26
    %s108 = sor.u32 %s106, %s107
    %p109 = scmp.eq.s32.totalorder %s108, 0
    %s111 = sadd.s32 %s110, 1
    %s112 = scalar_select %p109, %s110, %s111
    %p115 = pneg %p109
    %p116 = scmp.eq.s32.totalorder %s11, 3
    %p117 = por %p115, %p116
    %p118 = scmp.ne.s32.totalorder %s110, %s113
    %p119 = scmp.eq.s32.totalorder %s11, 0
    %p120 = por %p118, %p119
    %p121 = scmp.ne.s32.totalorder %s110, %s113
    %p122 = scmp.eq.s32.totalorder %s16, 3
    %p123 = por %p121, %p122
    %p124 = scmp.ne.s32.totalorder %s113, %s114
    %p125 = scmp.eq.s32.totalorder %s16, 0
    %p126 = por %p124, %p125
    %p127 = scmp.ne.s32.totalorder %s113, %s114
    %p128 = scmp.eq.s32.totalorder %s17, 3
    %p129 = por %p127, %p128
    %p131 = scmp.ne.s32.totalorder %s114, %s130
    %p132 = scmp.eq.s32.totalorder %s17, 0
    %p133 = por %p131, %p132
    %s134 = ssub.s32 %s18, %s30
    %s135 = ssub.s32 %s19, %s26
    %s136 = sor.u32 %s134, %s135
    %p137 = scmp.eq.s32.totalorder %s136, 0
    %s139 = sadd.s32 %s138, 1
    %s140 = scalar_select %p137, %s138, %s139
    %p143 = pneg %p137
    %p144 = scmp.eq.s32.totalorder %s11, 3
    %p145 = por %p143, %p144
    %p146 = scmp.ne.s32.totalorder %s138, %s141
    %p147 = scmp.eq.s32.totalorder %s11, 0
    %p148 = por %p146, %p147
    %p149 = scmp.ne.s32.totalorder %s138, %s141
    %p150 = scmp.eq.s32.totalorder %s16, 3
    %p151 = por %p149, %p150
    %p152 = scmp.ne.s32.totalorder %s141, %s142
    %p153 = scmp.eq.s32.totalorder %s16, 0
    %p154 = por %p152, %p153
    %p155 = scmp.ne.s32.totalorder %s141, %s142
    %p156 = scmp.eq.s32.totalorder %s17, 3
    %p157 = por %p155, %p156
    %p159 = scmp.ne.s32.totalorder %s142, %s158
    %p160 = scmp.eq.s32.totalorder %s17, 0
    %p161 = por %p159, %p160
    %p162 = scmp.le.s32.totalorder 1, %s11
    %p163 = scmp.lt.s32.totalorder %s11, 5
    %p164 = pnand %p162, %p163
    %p165 = pneg %p164
    // Predicated region
    $region9: #{double_conv_pallas.2} parent=5 // pred_check
      _
    $region10: #{double_conv_pallas.2} parent=5 // pred_check_branch
      %167 = sbr.rel (%p164) target = $region12
    $region11: #{double_conv_pallas.2} parent=5 // pred_region
      %s168 = ssub.s32 %s11, 1
      // Predicated region
      $region13: #{double_conv_pallas.2} parent=11 // pred_check
        %p169 = pneg %p70
      $region14: #{double_conv_pallas.2} parent=11 // pred_check_branch
        %171 = sbr.rel (%p169) target = $region16
      $region15: #{double_conv_pallas.2} parent=11 // pred_region
        _
      $region16: #{double_conv_pallas.2} parent=11 // pred_fallthru
        _
    $region12: #{double_conv_pallas.2} parent=5 // pred_fallthru
      _
    %p172 = scmp.lt.s32.totalorder %s11, 4
    // Predicated region
    $region17: #{double_conv_pallas.2} parent=5 // pred_check
      %p173 = pneg %p172
    $region18: #{double_conv_pallas.2} parent=5 // pred_check_branch
      %175 = sbr.rel (%p173) target = $region20
    $region19: #{double_conv_pallas.2} parent=5 // pred_region
      // Predicated region
      $region21: #{double_conv_pallas.2} parent=19 // pred_check
        %p176 = pneg %p43
      $region22: #{double_conv_pallas.2} parent=19 // pred_check_branch
        %178 = sbr.rel (%p176) target = $region24
      $region23: #{double_conv_pallas.2} parent=19 // pred_region
        %p179 = scmp.lt.s32.totalorder %s18, 1
        %s180 = scalar_select %p179, %s18, 1
        %s181 = smul.addr %s180, 32
        %s182 = smul.addr %s181, 8
        %s183 = scalar_lea.vmem %s0, %s182
      $region24: #{double_conv_pallas.2} parent=19 // pred_fallthru
        _
    $region20: #{double_conv_pallas.2} parent=5 // pred_fallthru
      _
    %p184 = scmp.le.s32.totalorder 1, %s11
    %p185 = scmp.lt.s32.totalorder %s11, 5
    %p186 = pnand %p184, %p185
    %p187 = pneg %p186
    // Predicated region
    $region25: #{double_conv_pallas.2} parent=5 // pred_check
      _
    $region26: #{double_conv_pallas.2} parent=5 // pred_check_branch
      %189 = sbr.rel (%p186) target = $region28
    $region27: #{double_conv_pallas.2} parent=5 // pred_region
      %s190 = ssub.s32 %s11, 1
      %p191 = scmp.lt.s32.totalorder %s20, 1
      %s192 = scalar_select %p191, %s20, 1
      %s193 = smul.addr %s192, 32
      %s194 = smul.addr %s193, 8
      %s195 = scalar_lea.vmem %s0, %s194
      %p196 = pneg %p49
      %p197 = pneg %p46
      %p198 = pneg %p70
      %p199 = pneg %p67
      %p200 = pneg %p98
      %p201 = pneg %p95
      %s202 = smul.u32 16, %s21
      %p203 = scmp.lt.s32.totalorder %s20, 1
      %s204 = scalar_select %p203, %s20, 1
      %p205 = scmp.lt.s32.totalorder %s202, 31
      %s206 = scalar_select %p205, %s202, 31
      %s207 = smul.addr %s204, 32
      %s208 = sadd.s32 %s206, %s207
      %s209 = smul.addr %s208, 8
      %s210 = scalar_lea.vmem %s2, %s209
      %p211 = pneg %p126
      %p212 = pneg %p123
      %p213 = scmp.lt.s32.totalorder %s20, 1
      %s214 = scalar_select %p213, %s20, 1
      %p215 = scmp.lt.s32.totalorder %s21, 1
      %s216 = scalar_select %p215, %s21, 1
      %s217 = smul.addr %s214, 2
      %s218 = sadd.s32 %s216, %s217
      %s219 = scalar_lea.vmem %s3, %s218
      %p220 = pneg %p154
      %p221 = pneg %p151
      %p222 = scmp.lt.s32.totalorder %s20, 1
      %s223 = scalar_select %p222, %s20, 1
      %p224 = scmp.lt.s32.totalorder %s21, 1
      %s225 = scalar_select %p224, %s21, 1
      %s226 = smul.addr %s223, 2
      %s227 = sadd.s32 %s225, %s226
      %s228 = scalar_lea.vmem %s4, %s227
      %p229 = scmp.lt.s32.totalorder %s20, 1
      %s230 = scalar_select %p229, %s20, 1
      %s231 = smul.addr %s230, 32
      %s232 = smul.addr %s231, 8
      %s233 = scalar_lea.vmem %s0, %s232
      %s234 = smul.u32 16, %s21
      %p235 = scmp.lt.s32.totalorder %s20, 1
      %s236 = scalar_select %p235, %s20, 1
      %p237 = scmp.lt.s32.totalorder %s234, 31
      %s238 = scalar_select %p237, %s234, 31
      %s239 = smul.addr %s236, 32
      %s240 = sadd.s32 %s238, %s239
      %s241 = smul.addr %s240, 8
      %s242 = scalar_lea.vmem %s2, %s241
      %s243 = smul.u32 16, %s21
      %p244 = scmp.lt.s32.totalorder %s20, 1
      %s245 = scalar_select %p244, %s20, 1
      %p246 = scmp.lt.s32.totalorder %s21, 1
      %s247 = scalar_select %p246, %s21, 1
      %s248 = smul.addr %s245, 2
      %s249 = sadd.s32 %s247, %s248
      %s250 = scalar_lea.vmem %s3, %s249
      %p251 = scmp.lt.s32.totalorder %s20, 1
      %s252 = scalar_select %p251, %s20, 1
      %p253 = scmp.lt.s32.totalorder %s21, 1
      %s254 = scalar_select %p253, %s21, 1
      %s255 = smul.addr %s252, 2
      %s256 = sadd.s32 %s254, %s255
      %s257 = scalar_lea.vmem %s4, %s256
      %s258 = smul.u32 %s21, 8
      %p259 = scmp.gt.s32.totalorder %s21, 0
      %s260 = scalar_select %p259, 1, 0
      %s261 = scvt.s32.f32 %s260
      %p262 = scmp.lt.s32.totalorder %s21, 1
      %s263 = scalar_select %p262, 1, 0
      %s264 = scvt.s32.f32 %s263
      %s265 = smul.u32 %s258, 16
      %s266 = scalar_lea.vmem %s233, %s265
      %v267 = vld [vmem:[%s266] sm:$0xff]
      %v268 = vld [vmem:[%s266 + $0x8] sm:$0x7f]
      %v269 = vld [vmem:[%s266 + $0x10] sm:$0xff]
      %v270 = vld [vmem:[%s266 + $0x18] sm:$0x7f]
      %v271 = vld [vmem:[%s266 + $0x20] sm:$0xff]
      %v272 = vld [vmem:[%s266 + $0x28] sm:$0x7f]
      %v273 = vld [vmem:[%s266 + $0x30] sm:$0xff]
      %v274 = vld [vmem:[%s266 + $0x38] sm:$0x7f]
      %v275 = vld [vmem:[%s266 + $0x40] sm:$0xff]
      %v276 = vld [vmem:[%s266 + $0x48] sm:$0x7f]
      %v277 = vld [vmem:[%s266 + $0x50] sm:$0xff]
      %v278 = vld [vmem:[%s266 + $0x58] sm:$0x7f]
      %v279 = vld [vmem:[%s266 + $0x60] sm:$0xff]
      %v280 = vld [vmem:[%s266 + $0x68] sm:$0x7f]
      %v281 = vld [vmem:[%s266 + $0x70] sm:$0xff]
      %v282 = vld [vmem:[%s266 + $0x78] sm:$0x7f]
      %s283 = scalar_lea.vmem [#allocation2], 16
      %vm284 = vcmask 31744
      %285 = vst.msk [vmem:[%s283 + $0x1] sm:$0xff] %vm284, %v267
      %vm286 = vcmask 30720
      %287 = vst.msk [vmem:[%s283 + $0x9] sm:$0x7f] %vm286, %v268
      %288 = vst.msk [vmem:[%s283 + $0x11] sm:$0xff] %vm284, %v269
      %289 = vst.msk [vmem:[%s283 + $0x19] sm:$0x7f] %vm286, %v270
      %290 = vst.msk [vmem:[%s283 + $0x21] sm:$0xff] %vm284, %v271
      %291 = vst.msk [vmem:[%s283 + $0x29] sm:$0x7f] %vm286, %v272
      %292 = vst.msk [vmem:[%s283 + $0x31] sm:$0xff] %vm284, %v273
      %293 = vst.msk [vmem:[%s283 + $0x39] sm:$0x7f] %vm286, %v274
      %294 = vst.msk [vmem:[%s283 + $0x41] sm:$0xff] %vm284, %v275
      %295 = vst.msk [vmem:[%s283 + $0x49] sm:$0x7f] %vm286, %v276
      %296 = vst.msk [vmem:[%s283 + $0x51] sm:$0xff] %vm284, %v277
      %297 = vst.msk [vmem:[%s283 + $0x59] sm:$0x7f] %vm286, %v278
      %298 = vst.msk [vmem:[%s283 + $0x61] sm:$0xff] %vm284, %v279
      %299 = vst.msk [vmem:[%s283 + $0x69] sm:$0x7f] %vm286, %v280
      %300 = vst.msk [vmem:[%s283 + $0x71] sm:$0xff] %vm284, %v281
      %301 = vst.msk [vmem:[%s283 + $0x79] sm:$0x7f] %vm286, %v282
      %s302 = ssub.s32 %s258, 1
      %p303 = scmp.gt.s32.totalorder %s302, 0
      %s304 = scalar_select %p303, %s302, 0
      %s305 = smul.u32 %s304, 16
      %s306 = scalar_lea.vmem %s233, %s305
      %v307 = vld [vmem:[%s306] sm:$0xff]
      %v308 = vld [vmem:[%s306 + $0x8] sm:$0x7f]
      %v309 = vstv %s261
      %v310 = vmul.f32 %v307, %v309
      %v311 = vmul.f32 %v308, %v309
      %312 = vst.msk [vmem:[#allocation2 + $0x1] sm:$0xff] %vm284, %v310
      %313 = vst.msk [vmem:[#allocation2 + $0x9] sm:$0x7f] %vm286, %v311
      %s314 = sadd.s32 %s258, 8
      %p315 = scmp.lt.s32.totalorder %s314, 15
      %s316 = scalar_select %p315, %s314, 15
      %s317 = smul.u32 %s316, 16
      %s318 = scalar_lea.vmem %s233, %s317
      %v319 = vld [vmem:[%s318] sm:$0xff]
      %v320 = vld [vmem:[%s318 + $0x8] sm:$0x7f]
      %v321 = vstv %s264
      %v322 = vmul.f32 %v319, %v321
      %v323 = vmul.f32 %v320, %v321
      %s324 = scalar_lea.vmem [#allocation2], 144
      %325 = vst.msk [vmem:[%s324 + $0x1] sm:$0xff] %vm284, %v322
      %326 = vst.msk [vmem:[%s324 + $0x9] sm:$0x7f] %vm286, %v323
      %vm327 = vcmask 24576
      %328 = vst.msk [vmem:[#allocation2] sm:$0x1] %vm327, 0.0
      %329 = vst.msk [vmem:[#allocation2 + $0x10] sm:$0x1] %vm327, 0.0
      %330 = vst.msk [vmem:[#allocation2 + $0x20] sm:$0x1] %vm327, 0.0
      %331 = vst.msk [vmem:[#allocation2 + $0x30] sm:$0x1] %vm327, 0.0
      %332 = vst.msk [vmem:[#allocation2 + $0x40] sm:$0x1] %vm327, 0.0
      %333 = vst.msk [vmem:[#allocation2 + $0x50] sm:$0x1] %vm327, 0.0
      %334 = vst.msk [vmem:[#allocation2 + $0x60] sm:$0x1] %vm327, 0.0
      %335 = vst.msk [vmem:[#allocation2 + $0x70] sm:$0x1] %vm327, 0.0
      %336 = vst.msk [vmem:[#allocation2 + $0x80] sm:$0x1] %vm327, 0.0
      %337 = vst.msk [vmem:[#allocation2 + $0x90] sm:$0x1] %vm327, 0.0
      %v338 = vld [vmem:[%s266] sm:$0xff]
      %v339 = vld [vmem:[%s266 + $0x8] sm:$0xff]
      %v340 = vld [vmem:[%s266 + $0x10] sm:$0xff]
      %v341 = vld [vmem:[%s266 + $0x18] sm:$0xff]
      %v342 = vld [vmem:[%s266 + $0x20] sm:$0xff]
      %v343 = vld [vmem:[%s266 + $0x28] sm:$0xff]
      %v344 = vld [vmem:[%s266 + $0x30] sm:$0xff]
      %v345 = vld [vmem:[%s266 + $0x38] sm:$0xff]
      %v346 = vld [vmem:[%s266 + $0x40] sm:$0xff]
      %v347 = vld [vmem:[%s266 + $0x48] sm:$0xff]
      %v348 = vld [vmem:[%s266 + $0x50] sm:$0xff]
      %v349 = vld [vmem:[%s266 + $0x58] sm:$0xff]
      %v350 = vld [vmem:[%s266 + $0x60] sm:$0xff]
      %v351 = vld [vmem:[%s266 + $0x68] sm:$0xff]
      %v352 = vld [vmem:[%s266 + $0x70] sm:$0xff]
      %v353 = vld [vmem:[%s266 + $0x78] sm:$0xff]
      %370 = vrot.lane.b32.xlu0 %v338, 4
      %v371 = vpop.permute.xlu0 %370
      %372 = vrot.lane.b32.xlu0 %v339, 4
      %v373 = vpop.permute.xlu0 %372
      %374 = vrot.lane.b32.xlu0 %v340, 4
      %v375 = vpop.permute.xlu0 %374
      %376 = vrot.lane.b32.xlu0 %v341, 4
      %v377 = vpop.permute.xlu0 %376
      %378 = vrot.lane.b32.xlu0 %v342, 4
      %v379 = vpop.permute.xlu0 %378
      %380 = vrot.lane.b32.xlu0 %v343, 4
      %v381 = vpop.permute.xlu0 %380
      %382 = vrot.lane.b32.xlu0 %v344, 4
      %v383 = vpop.permute.xlu0 %382
      %384 = vrot.lane.b32.xlu0 %v345, 4
      %v385 = vpop.permute.xlu0 %384
      %386 = vrot.lane.b32.xlu0 %v346, 4
      %v387 = vpop.permute.xlu0 %386
      %388 = vrot.lane.b32.xlu0 %v347, 4
      %v389 = vpop.permute.xlu0 %388
      %390 = vrot.lane.b32.xlu0 %v348, 4
      %v391 = vpop.permute.xlu0 %390
      %392 = vrot.lane.b32.xlu0 %v349, 4
      %v393 = vpop.permute.xlu0 %392
      %394 = vrot.lane.b32.xlu0 %v350, 4
      %v395 = vpop.permute.xlu0 %394
      %396 = vrot.lane.b32.xlu0 %v351, 4
      %v397 = vpop.permute.xlu0 %396
      %398 = vrot.lane.b32.xlu0 %v352, 4
      %v399 = vpop.permute.xlu0 %398
      %400 = vrot.lane.b32.xlu0 %v353, 4
      %v401 = vpop.permute.xlu0 %400
      %vm418 = vcmask 64544
      %419 = vst.msk [vmem:[%s283] sm:$0xff] %vm418, %v371
      %420 = vst.msk [vmem:[%s283 + $0x8] sm:$0xff] %vm418, %v373
      %421 = vst.msk [vmem:[%s283 + $0x10] sm:$0xff] %vm418, %v375
      %422 = vst.msk [vmem:[%s283 + $0x18] sm:$0xff] %vm418, %v377
      %423 = vst.msk [vmem:[%s283 + $0x20] sm:$0xff] %vm418, %v379
      %424 = vst.msk [vmem:[%s283 + $0x28] sm:$0xff] %vm418, %v381
      %425 = vst.msk [vmem:[%s283 + $0x30] sm:$0xff] %vm418, %v383
      %426 = vst.msk [vmem:[%s283 + $0x38] sm:$0xff] %vm418, %v385
      %427 = vst.msk [vmem:[%s283 + $0x40] sm:$0xff] %vm418, %v387
      %428 = vst.msk [vmem:[%s283 + $0x48] sm:$0xff] %vm418, %v389
      %429 = vst.msk [vmem:[%s283 + $0x50] sm:$0xff] %vm418, %v391
      %430 = vst.msk [vmem:[%s283 + $0x58] sm:$0xff] %vm418, %v393
      %431 = vst.msk [vmem:[%s283 + $0x60] sm:$0xff] %vm418, %v395
      %432 = vst.msk [vmem:[%s283 + $0x68] sm:$0xff] %vm418, %v397
      %433 = vst.msk [vmem:[%s283 + $0x70] sm:$0xff] %vm418, %v399
      %434 = vst.msk [vmem:[%s283 + $0x78] sm:$0xff] %vm418, %v401
      %v435 = vld [vmem:[%s306] sm:$0xff]
      %v436 = vld [vmem:[%s306 + $0x8] sm:$0xff]
      %v437 = vmul.f32 %v435, %v309
      %v438 = vmul.f32 %v436, %v309
      %441 = vrot.lane.b32.xlu0 %v437, 4
      %v442 = vpop.permute.xlu0 %441
      %443 = vrot.lane.b32.xlu0 %v438, 4
      %v444 = vpop.permute.xlu0 %443
      %447 = vst.msk [vmem:[#allocation2] sm:$0xff] %vm418, %v442
      %448 = vst.msk [vmem:[#allocation2 + $0x8] sm:$0xff] %vm418, %v444
      %v449 = vld [vmem:[%s318] sm:$0xff]
      %v450 = vld [vmem:[%s318 + $0x8] sm:$0xff]
      %v451 = vmul.f32 %v449, %v321
      %v452 = vmul.f32 %v450, %v321
      %455 = vrot.lane.b32.xlu0 %v451, 4
      %v456 = vpop.permute.xlu0 %455
      %457 = vrot.lane.b32.xlu0 %v452, 4
      %v458 = vpop.permute.xlu0 %457
      %461 = vst.msk [vmem:[%s324] sm:$0xff] %vm418, %v456
      %462 = vst.msk [vmem:[%s324 + $0x8] sm:$0xff] %vm418, %v458
      %v463 = vld [vmem:[%s266 + $0x1] sm:$0xff]
      %v464 = vld [vmem:[%s266 + $0x9] sm:$0x7f]
      %v465 = vld [vmem:[%s266 + $0x11] sm:$0xff]
      %v466 = vld [vmem:[%s266 + $0x19] sm:$0x7f]
      %v467 = vld [vmem:[%s266 + $0x21] sm:$0xff]
      %v468 = vld [vmem:[%s266 + $0x29] sm:$0x7f]
      %v469 = vld [vmem:[%s266 + $0x31] sm:$0xff]
      %v470 = vld [vmem:[%s266 + $0x39] sm:$0x7f]
      %v471 = vld [vmem:[%s266 + $0x41] sm:$0xff]
      %v472 = vld [vmem:[%s266 + $0x49] sm:$0x7f]
      %v473 = vld [vmem:[%s266 + $0x51] sm:$0xff]
      %v474 = vld [vmem:[%s266 + $0x59] sm:$0x7f]
      %v475 = vld [vmem:[%s266 + $0x61] sm:$0xff]
      %v476 = vld [vmem:[%s266 + $0x69] sm:$0x7f]
      %v477 = vld [vmem:[%s266 + $0x71] sm:$0xff]
      %v478 = vld [vmem:[%s266 + $0x79] sm:$0x7f]
      %495 = vrot.lane.b32.xlu0 %v463, 8
      %v496 = vpop.permute.xlu0 %495
      %497 = vrot.lane.b32.xlu0 %v464, 8
      %v498 = vpop.permute.xlu0 %497
      %499 = vrot.lane.b32.xlu0 %v465, 8
      %v500 = vpop.permute.xlu0 %499
      %501 = vrot.lane.b32.xlu0 %v466, 8
      %v502 = vpop.permute.xlu0 %501
      %503 = vrot.lane.b32.xlu0 %v467, 8
      %v504 = vpop.permute.xlu0 %503
      %505 = vrot.lane.b32.xlu0 %v468, 8
      %v506 = vpop.permute.xlu0 %505
      %507 = vrot.lane.b32.xlu0 %v469, 8
      %v508 = vpop.permute.xlu0 %507
      %509 = vrot.lane.b32.xlu0 %v470, 8
      %v510 = vpop.permute.xlu0 %509
      %511 = vrot.lane.b32.xlu0 %v471, 8
      %v512 = vpop.permute.xlu0 %511
      %513 = vrot.lane.b32.xlu0 %v472, 8
      %v514 = vpop.permute.xlu0 %513
      %515 = vrot.lane.b32.xlu0 %v473, 8
      %v516 = vpop.permute.xlu0 %515
      %517 = vrot.lane.b32.xlu0 %v474, 8
      %v518 = vpop.permute.xlu0 %517
      %519 = vrot.lane.b32.xlu0 %v475, 8
      %v520 = vpop.permute.xlu0 %519
      %521 = vrot.lane.b32.xlu0 %v476, 8
      %v522 = vpop.permute.xlu0 %521
      %523 = vrot.lane.b32.xlu0 %v477, 8
      %v524 = vpop.permute.xlu0 %523
      %525 = vrot.lane.b32.xlu0 %v478, 8
      %v526 = vpop.permute.xlu0 %525
      %vm543 = vcmask 97344
      %544 = vst.msk [vmem:[%s283] sm:$0xff] %vm543, %v496
      %vm545 = vcmask 96320
      %546 = vst.msk [vmem:[%s283 + $0x8] sm:$0x7f] %vm545, %v498
      %547 = vst.msk [vmem:[%s283 + $0x10] sm:$0xff] %vm543, %v500
      %548 = vst.msk [vmem:[%s283 + $0x18] sm:$0x7f] %vm545, %v502
      %549 = vst.msk [vmem:[%s283 + $0x20] sm:$0xff] %vm543, %v504
      %550 = vst.msk [vmem:[%s283 + $0x28] sm:$0x7f] %vm545, %v506
      %551 = vst.msk [vmem:[%s283 + $0x30] sm:$0xff] %vm543, %v508
      %552 = vst.msk [vmem:[%s283 + $0x38] sm:$0x7f] %vm545, %v510
      %553 = vst.msk [vmem:[%s283 + $0x40] sm:$0xff] %vm543, %v512
      %554 = vst.msk [vmem:[%s283 + $0x48] sm:$0x7f] %vm545, %v514
      %555 = vst.msk [vmem:[%s283 + $0x50] sm:$0xff] %vm543, %v516
      %556 = vst.msk [vmem:[%s283 + $0x58] sm:$0x7f] %vm545, %v518
      %557 = vst.msk [vmem:[%s283 + $0x60] sm:$0xff] %vm543, %v520
      %558 = vst.msk [vmem:[%s283 + $0x68] sm:$0x7f] %vm545, %v522
      %559 = vst.msk [vmem:[%s283 + $0x70] sm:$0xff] %vm543, %v524
      %560 = vst.msk [vmem:[%s283 + $0x78] sm:$0x7f] %vm545, %v526
      %v561 = vld [vmem:[%s306 + $0x1] sm:$0xff]
      %v562 = vld [vmem:[%s306 + $0x9] sm:$0x7f]
      %v563 = vmul.f32 %v561, %v309
      %v564 = vmul.f32 %v562, %v309
      %567 = vrot.lane.b32.xlu0 %v563, 8
      %v568 = vpop.permute.xlu0 %567
      %569 = vrot.lane.b32.xlu0 %v564, 8
      %v570 = vpop.permute.xlu0 %569
      %573 = vst.msk [vmem:[#allocation2] sm:$0xff] %vm543, %v568
      %574 = vst.msk [vmem:[#allocation2 + $0x8] sm:$0x7f] %vm545, %v570
      %v575 = vld [vmem:[%s318 + $0x1] sm:$0xff]
      %v576 = vld [vmem:[%s318 + $0x9] sm:$0x7f]
      %v577 = vmul.f32 %v575, %v321
      %v578 = vmul.f32 %v576, %v321
      %581 = vrot.lane.b32.xlu0 %v577, 8
      %v582 = vpop.permute.xlu0 %581
      %583 = vrot.lane.b32.xlu0 %v578, 8
      %v584 = vpop.permute.xlu0 %583
      %587 = vst.msk [vmem:[%s324] sm:$0xff] %vm543, %v582
      %588 = vst.msk [vmem:[%s324 + $0x8] sm:$0x7f] %vm545, %v584
      %vm589 = vcmask 90176
      %590 = vst.msk [vmem:[#allocation2 + $0xf] sm:$0x1] %vm589, 0.0
      %591 = vst.msk [vmem:[#allocation2 + $0x1f] sm:$0x1] %vm589, 0.0
      %592 = vst.msk [vmem:[#allocation2 + $0x2f] sm:$0x1] %vm589, 0.0
      %593 = vst.msk [vmem:[#allocation2 + $0x3f] sm:$0x1] %vm589, 0.0
      %594 = vst.msk [vmem:[#allocation2 + $0x4f] sm:$0x1] %vm589, 0.0
      %595 = vst.msk [vmem:[#allocation2 + $0x5f] sm:$0x1] %vm589, 0.0
      %596 = vst.msk [vmem:[#allocation2 + $0x6f] sm:$0x1] %vm589, 0.0
      %597 = vst.msk [vmem:[#allocation2 + $0x7f] sm:$0x1] %vm589, 0.0
      %598 = vst.msk [vmem:[#allocation2 + $0x8f] sm:$0x1] %vm589, 0.0
      %599 = vst.msk [vmem:[#allocation2 + $0x9f] sm:$0x1] %vm589, 0.0
      %v600 = vld [vmem:[#allocation2] sm:$0xff]
      %v601 = vld [vmem:[#allocation2 + $0x8] sm:$0xff]
      %v602 = vld [vmem:[#allocation2 + $0x10] sm:$0xff]
      %v603 = vld [vmem:[#allocation2 + $0x18] sm:$0xff]
      %v604 = vld [vmem:[#allocation2 + $0x20] sm:$0xff]
      %v605 = vld [vmem:[#allocation2 + $0x28] sm:$0xff]
      %v606 = vld [vmem:[#allocation2 + $0x30] sm:$0xff]
      %v607 = vld [vmem:[#allocation2 + $0x38] sm:$0xff]
      %v608 = vld [vmem:[#allocation2 + $0x40] sm:$0xff]
      %v609 = vld [vmem:[#allocation2 + $0x48] sm:$0xff]
      %v610 = vld [vmem:[#allocation2 + $0x50] sm:$0xff]
      %v611 = vld [vmem:[#allocation2 + $0x58] sm:$0xff]
      %v612 = vld [vmem:[#allocation2 + $0x60] sm:$0xff]
      %v613 = vld [vmem:[#allocation2 + $0x68] sm:$0xff]
      %v614 = vld [vmem:[#allocation2 + $0x70] sm:$0xff]
      %v615 = vld [vmem:[#allocation2 + $0x78] sm:$0xff]
      %v616 = vld [vmem:[%s1] sm:$0xff]
      %v617 = vld [vmem:[%s1 + $0x8] sm:$0xf]
      %v618 = vld [vmem:[%s283] sm:$0xff]
      %v619 = vld [vmem:[%s283 + $0x8] sm:$0xff]
      %v620 = vld [vmem:[%s283 + $0x10] sm:$0xff]
      %v621 = vld [vmem:[%s283 + $0x18] sm:$0xff]
      %v622 = vld [vmem:[%s283 + $0x20] sm:$0xff]
      %v623 = vld [vmem:[%s283 + $0x28] sm:$0xff]
      %v624 = vld [vmem:[%s283 + $0x30] sm:$0xff]
      %v625 = vld [vmem:[%s283 + $0x38] sm:$0xff]
      %v626 = vld [vmem:[%s283 + $0x40] sm:$0xff]
      %v627 = vld [vmem:[%s283 + $0x48] sm:$0xff]
      %v628 = vld [vmem:[%s283 + $0x50] sm:$0xff]
      %v629 = vld [vmem:[%s283 + $0x58] sm:$0xff]
      %v630 = vld [vmem:[%s283 + $0x60] sm:$0xff]
      %v631 = vld [vmem:[%s283 + $0x68] sm:$0xff]
      %v632 = vld [vmem:[%s283 + $0x70] sm:$0xff]
      %v633 = vld [vmem:[%s283 + $0x78] sm:$0xff]
      %s634 = scalar_lea.vmem %s1, 16
      %v635 = vld [vmem:[%s634] sm:$0xff]
      %v636 = vld [vmem:[%s634 + $0x8] sm:$0xf]
      %vm637 = vcmask 97280
      %v639 = vsel %vm637, %v618, 0
      %v642 = vsel %vm637, %v619, 0
      %v645 = vsel %vm637, %v620, 0
      %v648 = vsel %vm637, %v621, 0
      %v651 = vsel %vm637, %v622, 0
      %v654 = vsel %vm637, %v623, 0
      %v657 = vsel %vm637, %v624, 0
      %v660 = vsel %vm637, %v625, 0
      %v663 = vsel %vm637, %v626, 0
      %v666 = vsel %vm637, %v627, 0
      %v669 = vsel %vm637, %v628, 0
      %v672 = vsel %vm637, %v629, 0
      %v675 = vsel %vm637, %v630, 0
      %v678 = vsel %vm637, %v631, 0
      %v681 = vsel %vm637, %v632, 0
      %v684 = vsel %vm637, %v633, 0
      %vm686 = vcmask 1043456
      %v688 = vsel %vm686, %v636, 0
      %690 = vmatpush.msra.mxu0 0.0
      %691 = vmatpush.msra.mxu0 0.0
      %692 = vmatpush.msra.mxu0 0.0
      %693 = vmatpush.msra.mxu0 0.0
      %694 = vmatpush.msra.mxu0 0.0
      %695 = vmatpush.msra.mxu0 0.0
      %696 = vmatpush.msra.mxu0 0.0
      %697 = vmatpush.msra.mxu0 0.0
      %698 = vmatpush.msra.mxu0 0.0
      %699 = vmatpush.msra.mxu0 0.0
      %700 = vmatpush.msra.mxu0 0.0
      %701 = vmatpush.msra.mxu0 0.0
      %702 = vmatpush.msra.mxu0 0.0
      %703 = vmatpush.msra.mxu0 0.0
      %704 = vmatpush.msra.mxu0 %v688
      %705 = vmatpush.msra.mxu0 %v635
      %706 = vmatmul.f32.gmra.mxu0 %v639
      %v707 = vpop.f32.mrf.mxu0
      %v708 = vadd.f32 0.0, %v707
      %709 = vmatmul.f32.gmra.mxu0 %v642
      %v710 = vpop.f32.mrf.mxu0
      %v711 = vadd.f32 0.0, %v710
      %712 = vmatmul.f32.gmra.mxu0 %v645
      %v713 = vpop.f32.mrf.mxu0
      %v714 = vadd.f32 0.0, %v713
      %715 = vmatmul.f32.gmra.mxu0 %v648
      %v716 = vpop.f32.mrf.mxu0
      %v717 = vadd.f32 0.0, %v716
      %718 = vmatmul.f32.gmra.mxu0 %v651
      %v719 = vpop.f32.mrf.mxu0
      %v720 = vadd.f32 0.0, %v719
      %721 = vmatmul.f32.gmra.mxu0 %v654
      %v722 = vpop.f32.mrf.mxu0
      %v723 = vadd.f32 0.0, %v722
      %724 = vmatmul.f32.gmra.mxu0 %v657
      %v725 = vpop.f32.mrf.mxu0
      %v726 = vadd.f32 0.0, %v725
      %727 = vmatmul.f32.gmra.mxu0 %v660
      %v728 = vpop.f32.mrf.mxu0
      %v729 = vadd.f32 0.0, %v728
      %730 = vmatmul.f32.gmra.mxu0 %v663
      %v731 = vpop.f32.mrf.mxu0
      %v732 = vadd.f32 0.0, %v731
      %733 = vmatmul.f32.gmra.mxu0 %v666
      %v734 = vpop.f32.mrf.mxu0
      %v735 = vadd.f32 0.0, %v734
      %736 = vmatmul.f32.gmra.mxu0 %v669
      %v737 = vpop.f32.mrf.mxu0
      %v738 = vadd.f32 0.0, %v737
      %739 = vmatmul.f32.gmra.mxu0 %v672
      %v740 = vpop.f32.mrf.mxu0
      %v741 = vadd.f32 0.0, %v740
      %742 = vmatmul.f32.gmra.mxu0 %v675
      %v743 = vpop.f32.mrf.mxu0
      %v744 = vadd.f32 0.0, %v743
      %745 = vmatmul.f32.gmra.mxu0 %v678
      %v746 = vpop.f32.mrf.mxu0
      %v747 = vadd.f32 0.0, %v746
      %748 = vmatmul.f32.gmra.mxu0 %v681
      %v749 = vpop.f32.mrf.mxu0
      %v750 = vadd.f32 0.0, %v749
      %751 = vmatmul.f32.gmra.mxu0 %v684
      %v752 = vpop.f32.mrf.mxu0
      %v753 = vadd.f32 0.0, %v752
      %754 = vdwg.mxu0
      %v756 = vsel %vm637, %v600, 0
      %v759 = vsel %vm637, %v601, 0
      %v762 = vsel %vm637, %v602, 0
      %v765 = vsel %vm637, %v603, 0
      %v768 = vsel %vm637, %v604, 0
      %v771 = vsel %vm637, %v605, 0
      %v774 = vsel %vm637, %v606, 0
      %v777 = vsel %vm637, %v607, 0
      %v780 = vsel %vm637, %v608, 0
      %v783 = vsel %vm637, %v609, 0
      %v786 = vsel %vm637, %v610, 0
      %v789 = vsel %vm637, %v611, 0
      %v792 = vsel %vm637, %v612, 0
      %v795 = vsel %vm637, %v613, 0
      %v798 = vsel %vm637, %v614, 0
      %v801 = vsel %vm637, %v615, 0
      %v804 = vsel %vm686, %v617, 0
      %806 = vmatpush.msra.mxu0 0.0
      %807 = vmatpush.msra.mxu0 0.0
      %808 = vmatpush.msra.mxu0 0.0
      %809 = vmatpush.msra.mxu0 0.0
      %810 = vmatpush.msra.mxu0 0.0
      %811 = vmatpush.msra.mxu0 0.0
      %812 = vmatpush.msra.mxu0 0.0
      %813 = vmatpush.msra.mxu0 0.0
      %814 = vmatpush.msra.mxu0 0.0
      %815 = vmatpush.msra.mxu0 0.0
      %816 = vmatpush.msra.mxu0 0.0
      %817 = vmatpush.msra.mxu0 0.0
      %818 = vmatpush.msra.mxu0 0.0
      %819 = vmatpush.msra.mxu0 0.0
      %820 = vmatpush.msra.mxu0 %v804
      %821 = vmatpush.msra.mxu0 %v616
      %822 = vmatmul.f32.gmra.mxu0 %v756
      %v823 = vpop.f32.mrf.mxu0
      %v824 = vadd.f32 %v708, %v823
      %825 = vmatmul.f32.gmra.mxu0 %v759
      %v826 = vpop.f32.mrf.mxu0
      %v827 = vadd.f32 %v711, %v826
      %828 = vmatmul.f32.gmra.mxu0 %v762
      %v829 = vpop.f32.mrf.mxu0
      %v830 = vadd.f32 %v714, %v829
      %831 = vmatmul.f32.gmra.mxu0 %v765
      %v832 = vpop.f32.mrf.mxu0
      %v833 = vadd.f32 %v717, %v832
      %834 = vmatmul.f32.gmra.mxu0 %v768
      %v835 = vpop.f32.mrf.mxu0
      %v836 = vadd.f32 %v720, %v835
      %837 = vmatmul.f32.gmra.mxu0 %v771
      %v838 = vpop.f32.mrf.mxu0
      %v839 = vadd.f32 %v723, %v838
      %840 = vmatmul.f32.gmra.mxu0 %v774
      %v841 = vpop.f32.mrf.mxu0
      %v842 = vadd.f32 %v726, %v841
      %843 = vmatmul.f32.gmra.mxu0 %v777
      %v844 = vpop.f32.mrf.mxu0
      %v845 = vadd.f32 %v729, %v844
      %846 = vmatmul.f32.gmra.mxu0 %v780
      %v847 = vpop.f32.mrf.mxu0
      %v848 = vadd.f32 %v732, %v847
      %849 = vmatmul.f32.gmra.mxu0 %v783
      %v850 = vpop.f32.mrf.mxu0
      %v851 = vadd.f32 %v735, %v850
      %852 = vmatmul.f32.gmra.mxu0 %v786
      %v853 = vpop.f32.mrf.mxu0
      %v854 = vadd.f32 %v738, %v853
      %855 = vmatmul.f32.gmra.mxu0 %v789
      %v856 = vpop.f32.mrf.mxu0
      %v857 = vadd.f32 %v741, %v856
      %858 = vmatmul.f32.gmra.mxu0 %v792
      %v859 = vpop.f32.mrf.mxu0
      %v860 = vadd.f32 %v744, %v859
      %861 = vmatmul.f32.gmra.mxu0 %v795
      %v862 = vpop.f32.mrf.mxu0
      %v863 = vadd.f32 %v747, %v862
      %864 = vmatmul.f32.gmra.mxu0 %v798
      %v865 = vpop.f32.mrf.mxu0
      %v866 = vadd.f32 %v750, %v865
      %867 = vmatmul.f32.gmra.mxu0 %v801
      %v868 = vpop.f32.mrf.mxu0
      %v869 = vadd.f32 %v753, %v868
      %870 = vdwg.mxu0
      %s871 = scalar_lea.vmem [#allocation2], 32
      %v872 = vld [vmem:[%s871] sm:$0xff]
      %v873 = vld [vmem:[%s871 + $0x8] sm:$0xff]
      %v874 = vld [vmem:[%s871 + $0x10] sm:$0xff]
      %v875 = vld [vmem:[%s871 + $0x18] sm:$0xff]
      %v876 = vld [vmem:[%s871 + $0x20] sm:$0xff]
      %v877 = vld [vmem:[%s871 + $0x28] sm:$0xff]
      %v878 = vld [vmem:[%s871 + $0x30] sm:$0xff]
      %v879 = vld [vmem:[%s871 + $0x38] sm:$0xff]
      %v880 = vld [vmem:[%s871 + $0x40] sm:$0xff]
      %v881 = vld [vmem:[%s871 + $0x48] sm:$0xff]
      %v882 = vld [vmem:[%s871 + $0x50] sm:$0xff]
      %v883 = vld [vmem:[%s871 + $0x58] sm:$0xff]
      %v884 = vld [vmem:[%s871 + $0x60] sm:$0xff]
      %v885 = vld [vmem:[%s871 + $0x68] sm:$0xff]
      %v886 = vld [vmem:[%s871 + $0x70] sm:$0xff]
      %v887 = vld [vmem:[%s871 + $0x78] sm:$0xff]
      %s888 = scalar_lea.vmem %s1, 32
      %v889 = vld [vmem:[%s888] sm:$0xff]
      %v890 = vld [vmem:[%s888 + $0x8] sm:$0xf]
      %v892 = vsel %vm637, %v872, 0
      %v895 = vsel %vm637, %v873, 0
      %v898 = vsel %vm637, %v874, 0
      %v901 = vsel %vm637, %v875, 0
      %v904 = vsel %vm637, %v876, 0
      %v907 = vsel %vm637, %v877, 0
      %v910 = vsel %vm637, %v878, 0
      %v913 = vsel %vm637, %v879, 0
      %v916 = vsel %vm637, %v880, 0
      %v919 = vsel %vm637, %v881, 0
      %v922 = vsel %vm637, %v882, 0
      %v925 = vsel %vm637, %v883, 0
      %v928 = vsel %vm637, %v884, 0
      %v931 = vsel %vm637, %v885, 0
      %v934 = vsel %vm637, %v886, 0
      %v937 = vsel %vm637, %v887, 0
      %v940 = vsel %vm686, %v890, 0
      %942 = vmatpush.msra.mxu0 0.0
      %943 = vmatpush.msra.mxu0 0.0
      %944 = vmatpush.msra.mxu0 0.0
      %945 = vmatpush.msra.mxu0 0.0
      %946 = vmatpush.msra.mxu0 0.0
      %947 = vmatpush.msra.mxu0 0.0
      %948 = vmatpush.msra.mxu0 0.0
      %949 = vmatpush.msra.mxu0 0.0
      %950 = vmatpush.msra.mxu0 0.0
      %951 = vmatpush.msra.mxu0 0.0
      %952 = vmatpush.msra.mxu0 0.0
      %953 = vmatpush.msra.mxu0 0.0
      %954 = vmatpush.msra.mxu0 0.0
      %955 = vmatpush.msra.mxu0 0.0
      %956 = vmatpush.msra.mxu0 %v940
      %957 = vmatpush.msra.mxu0 %v889
      %958 = vmatmul.f32.gmra.mxu0 %v892
      %v959 = vpop.f32.mrf.mxu0
      %v960 = vadd.f32 0.0, %v959
      %961 = vmatmul.f32.gmra.mxu0 %v895
      %v962 = vpop.f32.mrf.mxu0
      %v963 = vadd.f32 0.0, %v962
      %964 = vmatmul.f32.gmra.mxu0 %v898
      %v965 = vpop.f32.mrf.mxu0
      %v966 = vadd.f32 0.0, %v965
      %967 = vmatmul.f32.gmra.mxu0 %v901
      %v968 = vpop.f32.mrf.mxu0
      %v969 = vadd.f32 0.0, %v968
      %970 = vmatmul.f32.gmra.mxu0 %v904
      %v971 = vpop.f32.mrf.mxu0
      %v972 = vadd.f32 0.0, %v971
      %973 = vmatmul.f32.gmra.mxu0 %v907
      %v974 = vpop.f32.mrf.mxu0
      %v975 = vadd.f32 0.0, %v974
      %976 = vmatmul.f32.gmra.mxu0 %v910
      %v977 = vpop.f32.mrf.mxu0
      %v978 = vadd.f32 0.0, %v977
      %979 = vmatmul.f32.gmra.mxu0 %v913
      %v980 = vpop.f32.mrf.mxu0
      %v981 = vadd.f32 0.0, %v980
      %982 = vmatmul.f32.gmra.mxu0 %v916
      %v983 = vpop.f32.mrf.mxu0
      %v984 = vadd.f32 0.0, %v983
      %985 = vmatmul.f32.gmra.mxu0 %v919
      %v986 = vpop.f32.mrf.mxu0
      %v987 = vadd.f32 0.0, %v986
      %988 = vmatmul.f32.gmra.mxu0 %v922
      %v989 = vpop.f32.mrf.mxu0
      %v990 = vadd.f32 0.0, %v989
      %991 = vmatmul.f32.gmra.mxu0 %v925
      %v992 = vpop.f32.mrf.mxu0
      %v993 = vadd.f32 0.0, %v992
      %994 = vmatmul.f32.gmra.mxu0 %v928
      %v995 = vpop.f32.mrf.mxu0
      %v996 = vadd.f32 0.0, %v995
      %997 = vmatmul.f32.gmra.mxu0 %v931
      %v998 = vpop.f32.mrf.mxu0
      %v999 = vadd.f32 0.0, %v998
      %1000 = vmatmul.f32.gmra.mxu0 %v934
      %v1001 = vpop.f32.mrf.mxu0
      %v1002 = vadd.f32 0.0, %v1001
      %1003 = vmatmul.f32.gmra.mxu0 %v937
      %v1004 = vpop.f32.mrf.mxu0
      %v1005 = vadd.f32 0.0, %v1004
      %1006 = vdwg.mxu0
      %v1007 = vadd.f32 %v824, %v960
      %v1008 = vadd.f32 %v827, %v963
      %v1009 = vadd.f32 %v830, %v966
      %v1010 = vadd.f32 %v833, %v969
      %v1011 = vadd.f32 %v836, %v972
      %v1012 = vadd.f32 %v839, %v975
      %v1013 = vadd.f32 %v842, %v978
      %v1014 = vadd.f32 %v845, %v981
      %v1015 = vadd.f32 %v848, %v984
      %v1016 = vadd.f32 %v851, %v987
      %v1017 = vadd.f32 %v854, %v990
      %v1018 = vadd.f32 %v857, %v993
      %v1019 = vadd.f32 %v860, %v996
      %v1020 = vadd.f32 %v863, %v999
      %v1021 = vadd.f32 %v866, %v1002
      %v1022 = vadd.f32 %v869, %v1005
      %1023 = vst [vmem:[%s242] sm:$0xff] %v1007
      %1024 = vst [vmem:[%s242 + $0x8] sm:$0xff] %v1008
      %1025 = vst [vmem:[%s242 + $0x10] sm:$0xff] %v1009
      %1026 = vst [vmem:[%s242 + $0x18] sm:$0xff] %v1010
      %1027 = vst [vmem:[%s242 + $0x20] sm:$0xff] %v1011
      %1028 = vst [vmem:[%s242 + $0x28] sm:$0xff] %v1012
      %1029 = vst [vmem:[%s242 + $0x30] sm:$0xff] %v1013
      %1030 = vst [vmem:[%s242 + $0x38] sm:$0xff] %v1014
      %1031 = vst [vmem:[%s242 + $0x40] sm:$0xff] %v1015
      %1032 = vst [vmem:[%s242 + $0x48] sm:$0xff] %v1016
      %1033 = vst [vmem:[%s242 + $0x50] sm:$0xff] %v1017
      %1034 = vst [vmem:[%s242 + $0x58] sm:$0xff] %v1018
      %1035 = vst [vmem:[%s242 + $0x60] sm:$0xff] %v1019
      %1036 = vst [vmem:[%s242 + $0x68] sm:$0xff] %v1020
      %1037 = vst [vmem:[%s242 + $0x70] sm:$0xff] %v1021
      %1038 = vst [vmem:[%s242 + $0x78] sm:$0xff] %v1022
      %v1039 = vadd.f32 %v1007, %v1008
      %v1040 = vadd.f32 %v1039, %v1009
      %v1041 = vadd.f32 %v1040, %v1010
      %v1042 = vadd.f32 %v1041, %v1011
      %v1043 = vadd.f32 %v1042, %v1012
      %v1044 = vadd.f32 %v1043, %v1013
      %v1045 = vadd.f32 %v1044, %v1014
      %v1046 = vadd.f32 %v1045, %v1015
      %v1047 = vadd.f32 %v1046, %v1016
      %v1048 = vadd.f32 %v1047, %v1017
      %v1049 = vadd.f32 %v1048, %v1018
      %v1050 = vadd.f32 %v1049, %v1019
      %v1051 = vadd.f32 %v1050, %v1020
      %v1052 = vadd.f32 %v1051, %v1021
      %v1053 = vadd.f32 %v1052, %v1022
      %v1054 = vrot.slane %v1053, 4
      %v1055 = vadd.f32 %v1053, %v1054
      %v1056 = vrot.slane %v1055, 2
      %v1057 = vadd.f32 %v1055, %v1056
      %v1058 = vrot.slane %v1057, 1
      %v1059 = vadd.f32 %v1057, %v1058
      %1060 = vst [vmem:[%s250] sm:$0x1] %v1059
      %v1061 = vmul.f32 %v1007, %v1007
      %v1062 = vmul.f32 %v1008, %v1008
      %v1063 = vmul.f32 %v1009, %v1009
      %v1064 = vmul.f32 %v1010, %v1010
      %v1065 = vmul.f32 %v1011, %v1011
      %v1066 = vmul.f32 %v1012, %v1012
      %v1067 = vmul.f32 %v1013, %v1013
      %v1068 = vmul.f32 %v1014, %v1014
      %v1069 = vmul.f32 %v1015, %v1015
      %v1070 = vmul.f32 %v1016, %v1016
      %v1071 = vmul.f32 %v1017, %v1017
      %v1072 = vmul.f32 %v1018, %v1018
      %v1073 = vmul.f32 %v1019, %v1019
      %v1074 = vmul.f32 %v1020, %v1020
      %v1075 = vmul.f32 %v1021, %v1021
      %v1076 = vmul.f32 %v1022, %v1022
      %v1077 = vadd.f32 %v1061, %v1062
      %v1078 = vadd.f32 %v1077, %v1063
      %v1079 = vadd.f32 %v1078, %v1064
      %v1080 = vadd.f32 %v1079, %v1065
      %v1081 = vadd.f32 %v1080, %v1066
      %v1082 = vadd.f32 %v1081, %v1067
      %v1083 = vadd.f32 %v1082, %v1068
      %v1084 = vadd.f32 %v1083, %v1069
      %v1085 = vadd.f32 %v1084, %v1070
      %v1086 = vadd.f32 %v1085, %v1071
      %v1087 = vadd.f32 %v1086, %v1072
      %v1088 = vadd.f32 %v1087, %v1073
      %v1089 = vadd.f32 %v1088, %v1074
      %v1090 = vadd.f32 %v1089, %v1075
      %v1091 = vadd.f32 %v1090, %v1076
      %v1092 = vrot.slane %v1091, 4
      %v1093 = vadd.f32 %v1091, %v1092
      %v1094 = vrot.slane %v1093, 2
      %v1095 = vadd.f32 %v1093, %v1094
      %v1096 = vrot.slane %v1095, 1
      %v1097 = vadd.f32 %v1095, %v1096
      %1098 = vst [vmem:[%s257] sm:$0x1] %v1097
      %s1099 = smul.u32 16, %s21
      %p1100 = scmp.lt.s32.totalorder %s20, 1
      %s1101 = scalar_select %p1100, %s20, 1
      %p1102 = scmp.lt.s32.totalorder %s1099, 31
      %s1103 = scalar_select %p1102, %s1099, 31
      %s1104 = smul.addr %s1101, 32
      %s1105 = sadd.s32 %s1103, %s1104
      %s1106 = smul.addr %s1105, 8
      %s1107 = scalar_lea.vmem %s2, %s1106
      %p1108 = scmp.lt.s32.totalorder %s20, 1
      %s1109 = scalar_select %p1108, %s20, 1
      %p1110 = scmp.lt.s32.totalorder %s21, 1
      %s1111 = scalar_select %p1110, %s21, 1
      %s1112 = smul.addr %s1109, 2
      %s1113 = sadd.s32 %s1111, %s1112
      %s1114 = scalar_lea.vmem %s3, %s1113
      %p1115 = scmp.lt.s32.totalorder %s20, 1
      %s1116 = scalar_select %p1115, %s20, 1
      %p1117 = scmp.lt.s32.totalorder %s21, 1
      %s1118 = scalar_select %p1117, %s21, 1
      %s1119 = smul.addr %s1116, 2
      %s1120 = sadd.s32 %s1118, %s1119
      %s1121 = scalar_lea.vmem %s4, %s1120
      // Predicated region
      $region29: #{double_conv_pallas.2} parent=27 // pred_check
        %p1122 = pneg %p95
      $region30: #{double_conv_pallas.2} parent=27 // pred_check_branch
        %1124 = sbr.rel (%p1122) target = $region32
      $region31: #{double_conv_pallas.2} parent=27 // pred_region
        %s1125 = smul.u32 16, %s21
      $region32: #{double_conv_pallas.2} parent=27 // pred_fallthru
        _
      // Predicated region
      $region33: #{double_conv_pallas.2} parent=27 // pred_check
        %p1126 = pneg %p123
      $region34: #{double_conv_pallas.2} parent=27 // pred_check_branch
        %1128 = sbr.rel (%p1126) target = $region36
      $region35: #{double_conv_pallas.2} parent=27 // pred_region
        _
      $region36: #{double_conv_pallas.2} parent=27 // pred_fallthru
        _
      // Predicated region
      $region37: #{double_conv_pallas.2} parent=27 // pred_check
        %p1129 = pneg %p151
      $region38: #{double_conv_pallas.2} parent=27 // pred_check_branch
        %1131 = sbr.rel (%p1129) target = $region40
      $region39: #{double_conv_pallas.2} parent=27 // pred_region
        _
      $region40: #{double_conv_pallas.2} parent=27 // pred_fallthru
        _
    $region28: #{double_conv_pallas.2} parent=5 // pred_fallthru
      _
    %p1132 = scmp.le.s32.totalorder 2, %s11
    // Predicated region
    $region41: #{double_conv_pallas.2} parent=5 // pred_check
      %p1133 = pneg %p1132
    $region42: #{double_conv_pallas.2} parent=5 // pred_check_branch
      %1135 = sbr.rel (%p1133) target = $region44
    $region43: #{double_conv_pallas.2} parent=5 // pred_region
      %s1136 = ssub.s32 %s11, 2
      // Predicated region
      $region45: #{double_conv_pallas.2} parent=43 // pred_check
        %p1137 = pneg %p101
      $region46: #{double_conv_pallas.2} parent=43 // pred_check_branch
        %1139 = sbr.rel (%p1137) target = $region48
      $region47: #{double_conv_pallas.2} parent=43 // pred_region
        %s1140 = smul.u32 16, %s23
        %p1141 = scmp.lt.s32.totalorder %s22, 1
        %s1142 = scalar_select %p1141, %s22, 1
        %p1143 = scmp.lt.s32.totalorder %s1140, 31
        %s1144 = scalar_select %p1143, %s1140, 31
        %s1145 = smul.addr %s1142, 32
        %s1146 = sadd.s32 %s1144, %s1145
        %s1147 = smul.addr %s1146, 8
        %s1148 = scalar_lea.vmem %s2, %s1147
      $region48: #{double_conv_pallas.2} parent=43 // pred_fallthru
        _
      // Predicated region
      $region49: #{double_conv_pallas.2} parent=43 // pred_check
        %p1149 = pneg %p129
      $region50: #{double_conv_pallas.2} parent=43 // pred_check_branch
        %1151 = sbr.rel (%p1149) target = $region52
      $region51: #{double_conv_pallas.2} parent=43 // pred_region
        %p1152 = scmp.lt.s32.totalorder %s22, 1
        %s1153 = scalar_select %p1152, %s22, 1
        %p1154 = scmp.lt.s32.totalorder %s23, 1
        %s1155 = scalar_select %p1154, %s23, 1
        %s1156 = smul.addr %s1153, 2
        %s1157 = sadd.s32 %s1155, %s1156
        %s1158 = scalar_lea.vmem %s3, %s1157
      $region52: #{double_conv_pallas.2} parent=43 // pred_fallthru
        _
      // Predicated region
      $region53: #{double_conv_pallas.2} parent=43 // pred_check
        %p1159 = pneg %p157
      $region54: #{double_conv_pallas.2} parent=43 // pred_check_branch
        %1161 = sbr.rel (%p1159) target = $region56
      $region55: #{double_conv_pallas.2} parent=43 // pred_region
        %p1162 = scmp.lt.s32.totalorder %s22, 1
        %s1163 = scalar_select %p1162, %s22, 1
        %p1164 = scmp.lt.s32.totalorder %s23, 1
        %s1165 = scalar_select %p1164, %s23, 1
        %s1166 = smul.addr %s1163, 2
        %s1167 = sadd.s32 %s1165, %s1166
        %s1168 = scalar_lea.vmem %s4, %s1167
      $region56: #{double_conv_pallas.2} parent=43 // pred_fallthru
        _
    $region44: #{double_conv_pallas.2} parent=5 // pred_fallthru
      _
  $region6: #{double_conv_pallas.2} parent=0 // loop_footer
    %s15 = sadd.s32 1, %s11
  $region7: #{double_conv_pallas.2} parent=0 // loop_footer_branch
    %10 = sbr.rel target = $region3
  $region8: #{double_conv_pallas.2} parent=0 // loop_exit
    _

// kernel: double_conv_pallas.3
$region0: #{double_conv_pallas.3}
  #allocation0 [shape = 'u32[]', space=smem, size = 0x4, offset = 0x4, fixed_abs, tag = 'smem constant byte address 0x4 - core index']
  #allocation1 [shape = 'u32[72,128]{1,0:T(1,128)}', space=vmem, size = 0x9000, scoped, tag = 'internal scratch']
  #allocation2 [shape = 'f32[10,16,384]{2,1,0:T(8,128)}', space=vmem, size = 0x3c000, scoped, tag = 'scratch operand']
  %s0 = inlined_call_operand.vmem [shape: f32[2,16,16,128], index: 0, kind: input, shape index: {}]
  %s1 = inlined_call_operand.vmem [shape: f32[1,128], index: 1, kind: input, shape index: {}]
  %s2 = inlined_call_operand.vmem [shape: f32[1,128], index: 2, kind: input, shape index: {}]
  %s3 = inlined_call_operand.vmem [shape: f32[3,384,128], index: 3, kind: input, shape index: {}]
  %s4 = inlined_call_operand.vmem [shape: f32[2,256,128], index: 4, kind: output, shape index: {0}]
  %s5 = inlined_call_operand.vmem [shape: f32[2,2,1,128], index: 5, kind: output, shape index: {1}]
  %s6 = inlined_call_operand.vmem [shape: f32[2,2,1,128], index: 6, kind: output, shape index: {2}]
  %7 = xla_tuple %s4, %s5, %s6
  %s8 = sld [smem:[#allocation0]]
  $region65: #{double_conv_pallas.3} parent=0
    _
  %s10 = ssub.s32 1, %s8
  %s11 = scalar_select 0, %s10, %s8
  loop: start=0, step=1, limit=6
  $region2: #{double_conv_pallas.3} parent=0 // loop_pre_header
    _
  $region3: #{double_conv_pallas.3} parent=0 // loop_header
    %s13 = sphi 0, %s17
    %p14 = scmp.ge.s32.totalorder %s13, 6
    %s20 = sphi 0, %s32
    %s21 = sphi 0, %s28
    %s22 = sphi 0, %s20
    %s23 = sphi 0, %s21
    %s24 = sphi 0, %s22
    %s25 = sphi 0, %s23
    %s35 = sphi 0, %s37
    %s38 = sphi 0, %s35
    %s39 = sphi 0, %s38
    %s55 = sphi 0, %s39
    %s59 = sphi 0, %s59
    %s61 = sphi 0, %s59
    %s62 = sphi 0, %s61
    %s76 = sphi 0, %s62
    %s80 = sphi 0, %s80
    %s82 = sphi 0, %s80
    %s83 = sphi 0, %s82
    %s97 = sphi 0, %s83
    %s101 = sphi 0, %s101
    %s103 = sphi 0, %s101
    %s104 = sphi 0, %s103
    %s118 = sphi 0, %s104
    %s126 = sphi 0, %s128
    %s129 = sphi 0, %s126
    %s130 = sphi 0, %s129
    %s146 = sphi 0, %s130
    %s154 = sphi 0, %s156
    %s157 = sphi 0, %s154
    %s158 = sphi 0, %s157
    %s174 = sphi 0, %s158
    %s182 = sphi 0, %s184
    %s185 = sphi 0, %s182
    %s186 = sphi 0, %s185
    %s202 = sphi 0, %s186
  $region4: #{double_conv_pallas.3} parent=0 // loop_header_branch
    %16 = sbr.rel (%p14) target = $region8
  $region5: #{double_conv_pallas.3} parent=0 // loop_body
    %s18 = ssub.s32 %s13, 1
    %s19 = ssub.s32 %s13, 2
    %s26 = sadd.s32 1, %s21
    %p27 = scmp.ge.s32.totalorder %s26, 2
    %s28 = scalar_select %p27, 0, %s26
    %s29 = sadd.s32 1, %s20
    %s30 = scalar_select %p27, %s29, %s20
    %p31 = scmp.ge.s32.totalorder %s30, 2
    %s32 = scalar_select %p31, 0, %s30
    %s33 = ssub.s32 %s20, %s32
    %p34 = scmp.eq.s32.totalorder %s33, 0
    %s36 = sadd.s32 %s35, 1
    %s37 = scalar_select %p34, %s35, %s36
    %p40 = pneg %p34
    %p41 = scmp.eq.s32.totalorder %s13, 3
    %p42 = por %p40, %p41
    %p43 = scmp.ne.s32.totalorder %s35, %s38
    %p44 = scmp.eq.s32.totalorder %s13, 0
    %p45 = por %p43, %p44
    %p46 = scmp.ne.s32.totalorder %s35, %s38
    %p47 = scmp.eq.s32.totalorder %s18, 3
    %p48 = por %p46, %p47
    %p49 = scmp.ne.s32.totalorder %s38, %s39
    %p50 = scmp.eq.s32.totalorder %s18, 0
    %p51 = por %p49, %p50
    %p52 = scmp.ne.s32.totalorder %s38, %s39
    %p53 = scmp.eq.s32.totalorder %s19, 3
    %p54 = por %p52, %p53
    %p56 = scmp.ne.s32.totalorder %s39, %s55
    %p57 = scmp.eq.s32.totalorder %s19, 0
    %p58 = por %p56, %p57
    %s60 = sadd.s32 %s59, 1
    %p63 = scmp.eq.s32.totalorder %s13, 3
    %p64 = scmp.ne.s32.totalorder %s59, %s61
    %p65 = scmp.eq.s32.totalorder %s13, 0
    %p66 = por %p64, %p65
    %p67 = scmp.ne.s32.totalorder %s59, %s61
    %p68 = scmp.eq.s32.totalorder %s18, 3
    %p69 = por %p67, %p68
    %p70 = scmp.ne.s32.totalorder %s61, %s62
    %p71 = scmp.eq.s32.totalorder %s18, 0
    %p72 = por %p70, %p71
    %p73 = scmp.ne.s32.totalorder %s61, %s62
    %p74 = scmp.eq.s32.totalorder %s19, 3
    %p75 = por %p73, %p74
    %p77 = scmp.ne.s32.totalorder %s62, %s76
    %p78 = scmp.eq.s32.totalorder %s19, 0
    %p79 = por %p77, %p78
    %s81 = sadd.s32 %s80, 1
    %p84 = scmp.eq.s32.totalorder %s13, 3
    %p85 = scmp.ne.s32.totalorder %s80, %s82
    %p86 = scmp.eq.s32.totalorder %s13, 0
    %p87 = por %p85, %p86
    %p88 = scmp.ne.s32.totalorder %s80, %s82
    %p89 = scmp.eq.s32.totalorder %s18, 3
    %p90 = por %p88, %p89
    %p91 = scmp.ne.s32.totalorder %s82, %s83
    %p92 = scmp.eq.s32.totalorder %s18, 0
    %p93 = por %p91, %p92
    %p94 = scmp.ne.s32.totalorder %s82, %s83
    %p95 = scmp.eq.s32.totalorder %s19, 3
    %p96 = por %p94, %p95
    %p98 = scmp.ne.s32.totalorder %s83, %s97
    %p99 = scmp.eq.s32.totalorder %s19, 0
    %p100 = por %p98, %p99
    %s102 = sadd.s32 %s101, 1
    %p105 = scmp.eq.s32.totalorder %s13, 3
    %p106 = scmp.ne.s32.totalorder %s101, %s103
    %p107 = scmp.eq.s32.totalorder %s13, 0
    %p108 = por %p106, %p107
    %p109 = scmp.ne.s32.totalorder %s101, %s103
    %p110 = scmp.eq.s32.totalorder %s18, 3
    %p111 = por %p109, %p110
    %p112 = scmp.ne.s32.totalorder %s103, %s104
    %p113 = scmp.eq.s32.totalorder %s18, 0
    %p114 = por %p112, %p113
    %p115 = scmp.ne.s32.totalorder %s103, %s104
    %p116 = scmp.eq.s32.totalorder %s19, 3
    %p117 = por %p115, %p116
    %p119 = scmp.ne.s32.totalorder %s104, %s118
    %p120 = scmp.eq.s32.totalorder %s19, 0
    %p121 = por %p119, %p120
    %s122 = ssub.s32 %s20, %s32
    %s123 = ssub.s32 %s21, %s28
    %s124 = sor.u32 %s122, %s123
    %p125 = scmp.eq.s32.totalorder %s124, 0
    %s127 = sadd.s32 %s126, 1
    %s128 = scalar_select %p125, %s126, %s127
    %p131 = pneg %p125
    %p132 = scmp.eq.s32.totalorder %s13, 3
    %p133 = por %p131, %p132
    %p134 = scmp.ne.s32.totalorder %s126, %s129
    %p135 = scmp.eq.s32.totalorder %s13, 0
    %p136 = por %p134, %p135
    %p137 = scmp.ne.s32.totalorder %s126, %s129
    %p138 = scmp.eq.s32.totalorder %s18, 3
    %p139 = por %p137, %p138
    %p140 = scmp.ne.s32.totalorder %s129, %s130
    %p141 = scmp.eq.s32.totalorder %s18, 0
    %p142 = por %p140, %p141
    %p143 = scmp.ne.s32.totalorder %s129, %s130
    %p144 = scmp.eq.s32.totalorder %s19, 3
    %p145 = por %p143, %p144
    %p147 = scmp.ne.s32.totalorder %s130, %s146
    %p148 = scmp.eq.s32.totalorder %s19, 0
    %p149 = por %p147, %p148
    %s150 = ssub.s32 %s20, %s32
    %s151 = ssub.s32 %s21, %s28
    %s152 = sor.u32 %s150, %s151
    %p153 = scmp.eq.s32.totalorder %s152, 0
    %s155 = sadd.s32 %s154, 1
    %s156 = scalar_select %p153, %s154, %s155
    %p159 = pneg %p153
    %p160 = scmp.eq.s32.totalorder %s13, 3
    %p161 = por %p159, %p160
    %p162 = scmp.ne.s32.totalorder %s154, %s157
    %p163 = scmp.eq.s32.totalorder %s13, 0
    %p164 = por %p162, %p163
    %p165 = scmp.ne.s32.totalorder %s154, %s157
    %p166 = scmp.eq.s32.totalorder %s18, 3
    %p167 = por %p165, %p166
    %p168 = scmp.ne.s32.totalorder %s157, %s158
    %p169 = scmp.eq.s32.totalorder %s18, 0
    %p170 = por %p168, %p169
    %p171 = scmp.ne.s32.totalorder %s157, %s158
    %p172 = scmp.eq.s32.totalorder %s19, 3
    %p173 = por %p171, %p172
    %p175 = scmp.ne.s32.totalorder %s158, %s174
    %p176 = scmp.eq.s32.totalorder %s19, 0
    %p177 = por %p175, %p176
    %s178 = ssub.s32 %s20, %s32
    %s179 = ssub.s32 %s21, %s28
    %s180 = sor.u32 %s178, %s179
    %p181 = scmp.eq.s32.totalorder %s180, 0
    %s183 = sadd.s32 %s182, 1
    %s184 = scalar_select %p181, %s182, %s183
    %p187 = pneg %p181
    %p188 = scmp.eq.s32.totalorder %s13, 3
    %p189 = por %p187, %p188
    %p190 = scmp.ne.s32.totalorder %s182, %s185
    %p191 = scmp.eq.s32.totalorder %s13, 0
    %p192 = por %p190, %p191
    %p193 = scmp.ne.s32.totalorder %s182, %s185
    %p194 = scmp.eq.s32.totalorder %s18, 3
    %p195 = por %p193, %p194
    %p196 = scmp.ne.s32.totalorder %s185, %s186
    %p197 = scmp.eq.s32.totalorder %s18, 0
    %p198 = por %p196, %p197
    %p199 = scmp.ne.s32.totalorder %s185, %s186
    %p200 = scmp.eq.s32.totalorder %s19, 3
    %p201 = por %p199, %p200
    %p203 = scmp.ne.s32.totalorder %s186, %s202
    %p204 = scmp.eq.s32.totalorder %s19, 0
    %p205 = por %p203, %p204
    %p206 = scmp.le.s32.totalorder 1, %s13
    %p207 = scmp.lt.s32.totalorder %s13, 5
    %p208 = pnand %p206, %p207
    %p209 = pneg %p208
    // Predicated region
    $region9: #{double_conv_pallas.3} parent=5 // pred_check
      _
    $region10: #{double_conv_pallas.3} parent=5 // pred_check_branch
      %211 = sbr.rel (%p208) target = $region12
    $region11: #{double_conv_pallas.3} parent=5 // pred_region
      %s212 = ssub.s32 %s13, 1
      // Predicated region
      $region13: #{double_conv_pallas.3} parent=11 // pred_check
        %p213 = pneg %p72
      $region14: #{double_conv_pallas.3} parent=11 // pred_check_branch
        %215 = sbr.rel (%p213) target = $region16
      $region15: #{double_conv_pallas.3} parent=11 // pred_region
        _
      $region16: #{double_conv_pallas.3} parent=11 // pred_fallthru
        _
      // Predicated region
      $region17: #{double_conv_pallas.3} parent=11 // pred_check
        %p216 = pneg %p93
      $region18: #{double_conv_pallas.3} parent=11 // pred_check_branch
        %218 = sbr.rel (%p216) target = $region20
      $region19: #{double_conv_pallas.3} parent=11 // pred_region
        _
      $region20: #{double_conv_pallas.3} parent=11 // pred_fallthru
        _
      // Predicated region
      $region21: #{double_conv_pallas.3} parent=11 // pred_check
        %p219 = pneg %p114
      $region22: #{double_conv_pallas.3} parent=11 // pred_check_branch
        %221 = sbr.rel (%p219) target = $region24
      $region23: #{double_conv_pallas.3} parent=11 // pred_region
        _
      $region24: #{double_conv_pallas.3} parent=11 // pred_fallthru
        _
    $region12: #{double_conv_pallas.3} parent=5 // pred_fallthru
      _
    %p222 = scmp.lt.s32.totalorder %s13, 4
    // Predicated region
    $region25: #{double_conv_pallas.3} parent=5 // pred_check
      %p223 = pneg %p222
    $region26: #{double_conv_pallas.3} parent=5 // pred_check_branch
      %225 = sbr.rel (%p223) target = $region28
    $region27: #{double_conv_pallas.3} parent=5 // pred_region
      // Predicated region
      $region29: #{double_conv_pallas.3} parent=27 // pred_check
        %p226 = pneg %p45
      $region30: #{double_conv_pallas.3} parent=27 // pred_check_branch
        %228 = sbr.rel (%p226) target = $region32
      $region31: #{double_conv_pallas.3} parent=27 // pred_region
        %p229 = scmp.lt.s32.totalorder %s20, 1
        %s230 = scalar_select %p229, %s20, 1
        %s231 = smul.addr %s230, 32
        %s232 = smul.addr %s231, 8
        %s233 = scalar_lea.vmem %s0, %s232
      $region32: #{double_conv_pallas.3} parent=27 // pred_fallthru
        _
    $region28: #{double_conv_pallas.3} parent=5 // pred_fallthru
      _
    %p234 = scmp.le.s32.totalorder 1, %s13
    %p235 = scmp.lt.s32.totalorder %s13, 5
    %p236 = pnand %p234, %p235
    %p237 = pneg %p236
    // Predicated region
    $region33: #{double_conv_pallas.3} parent=5 // pred_check
      _
    $region34: #{double_conv_pallas.3} parent=5 // pred_check_branch
      %239 = sbr.rel (%p236) target = $region36
    $region35: #{double_conv_pallas.3} parent=5 // pred_region
      %s240 = ssub.s32 %s13, 1
      %p241 = scmp.lt.s32.totalorder %s22, 1
      %s242 = scalar_select %p241, %s22, 1
      %s243 = smul.addr %s242, 32
      %s244 = smul.addr %s243, 8
      %s245 = scalar_lea.vmem %s0, %s244
      %p246 = pneg %p51
      %p247 = pneg %p48
      %p248 = pneg %p72
      %p249 = pneg %p69
      %p250 = pneg %p93
      %p251 = pneg %p90
      %p252 = pneg %p114
      %p253 = pneg %p111
      %p254 = pneg %p142
      %p255 = pneg %p139
      %s256 = smul.u32 16, %s23
      %p257 = scmp.lt.s32.totalorder %s22, 1
      %s258 = scalar_select %p257, %s22, 1
      %p259 = scmp.lt.s32.totalorder %s256, 31
      %s260 = scalar_select %p259, %s256, 31
      %s261 = smul.addr %s258, 32
      %s262 = sadd.s32 %s260, %s261
      %s263 = smul.addr %s262, 8
      %s264 = scalar_lea.vmem %s4, %s263
      %p265 = pneg %p170
      %p266 = pneg %p167
      %p267 = scmp.lt.s32.totalorder %s22, 1
      %s268 = scalar_select %p267, %s22, 1
      %p269 = scmp.lt.s32.totalorder %s23, 1
      %s270 = scalar_select %p269, %s23, 1
      %s271 = smul.addr %s268, 2
      %s272 = sadd.s32 %s270, %s271
      %s273 = scalar_lea.vmem %s5, %s272
      %p274 = pneg %p198
      %p275 = pneg %p195
      %p276 = scmp.lt.s32.totalorder %s22, 1
      %s277 = scalar_select %p276, %s22, 1
      %p278 = scmp.lt.s32.totalorder %s23, 1
      %s279 = scalar_select %p278, %s23, 1
      %s280 = smul.addr %s277, 2
      %s281 = sadd.s32 %s279, %s280
      %s282 = scalar_lea.vmem %s6, %s281
      %p283 = scmp.lt.s32.totalorder %s22, 1
      %s284 = scalar_select %p283, %s22, 1
      %s285 = smul.addr %s284, 32
      %s286 = smul.addr %s285, 8
      %s287 = scalar_lea.vmem %s0, %s286
      %s288 = smul.u32 16, %s23
      %p289 = scmp.lt.s32.totalorder %s22, 1
      %s290 = scalar_select %p289, %s22, 1
      %p291 = scmp.lt.s32.totalorder %s288, 31
      %s292 = scalar_select %p291, %s288, 31
      %s293 = smul.addr %s290, 32
      %s294 = sadd.s32 %s292, %s293
      %s295 = smul.addr %s294, 8
      %s296 = scalar_lea.vmem %s4, %s295
      %s297 = smul.u32 16, %s23
      %p298 = scmp.lt.s32.totalorder %s22, 1
      %s299 = scalar_select %p298, %s22, 1
      %p300 = scmp.lt.s32.totalorder %s23, 1
      %s301 = scalar_select %p300, %s23, 1
      %s302 = smul.addr %s299, 2
      %s303 = sadd.s32 %s301, %s302
      %s304 = scalar_lea.vmem %s5, %s303
      %p305 = scmp.lt.s32.totalorder %s22, 1
      %s306 = scalar_select %p305, %s22, 1
      %p307 = scmp.lt.s32.totalorder %s23, 1
      %s308 = scalar_select %p307, %s23, 1
      %s309 = smul.addr %s306, 2
      %s310 = sadd.s32 %s308, %s309
      %s311 = scalar_lea.vmem %s6, %s310
      %s312 = smul.u32 %s23, 8
      %v313 = vld [vmem:[%s1] sm:$0x1]
      %v314 = vld [vmem:[%s2] sm:$0x1]
      %p315 = scmp.gt.s32.totalorder %s23, 0
      %s316 = scalar_select %p315, 1, 0
      %s317 = scvt.s32.f32 %s316
      %p318 = scmp.lt.s32.totalorder %s23, 1
      %s319 = scalar_select %p318, 1, 0
      %s320 = scvt.s32.f32 %s319
      %s321 = smul.u32 %s312, 16
      %s322 = scalar_lea.vmem %s287, %s321
      %v323 = vld [vmem:[%s322] sm:$0xff]
      %v324 = vld [vmem:[%s322 + $0x8] sm:$0x7f]
      %v325 = vld [vmem:[%s322 + $0x10] sm:$0xff]
      %v326 = vld [vmem:[%s322 + $0x18] sm:$0x7f]
      %v327 = vld [vmem:[%s322 + $0x20] sm:$0xff]
      %v328 = vld [vmem:[%s322 + $0x28] sm:$0x7f]
      %v329 = vld [vmem:[%s322 + $0x30] sm:$0xff]
      %v330 = vld [vmem:[%s322 + $0x38] sm:$0x7f]
      %v331 = vld [vmem:[%s322 + $0x40] sm:$0xff]
      %v332 = vld [vmem:[%s322 + $0x48] sm:$0x7f]
      %v333 = vld [vmem:[%s322 + $0x50] sm:$0xff]
      %v334 = vld [vmem:[%s322 + $0x58] sm:$0x7f]
      %v335 = vld [vmem:[%s322 + $0x60] sm:$0xff]
      %v336 = vld [vmem:[%s322 + $0x68] sm:$0x7f]
      %v337 = vld [vmem:[%s322 + $0x70] sm:$0xff]
      %v338 = vld [vmem:[%s322 + $0x78] sm:$0x7f]
      %v340 = vperm.slane %v313, 0
      %v342 = vmul.f32 %v323, %v340
      %v343 = vmul.f32 %v324, %v340
      %v344 = vmul.f32 %v325, %v340
      %v345 = vmul.f32 %v326, %v340
      %v346 = vmul.f32 %v327, %v340
      %v347 = vmul.f32 %v328, %v340
      %v348 = vmul.f32 %v329, %v340
      %v349 = vmul.f32 %v330, %v340
      %v350 = vmul.f32 %v331, %v340
      %v351 = vmul.f32 %v332, %v340
      %v352 = vmul.f32 %v333, %v340
      %v353 = vmul.f32 %v334, %v340
      %v354 = vmul.f32 %v335, %v340
      %v355 = vmul.f32 %v336, %v340
      %v356 = vmul.f32 %v337, %v340
      %v357 = vmul.f32 %v338, %v340
      %v359 = vperm.slane %v314, 0
      %v361 = vadd.f32 %v342, %v359
      %v362 = vadd.f32 %v343, %v359
      %v363 = vadd.f32 %v344, %v359
      %v364 = vadd.f32 %v345, %v359
      %v365 = vadd.f32 %v346, %v359
      %v366 = vadd.f32 %v347, %v359
      %v367 = vadd.f32 %v348, %v359
      %v368 = vadd.f32 %v349, %v359
      %v369 = vadd.f32 %v350, %v359
      %v370 = vadd.f32 %v351, %v359
      %v371 = vadd.f32 %v352, %v359
      %v372 = vadd.f32 %v353, %v359
      %v373 = vadd.f32 %v354, %v359
      %v374 = vadd.f32 %v355, %v359
      %v375 = vadd.f32 %v356, %v359
      %v376 = vadd.f32 %v357, %v359
      %v377 = vmax.f32 %v361, 0.0
      %v378 = vmax.f32 %v362, 0.0
      %v379 = vmax.f32 %v363, 0.0
      %v380 = vmax.f32 %v364, 0.0
      %v381 = vmax.f32 %v365, 0.0
      %v382 = vmax.f32 %v366, 0.0
      %v383 = vmax.f32 %v367, 0.0
      %v384 = vmax.f32 %v368, 0.0
      %v385 = vmax.f32 %v369, 0.0
      %v386 = vmax.f32 %v370, 0.0
      %v387 = vmax.f32 %v371, 0.0
      %v388 = vmax.f32 %v372, 0.0
      %v389 = vmax.f32 %v373, 0.0
      %v390 = vmax.f32 %v374, 0.0
      %v391 = vmax.f32 %v375, 0.0
      %v392 = vmax.f32 %v376, 0.0
      %vm409 = vcmask 1040384
      %v410 = vrot.slane %v377, 7
      %v411 = vrot.slane %v378, 7
      %v412 = vsel %vm409, %v410, %v411
      %v413 = vrot.slane %v379, 7
      %v414 = vrot.slane %v380, 7
      %v415 = vsel %vm409, %v413, %v414
      %v416 = vrot.slane %v381, 7
      %v417 = vrot.slane %v382, 7
      %v418 = vsel %vm409, %v416, %v417
      %v419 = vrot.slane %v383, 7
      %v420 = vrot.slane %v384, 7
      %v421 = vsel %vm409, %v419, %v420
      %v422 = vrot.slane %v385, 7
      %v423 = vrot.slane %v386, 7
      %v424 = vsel %vm409, %v422, %v423
      %v425 = vrot.slane %v387, 7
      %v426 = vrot.slane %v388, 7
      %v427 = vsel %vm409, %v425, %v426
      %v428 = vrot.slane %v389, 7
      %v429 = vrot.slane %v390, 7
      %v430 = vsel %vm409, %v428, %v429
      %v431 = vrot.slane %v391, 7
      %v432 = vrot.slane %v392, 7
      %v433 = vsel %vm409, %v431, %v432
      %s450 = scalar_lea.vmem [#allocation2], 48
      %451 = vst [vmem:[%s450] sm:$0xfe] %v410
      %452 = vst [vmem:[%s450 + $0x18] sm:$0xff] %v412
      %453 = vst [vmem:[%s450 + $0x30] sm:$0xfe] %v413
      %454 = vst [vmem:[%s450 + $0x48] sm:$0xff] %v415
      %455 = vst [vmem:[%s450 + $0x60] sm:$0xfe] %v416
      %456 = vst [vmem:[%s450 + $0x78] sm:$0xff] %v418
      %457 = vst [vmem:[%s450 + $0x90] sm:$0xfe] %v419
      %458 = vst [vmem:[%s450 + $0xa8] sm:$0xff] %v421
      %459 = vst [vmem:[%s450 + $0xc0] sm:$0xfe] %v422
      %460 = vst [vmem:[%s450 + $0xd8] sm:$0xff] %v424
      %461 = vst [vmem:[%s450 + $0xf0] sm:$0xfe] %v425
      %462 = vst [vmem:[%s450 + $0x108] sm:$0xff] %v427
      %463 = vst [vmem:[%s450 + $0x120] sm:$0xfe] %v428
      %464 = vst [vmem:[%s450 + $0x138] sm:$0xff] %v430
      %465 = vst [vmem:[%s450 + $0x150] sm:$0xfe] %v431
      %466 = vst [vmem:[%s450 + $0x168] sm:$0xff] %v433
      %s467 = ssub.s32 %s312, 1
      %p468 = scmp.gt.s32.totalorder %s467, 0
      %s469 = scalar_select %p468, %s467, 0
      %s470 = smul.u32 %s469, 16
      %s471 = scalar_lea.vmem %s287, %s470
      %v472 = vld [vmem:[%s471] sm:$0xff]
      %v473 = vld [vmem:[%s471 + $0x8] sm:$0x7f]
      %v474 = vmul.f32 %v472, %v340
      %v475 = vmul.f32 %v473, %v340
      %v476 = vadd.f32 %v474, %v359
      %v477 = vadd.f32 %v475, %v359
      %v478 = vmax.f32 %v476, 0.0
      %v479 = vmax.f32 %v477, 0.0
      %v480 = vstv %s317
      %v481 = vmul.f32 %v478, %v480
      %v482 = vmul.f32 %v479, %v480
      %v485 = vrot.slane %v481, 7
      %v486 = vrot.slane %v482, 7
      %v487 = vsel %vm409, %v485, %v486
      %490 = vst [vmem:[#allocation2] sm:$0xfe] %v485
      %491 = vst [vmem:[#allocation2 + $0x18] sm:$0xff] %v487
      %s492 = sadd.s32 %s312, 8
      %p493 = scmp.lt.s32.totalorder %s492, 15
      %s494 = scalar_select %p493, %s492, 15
      %s495 = smul.u32 %s494, 16
      %s496 = scalar_lea.vmem %s287, %s495
      %v497 = vld [vmem:[%s496] sm:$0xff]
      %v498 = vld [vmem:[%s496 + $0x8] sm:$0x7f]
      %v499 = vmul.f32 %v497, %v340
      %v500 = vmul.f32 %v498, %v340
      %v501 = vadd.f32 %v499, %v359
      %v502 = vadd.f32 %v500, %v359
      %v503 = vmax.f32 %v501, 0.0
      %v504 = vmax.f32 %v502, 0.0
      %v505 = vstv %s320
      %v506 = vmul.f32 %v503, %v505
      %v507 = vmul.f32 %v504, %v505
      %v510 = vrot.slane %v506, 7
      %v511 = vrot.slane %v507, 7
      %v512 = vsel %vm409, %v510, %v511
      %s515 = scalar_lea.vmem [#allocation2], 432
      %516 = vst [vmem:[%s515] sm:$0xfe] %v510
      %517 = vst [vmem:[%s515 + $0x18] sm:$0xff] %v512
      %518 = vst [vmem:[#allocation2] sm:$0x1] 0.0
      %519 = vst [vmem:[#allocation2 + $0x30] sm:$0x1] 0.0
      %520 = vst [vmem:[#allocation2 + $0x60] sm:$0x1] 0.0
      %521 = vst [vmem:[#allocation2 + $0x90] sm:$0x1] 0.0
      %522 = vst [vmem:[#allocation2 + $0xc0] sm:$0x1] 0.0
      %523 = vst [vmem:[#allocation2 + $0xf0] sm:$0x1] 0.0
      %524 = vst [vmem:[#allocation2 + $0x120] sm:$0x1] 0.0
      %525 = vst [vmem:[#allocation2 + $0x150] sm:$0x1] 0.0
      %526 = vst [vmem:[#allocation2 + $0x180] sm:$0x1] 0.0
      %527 = vst [vmem:[#allocation2 + $0x1b0] sm:$0x1] 0.0
      %v528 = vld [vmem:[%s322] sm:$0xff]
      %v529 = vld [vmem:[%s322 + $0x8] sm:$0xff]
      %v530 = vld [vmem:[%s322 + $0x10] sm:$0xff]
      %v531 = vld [vmem:[%s322 + $0x18] sm:$0xff]
      %v532 = vld [vmem:[%s322 + $0x20] sm:$0xff]
      %v533 = vld [vmem:[%s322 + $0x28] sm:$0xff]
      %v534 = vld [vmem:[%s322 + $0x30] sm:$0xff]
      %v535 = vld [vmem:[%s322 + $0x38] sm:$0xff]
      %v536 = vld [vmem:[%s322 + $0x40] sm:$0xff]
      %v537 = vld [vmem:[%s322 + $0x48] sm:$0xff]
      %v538 = vld [vmem:[%s322 + $0x50] sm:$0xff]
      %v539 = vld [vmem:[%s322 + $0x58] sm:$0xff]
      %v540 = vld [vmem:[%s322 + $0x60] sm:$0xff]
      %v541 = vld [vmem:[%s322 + $0x68] sm:$0xff]
      %v542 = vld [vmem:[%s322 + $0x70] sm:$0xff]
      %v543 = vld [vmem:[%s322 + $0x78] sm:$0xff]
      %v544 = vmul.f32 %v528, %v340
      %v545 = vmul.f32 %v529, %v340
      %v546 = vmul.f32 %v530, %v340
      %v547 = vmul.f32 %v531, %v340
      %v548 = vmul.f32 %v532, %v340
      %v549 = vmul.f32 %v533, %v340
      %v550 = vmul.f32 %v534, %v340
      %v551 = vmul.f32 %v535, %v340
      %v552 = vmul.f32 %v536, %v340
      %v553 = vmul.f32 %v537, %v340
      %v554 = vmul.f32 %v538, %v340
      %v555 = vmul.f32 %v539, %v340
      %v556 = vmul.f32 %v540, %v340
      %v557 = vmul.f32 %v541, %v340
      %v558 = vmul.f32 %v542, %v340
      %v559 = vmul.f32 %v543, %v340
      %v560 = vadd.f32 %v544, %v359
      %v561 = vadd.f32 %v545, %v359
      %v562 = vadd.f32 %v546, %v359
      %v563 = vadd.f32 %v547, %v359
      %v564 = vadd.f32 %v548, %v359
      %v565 = vadd.f32 %v549, %v359
      %v566 = vadd.f32 %v550, %v359
      %v567 = vadd.f32 %v551, %v359
      %v568 = vadd.f32 %v552, %v359
      %v569 = vadd.f32 %v553, %v359
      %v570 = vadd.f32 %v554, %v359
      %v571 = vadd.f32 %v555, %v359
      %v572 = vadd.f32 %v556, %v359
      %v573 = vadd.f32 %v557, %v359
      %v574 = vadd.f32 %v558, %v359
      %v575 = vadd.f32 %v559, %v359
      %v576 = vmax.f32 %v560, 0.0
      %v577 = vmax.f32 %v561, 0.0
      %v578 = vmax.f32 %v562, 0.0
      %v579 = vmax.f32 %v563, 0.0
      %v580 = vmax.f32 %v564, 0.0
      %v581 = vmax.f32 %v565, 0.0
      %v582 = vmax.f32 %v566, 0.0
      %v583 = vmax.f32 %v567, 0.0
      %v584 = vmax.f32 %v568, 0.0
      %v585 = vmax.f32 %v569, 0.0
      %v586 = vmax.f32 %v570, 0.0
      %v587 = vmax.f32 %v571, 0.0
      %v588 = vmax.f32 %v572, 0.0
      %v589 = vmax.f32 %v573, 0.0
      %v590 = vmax.f32 %v574, 0.0
      %v591 = vmax.f32 %v575, 0.0
      %592 = vst [vmem:[%s450 + $0x8] sm:$0xff] %v576
      %593 = vst [vmem:[%s450 + $0x20] sm:$0xff] %v577
      %594 = vst [vmem:[%s450 + $0x38] sm:$0xff] %v578
      %595 = vst [vmem:[%s450 + $0x50] sm:$0xff] %v579
      %596 = vst [vmem:[%s450 + $0x68] sm:$0xff] %v580
      %597 = vst [vmem:[%s450 + $0x80] sm:$0xff] %v581
      %598 = vst [vmem:[%s450 + $0x98] sm:$0xff] %v582
      %599 = vst [vmem:[%s450 + $0xb0] sm:$0xff] %v583
      %600 = vst [vmem:[%s450 + $0xc8] sm:$0xff] %v584
      %601 = vst [vmem:[%s450 + $0xe0] sm:$0xff] %v585
      %602 = vst [vmem:[%s450 + $0xf8] sm:$0xff] %v586
      %603 = vst [vmem:[%s450 + $0x110] sm:$0xff] %v587
      %604 = vst [vmem:[%s450 + $0x128] sm:$0xff] %v588
      %605 = vst [vmem:[%s450 + $0x140] sm:$0xff] %v589
      %606 = vst [vmem:[%s450 + $0x158] sm:$0xff] %v590
      %607 = vst [vmem:[%s450 + $0x170] sm:$0xff] %v591
      %v608 = vld [vmem:[%s471] sm:$0xff]
      %v609 = vld [vmem:[%s471 + $0x8] sm:$0xff]
      %v610 = vmul.f32 %v608, %v340
      %v611 = vmul.f32 %v609, %v340
      %v612 = vadd.f32 %v610, %v359
      %v613 = vadd.f32 %v611, %v359
      %v614 = vmax.f32 %v612, 0.0
      %v615 = vmax.f32 %v613, 0.0
      %v616 = vmul.f32 %v614, %v480
      %v617 = vmul.f32 %v615, %v480
      %618 = vst [vmem:[#allocation2 + $0x8] sm:$0xff] %v616
      %619 = vst [vmem:[#allocation2 + $0x20] sm:$0xff] %v617
      %v620 = vld [vmem:[%s496] sm:$0xff]
      %v621 = vld [vmem:[%s496 + $0x8] sm:$0xff]
      %v622 = vmul.f32 %v620, %v340
      %v623 = vmul.f32 %v621, %v340
      %v624 = vadd.f32 %v622, %v359
      %v625 = vadd.f32 %v623, %v359
      %v626 = vmax.f32 %v624, 0.0
      %v627 = vmax.f32 %v625, 0.0
      %v628 = vmul.f32 %v626, %v505
      %v629 = vmul.f32 %v627, %v505
      %630 = vst [vmem:[%s515 + $0x8] sm:$0xff] %v628
      %631 = vst [vmem:[%s515 + $0x20] sm:$0xff] %v629
      %v632 = vld [vmem:[%s322 + $0x1] sm:$0xff]
      %v633 = vld [vmem:[%s322 + $0x9] sm:$0x7f]
      %v634 = vld [vmem:[%s322 + $0x11] sm:$0xff]
      %v635 = vld [vmem:[%s322 + $0x19] sm:$0x7f]
      %v636 = vld [vmem:[%s322 + $0x21] sm:$0xff]
      %v637 = vld [vmem:[%s322 + $0x29] sm:$0x7f]
      %v638 = vld [vmem:[%s322 + $0x31] sm:$0xff]
      %v639 = vld [vmem:[%s322 + $0x39] sm:$0x7f]
      %v640 = vld [vmem:[%s322 + $0x41] sm:$0xff]
      %v641 = vld [vmem:[%s322 + $0x49] sm:$0x7f]
      %v642 = vld [vmem:[%s322 + $0x51] sm:$0xff]
      %v643 = vld [vmem:[%s322 + $0x59] sm:$0x7f]
      %v644 = vld [vmem:[%s322 + $0x61] sm:$0xff]
      %v645 = vld [vmem:[%s322 + $0x69] sm:$0x7f]
      %v646 = vld [vmem:[%s322 + $0x71] sm:$0xff]
      %v647 = vld [vmem:[%s322 + $0x79] sm:$0x7f]
      %v648 = vmul.f32 %v632, %v340
      %v649 = vmul.f32 %v633, %v340
      %v650 = vmul.f32 %v634, %v340
      %v651 = vmul.f32 %v635, %v340
      %v652 = vmul.f32 %v636, %v340
      %v653 = vmul.f32 %v637, %v340
      %v654 = vmul.f32 %v638, %v340
      %v655 = vmul.f32 %v639, %v340
      %v656 = vmul.f32 %v640, %v340
      %v657 = vmul.f32 %v641, %v340
      %v658 = vmul.f32 %v642, %v340
      %v659 = vmul.f32 %v643, %v340
      %v660 = vmul.f32 %v644, %v340
      %v661 = vmul.f32 %v645, %v340
      %v662 = vmul.f32 %v646, %v340
      %v663 = vmul.f32 %v647, %v340
      %v664 = vadd.f32 %v648, %v359
      %v665 = vadd.f32 %v649, %v359
      %v666 = vadd.f32 %v650, %v359
      %v667 = vadd.f32 %v651, %v359
      %v668 = vadd.f32 %v652, %v359
      %v669 = vadd.f32 %v653, %v359
      %v670 = vadd.f32 %v654, %v359
      %v671 = vadd.f32 %v655, %v359
      %v672 = vadd.f32 %v656, %v359
      %v673 = vadd.f32 %v657, %v359
      %v674 = vadd.f32 %v658, %v359
      %v675 = vadd.f32 %v659, %v359
      %v676 = vadd.f32 %v660, %v359
      %v677 = vadd.f32 %v661, %v359
      %v678 = vadd.f32 %v662, %v359
      %v679 = vadd.f32 %v663, %v359
      %v680 = vmax.f32 %v664, 0.0
      %v681 = vmax.f32 %v665, 0.0
      %v682 = vmax.f32 %v666, 0.0
      %v683 = vmax.f32 %v667, 0.0
      %v684 = vmax.f32 %v668, 0.0
      %v685 = vmax.f32 %v669, 0.0
      %v686 = vmax.f32 %v670, 0.0
      %v687 = vmax.f32 %v671, 0.0
      %v688 = vmax.f32 %v672, 0.0
      %v689 = vmax.f32 %v673, 0.0
      %v690 = vmax.f32 %v674, 0.0
      %v691 = vmax.f32 %v675, 0.0
      %v692 = vmax.f32 %v676, 0.0
      %v693 = vmax.f32 %v677, 0.0
      %v694 = vmax.f32 %v678, 0.0
      %v695 = vmax.f32 %v679, 0.0
      %696 = vst [vmem:[%s450 + $0x10] sm:$0xff] %v680
      %697 = vst [vmem:[%s450 + $0x28] sm:$0x7f] %v681
      %698 = vst [vmem:[%s450 + $0x40] sm:$0xff] %v682
      %699 = vst [vmem:[%s450 + $0x58] sm:$0x7f] %v683
      %700 = vst [vmem:[%s450 + $0x70] sm:$0xff] %v684
      %701 = vst [vmem:[%s450 + $0x88] sm:$0x7f] %v685
      %702 = vst [vmem:[%s450 + $0xa0] sm:$0xff] %v686
      %703 = vst [vmem:[%s450 + $0xb8] sm:$0x7f] %v687
      %704 = vst [vmem:[%s450 + $0xd0] sm:$0xff] %v688
      %705 = vst [vmem:[%s450 + $0xe8] sm:$0x7f] %v689
      %706 = vst [vmem:[%s450 + $0x100] sm:$0xff] %v690
      %707 = vst [vmem:[%s450 + $0x118] sm:$0x7f] %v691
      %708 = vst [vmem:[%s450 + $0x130] sm:$0xff] %v692
      %709 = vst [vmem:[%s450 + $0x148] sm:$0x7f] %v693
      %710 = vst [vmem:[%s450 + $0x160] sm:$0xff] %v694
      %711 = vst [vmem:[%s450 + $0x178] sm:$0x7f] %v695
      %v712 = vld [vmem:[%s471 + $0x1] sm:$0xff]
      %v713 = vld [vmem:[%s471 + $0x9] sm:$0x7f]
      %v714 = vmul.f32 %v712, %v340
      %v715 = vmul.f32 %v713, %v340
      %v716 = vadd.f32 %v714, %v359
      %v717 = vadd.f32 %v715, %v359
      %v718 = vmax.f32 %v716, 0.0
      %v719 = vmax.f32 %v717, 0.0
      %v720 = vmul.f32 %v718, %v480
      %v721 = vmul.f32 %v719, %v480
      %722 = vst [vmem:[#allocation2 + $0x10] sm:$0xff] %v720
      %723 = vst [vmem:[#allocation2 + $0x28] sm:$0x7f] %v721
      %v724 = vld [vmem:[%s496 + $0x1] sm:$0xff]
      %v725 = vld [vmem:[%s496 + $0x9] sm:$0x7f]
      %v726 = vmul.f32 %v724, %v340
      %v727 = vmul.f32 %v725, %v340
      %v728 = vadd.f32 %v726, %v359
      %v729 = vadd.f32 %v727, %v359
      %v730 = vmax.f32 %v728, 0.0
      %v731 = vmax.f32 %v729, 0.0
      %v732 = vmul.f32 %v730, %v505
      %v733 = vmul.f32 %v731, %v505
      %734 = vst [vmem:[%s515 + $0x10] sm:$0xff] %v732
      %735 = vst [vmem:[%s515 + $0x28] sm:$0x7f] %v733
      %736 = vst [vmem:[#allocation2 + $0x2f] sm:$0x1] 0.0
      %737 = vst [vmem:[#allocation2 + $0x5f] sm:$0x1] 0.0
      %738 = vst [vmem:[#allocation2 + $0x8f] sm:$0x1] 0.0
      %739 = vst [vmem:[#allocation2 + $0xbf] sm:$0x1] 0.0
      %740 = vst [vmem:[#allocation2 + $0xef] sm:$0x1] 0.0
      %741 = vst [vmem:[#allocation2 + $0x11f] sm:$0x1] 0.0
      %742 = vst [vmem:[#allocation2 + $0x14f] sm:$0x1] 0.0
      %743 = vst [vmem:[#allocation2 + $0x17f] sm:$0x1] 0.0
      %744 = vst [vmem:[#allocation2 + $0x1af] sm:$0x1] 0.0
      %745 = vst [vmem:[#allocation2 + $0x1df] sm:$0x1] 0.0
      %v746 = vld [vmem:[#allocation2] sm:$0xff]
      %v747 = vld [vmem:[#allocation2 + $0x8] sm:$0xff]
      %v748 = vld [vmem:[#allocation2 + $0x10] sm:$0xff]
      %v749 = vld [vmem:[#allocation2 + $0x18] sm:$0xff]
      %v750 = vld [vmem:[#allocation2 + $0x20] sm:$0xff]
      %v751 = vld [vmem:[#allocation2 + $0x28] sm:$0xff]
      %v752 = vld [vmem:[#allocation2 + $0x30] sm:$0xff]
      %v753 = vld [vmem:[#allocation2 + $0x38] sm:$0xff]
      %v754 = vld [vmem:[#allocation2 + $0x40] sm:$0xff]
      %v755 = vld [vmem:[#allocation2 + $0x48] sm:$0xff]
      %v756 = vld [vmem:[#allocation2 + $0x50] sm:$0xff]
      %v757 = vld [vmem:[#allocation2 + $0x58] sm:$0xff]
      %v758 = vld [vmem:[#allocation2 + $0x60] sm:$0xff]
      %v759 = vld [vmem:[#allocation2 + $0x68] sm:$0xff]
      %v760 = vld [vmem:[#allocation2 + $0x70] sm:$0xff]
      %v761 = vld [vmem:[#allocation2 + $0x78] sm:$0xff]
      %v762 = vld [vmem:[#allocation2 + $0x80] sm:$0xff]
      %v763 = vld [vmem:[#allocation2 + $0x88] sm:$0xff]
      %v764 = vld [vmem:[#allocation2 + $0x90] sm:$0xff]
      %v765 = vld [vmem:[#allocation2 + $0x98] sm:$0xff]
      %v766 = vld [vmem:[#allocation2 + $0xa0] sm:$0xff]
      %v767 = vld [vmem:[#allocation2 + $0xa8] sm:$0xff]
      %v768 = vld [vmem:[#allocation2 + $0xb0] sm:$0xff]
      %v769 = vld [vmem:[#allocation2 + $0xb8] sm:$0xff]
      %v770 = vld [vmem:[#allocation2 + $0xc0] sm:$0xff]
      %v771 = vld [vmem:[#allocation2 + $0xc8] sm:$0xff]
      %v772 = vld [vmem:[#allocation2 + $0xd0] sm:$0xff]
      %v773 = vld [vmem:[#allocation2 + $0xd8] sm:$0xff]
      %v774 = vld [vmem:[#allocation2 + $0xe0] sm:$0xff]
      %v775 = vld [vmem:[#allocation2 + $0xe8] sm:$0xff]
      %v776 = vld [vmem:[#allocation2 + $0xf0] sm:$0xff]
      %v777 = vld [vmem:[#allocation2 + $0xf8] sm:$0xff]
      %v778 = vld [vmem:[#allocation2 + $0x100] sm:$0xff]
      %v779 = vld [vmem:[#allocation2 + $0x108] sm:$0xff]
      %v780 = vld [vmem:[#allocation2 + $0x110] sm:$0xff]
      %v781 = vld [vmem:[#allocation2 + $0x118] sm:$0xff]
      %v782 = vld [vmem:[#allocation2 + $0x120] sm:$0xff]
      %v783 = vld [vmem:[#allocation2 + $0x128] sm:$0xff]
      %v784 = vld [vmem:[#allocation2 + $0x130] sm:$0xff]
      %v785 = vld [vmem:[#allocation2 + $0x138] sm:$0xff]
      %v786 = vld [vmem:[#allocation2 + $0x140] sm:$0xff]
      %v787 = vld [vmem:[#allocation2 + $0x148] sm:$0xff]
      %v788 = vld [vmem:[#allocation2 + $0x150] sm:$0xff]
      %v789 = vld [vmem:[#allocation2 + $0x158] sm:$0xff]
      %v790 = vld [vmem:[#allocation2 + $0x160] sm:$0xff]
      %v791 = vld [vmem:[#allocation2 + $0x168] sm:$0xff]
      %v792 = vld [vmem:[#allocation2 + $0x170] sm:$0xff]
      %v793 = vld [vmem:[#allocation2 + $0x178] sm:$0xff]
      %v794 = vld [vmem:[%s3] sm:$0xff]
      %v795 = vld [vmem:[%s3 + $0x8] sm:$0xff]
      %v796 = vld [vmem:[%s3 + $0x10] sm:$0xff]
      %v797 = vld [vmem:[%s3 + $0x18] sm:$0xff]
      %v798 = vld [vmem:[%s3 + $0x20] sm:$0xff]
      %v799 = vld [vmem:[%s3 + $0x28] sm:$0xff]
      %v800 = vld [vmem:[%s3 + $0x30] sm:$0xff]
      %v801 = vld [vmem:[%s3 + $0x38] sm:$0xff]
      %v802 = vld [vmem:[%s3 + $0x40] sm:$0xff]
      %v803 = vld [vmem:[%s3 + $0x48] sm:$0xff]
      %v804 = vld [vmem:[%s3 + $0x50] sm:$0xff]
      %v805 = vld [vmem:[%s3 + $0x58] sm:$0xff]
      %v806 = vld [vmem:[%s3 + $0x60] sm:$0xff]
      %v807 = vld [vmem:[%s3 + $0x68] sm:$0xff]
      %v808 = vld [vmem:[%s3 + $0x70] sm:$0xff]
      %v809 = vld [vmem:[%s3 + $0x78] sm:$0xff]
      %v810 = vld [vmem:[%s3 + $0x80] sm:$0xff]
      %v811 = vld [vmem:[%s3 + $0x88] sm:$0xff]
      %v812 = vld [vmem:[%s3 + $0x90] sm:$0xff]
      %v813 = vld [vmem:[%s3 + $0x98] sm:$0xff]
      %v814 = vld [vmem:[%s3 + $0xa0] sm:$0xff]
      %v815 = vld [vmem:[%s3 + $0xa8] sm:$0xff]
      %v816 = vld [vmem:[%s3 + $0xb0] sm:$0xff]
      %v817 = vld [vmem:[%s3 + $0xb8] sm:$0xff]
      %v818 = vld [vmem:[%s3 + $0xc0] sm:$0xff]
      %v819 = vld [vmem:[%s3 + $0xc8] sm:$0xff]
      %v820 = vld [vmem:[%s3 + $0xd0] sm:$0xff]
      %v821 = vld [vmem:[%s3 + $0xd8] sm:$0xff]
      %v822 = vld [vmem:[%s3 + $0xe0] sm:$0xff]
      %v823 = vld [vmem:[%s3 + $0xe8] sm:$0xff]
      %v824 = vld [vmem:[%s3 + $0xf0] sm:$0xff]
      %v825 = vld [vmem:[%s3 + $0xf8] sm:$0xff]
      %v826 = vld [vmem:[%s3 + $0x100] sm:$0xff]
      %v827 = vld [vmem:[%s3 + $0x108] sm:$0xff]
      %v828 = vld [vmem:[%s3 + $0x110] sm:$0xff]
      %v829 = vld [vmem:[%s3 + $0x118] sm:$0xff]
      %v830 = vld [vmem:[%s3 + $0x120] sm:$0xff]
      %v831 = vld [vmem:[%s3 + $0x128] sm:$0xff]
      %v832 = vld [vmem:[%s3 + $0x130] sm:$0xff]
      %v833 = vld [vmem:[%s3 + $0x138] sm:$0xff]
      %v834 = vld [vmem:[%s3 + $0x140] sm:$0xff]
      %v835 = vld [vmem:[%s3 + $0x148] sm:$0xff]
      %v836 = vld [vmem:[%s3 + $0x150] sm:$0xff]
      %v837 = vld [vmem:[%s3 + $0x158] sm:$0xff]
      %v838 = vld [vmem:[%s3 + $0x160] sm:$0xff]
      %v839 = vld [vmem:[%s3 + $0x168] sm:$0xff]
      %v840 = vld [vmem:[%s3 + $0x170] sm:$0xff]
      %v841 = vld [vmem:[%s3 + $0x178] sm:$0xff]
      %v842 = vld [vmem:[%s450] sm:$0xff]
      %v843 = vld [vmem:[%s450 + $0x8] sm:$0xff]
      %v844 = vld [vmem:[%s450 + $0x10] sm:$0xff]
      %v845 = vld [vmem:[%s450 + $0x18] sm:$0xff]
      %v846 = vld [vmem:[%s450 + $0x20] sm:$0xff]
      %v847 = vld [vmem:[%s450 + $0x28] sm:$0xff]
      %v848 = vld [vmem:[%s450 + $0x30] sm:$0xff]
      %v849 = vld [vmem:[%s450 + $0x38] sm:$0xff]
      %v850 = vld [vmem:[%s450 + $0x40] sm:$0xff]
      %v851 = vld [vmem:[%s450 + $0x48] sm:$0xff]
      %v852 = vld [vmem:[%s450 + $0x50] sm:$0xff]
      %v853 = vld [vmem:[%s450 + $0x58] sm:$0xff]
      %v854 = vld [vmem:[%s450 + $0x60] sm:$0xff]
      %v855 = vld [vmem:[%s450 + $0x68] sm:$0xff]
      %v856 = vld [vmem:[%s450 + $0x70] sm:$0xff]
      %v857 = vld [vmem:[%s450 + $0x78] sm:$0xff]
      %v858 = vld [vmem:[%s450 + $0x80] sm:$0xff]
      %v859 = vld [vmem:[%s450 + $0x88] sm:$0xff]
      %v860 = vld [vmem:[%s450 + $0x90] sm:$0xff]
      %v861 = vld [vmem:[%s450 + $0x98] sm:$0xff]
      %v862 = vld [vmem:[%s450 + $0xa0] sm:$0xff]
      %v863 = vld [vmem:[%s450 + $0xa8] sm:$0xff]
      %v864 = vld [vmem:[%s450 + $0xb0] sm:$0xff]
      %v865 = vld [vmem:[%s450 + $0xb8] sm:$0xff]
      %v866 = vld [vmem:[%s450 + $0xc0] sm:$0xff]
      %v867 = vld [vmem:[%s450 + $0xc8] sm:$0xff]
      %v868 = vld [vmem:[%s450 + $0xd0] sm:$0xff]
      %v869 = vld [vmem:[%s450 + $0xd8] sm:$0xff]
      %v870 = vld [vmem:[%s450 + $0xe0] sm:$0xff]
      %v871 = vld [vmem:[%s450 + $0xe8] sm:$0xff]
      %v872 = vld [vmem:[%s450 + $0xf0] sm:$0xff]
      %v873 = vld [vmem:[%s450 + $0xf8] sm:$0xff]
      %v874 = vld [vmem:[%s450 + $0x100] sm:$0xff]
      %v875 = vld [vmem:[%s450 + $0x108] sm:$0xff]
      %v876 = vld [vmem:[%s450 + $0x110] sm:$0xff]
      %v877 = vld [vmem:[%s450 + $0x118] sm:$0xff]
      %v878 = vld [vmem:[%s450 + $0x120] sm:$0xff]
      %v879 = vld [vmem:[%s450 + $0x128] sm:$0xff]
      %v880 = vld [vmem:[%s450 + $0x130] sm:$0xff]
      %v881 = vld [vmem:[%s450 + $0x138] sm:$0xff]
      %v882 = vld [vmem:[%s450 + $0x140] sm:$0xff]
      %v883 = vld [vmem:[%s450 + $0x148] sm:$0xff]
      %v884 = vld [vmem:[%s450 + $0x150] sm:$0xff]
      %v885 = vld [vmem:[%s450 + $0x158] sm:$0xff]
      %v886 = vld [vmem:[%s450 + $0x160] sm:$0xff]
      %v887 = vld [vmem:[%s450 + $0x168] sm:$0xff]
      %v888 = vld [vmem:[%s450 + $0x170] sm:$0xff]
      %v889 = vld [vmem:[%s450 + $0x178] sm:$0xff]
      %s890 = scalar_lea.vmem %s3, 384
      %v891 = vld [vmem:[%s890] sm:$0xff]
      %v892 = vld [vmem:[%s890 + $0x8] sm:$0xff]
      %v893 = vld [vmem:[%s890 + $0x10] sm:$0xff]
      %v894 = vld [vmem:[%s890 + $0x18] sm:$0xff]
      %v895 = vld [vmem:[%s890 + $0x20] sm:$0xff]
      %v896 = vld [vmem:[%s890 + $0x28] sm:$0xff]
      %v897 = vld [vmem:[%s890 + $0x30] sm:$0xff]
      %v898 = vld [vmem:[%s890 + $0x38] sm:$0xff]
      %v899 = vld [vmem:[%s890 + $0x40] sm:$0xff]
      %v900 = vld [vmem:[%s890 + $0x48] sm:$0xff]
      %v901 = vld [vmem:[%s890 + $0x50] sm:$0xff]
      %v902 = vld [vmem:[%s890 + $0x58] sm:$0xff]
      %v903 = vld [vmem:[%s890 + $0x60] sm:$0xff]
      %v904 = vld [vmem:[%s890 + $0x68] sm:$0xff]
      %v905 = vld [vmem:[%s890 + $0x70] sm:$0xff]
      %v906 = vld [vmem:[%s890 + $0x78] sm:$0xff]
      %v907 = vld [vmem:[%s890 + $0x80] sm:$0xff]
      %v908 = vld [vmem:[%s890 + $0x88] sm:$0xff]
      %v909 = vld [vmem:[%s890 + $0x90] sm:$0xff]
      %v910 = vld [vmem:[%s890 + $0x98] sm:$0xff]
      %v911 = vld [vmem:[%s890 + $0xa0] sm:$0xff]
      %v912 = vld [vmem:[%s890 + $0xa8] sm:$0xff]
      %v913 = vld [vmem:[%s890 + $0xb0] sm:$0xff]
      %v914 = vld [vmem:[%s890 + $0xb8] sm:$0xff]
      %v915 = vld [vmem:[%s890 + $0xc0] sm:$0xff]
      %v916 = vld [vmem:[%s890 + $0xc8] sm:$0xff]
      %v917 = vld [vmem:[%s890 + $0xd0] sm:$0xff]
      %v918 = vld [vmem:[%s890 + $0xd8] sm:$0xff]
      %v919 = vld [vmem:[%s890 + $0xe0] sm:$0xff]
      %v920 = vld [vmem:[%s890 + $0xe8] sm:$0xff]
      %v921 = vld [vmem:[%s890 + $0xf0] sm:$0xff]
      %v922 = vld [vmem:[%s890 + $0xf8] sm:$0xff]
      %v923 = vld [vmem:[%s890 + $0x100] sm:$0xff]
      %v924 = vld [vmem:[%s890 + $0x108] sm:$0xff]
      %v925 = vld [vmem:[%s890 + $0x110] sm:$0xff]
      %v926 = vld [vmem:[%s890 + $0x118] sm:$0xff]
      %v927 = vld [vmem:[%s890 + $0x120] sm:$0xff]
      %v928 = vld [vmem:[%s890 + $0x128] sm:$0xff]
      %v929 = vld [vmem:[%s890 + $0x130] sm:$0xff]
      %v930 = vld [vmem:[%s890 + $0x138] sm:$0xff]
      %v931 = vld [vmem:[%s890 + $0x140] sm:$0xff]
      %v932 = vld [vmem:[%s890 + $0x148] sm:$0xff]
      %v933 = vld [vmem:[%s890 + $0x150] sm:$0xff]
      %v934 = vld [vmem:[%s890 + $0x158] sm:$0xff]
      %v935 = vld [vmem:[%s890 + $0x160] sm:$0xff]
      %v936 = vld [vmem:[%s890 + $0x168] sm:$0xff]
      %v937 = vld [vmem:[%s890 + $0x170] sm:$0xff]
      %v938 = vld [vmem:[%s890 + $0x178] sm:$0xff]
      %939 = vmatpush.msra.mxu0 %v906
      %940 = vmatpush.msra.mxu0 %v905
      %941 = vmatpush.msra.mxu0 %v904
      %942 = vmatpush.msra.mxu0 %v903
      %943 = vmatpush.msra.mxu0 %v902
      %944 = vmatpush.msra.mxu0 %v901
      %945 = vmatpush.msra.mxu0 %v900
      %946 = vmatpush.msra.mxu0 %v899
      %947 = vmatpush.msra.mxu0 %v898
      %948 = vmatpush.msra.mxu0 %v897
      %949 = vmatpush.msra.mxu0 %v896
      %950 = vmatpush.msra.mxu0 %v895
      %951 = vmatpush.msra.mxu0 %v894
      %952 = vmatpush.msra.mxu0 %v893
      %953 = vmatpush.msra.mxu0 %v892
      %954 = vmatpush.msra.mxu0 %v891
      %955 = vmatmul.f32.gmra.mxu0 %v842
      %v956 = vpop.f32.mrf.mxu0
      %v957 = vadd.f32 0.0, %v956
      %958 = vmatmul.f32.gmra.mxu0 %v845
      %v959 = vpop.f32.mrf.mxu0
      %v960 = vadd.f32 0.0, %v959
      %961 = vmatmul.f32.gmra.mxu0 %v848
      %v962 = vpop.f32.mrf.mxu0
      %v963 = vadd.f32 0.0, %v962
      %964 = vmatmul.f32.gmra.mxu0 %v851
      %v965 = vpop.f32.mrf.mxu0
      %v966 = vadd.f32 0.0, %v965
      %967 = vmatmul.f32.gmra.mxu0 %v854
      %v968 = vpop.f32.mrf.mxu0
      %v969 = vadd.f32 0.0, %v968
      %970 = vmatmul.f32.gmra.mxu0 %v857
      %v971 = vpop.f32.mrf.mxu0
      %v972 = vadd.f32 0.0, %v971
      %973 = vmatmul.f32.gmra.mxu0 %v860
      %v974 = vpop.f32.mrf.mxu0
      %v975 = vadd.f32 0.0, %v974
      %976 = vmatmul.f32.gmra.mxu0 %v863
      %v977 = vpop.f32.mrf.mxu0
      %v978 = vadd.f32 0.0, %v977
      %979 = vmatmul.f32.gmra.mxu0 %v866
      %v980 = vpop.f32.mrf.mxu0
      %v981 = vadd.f32 0.0, %v980
      %982 = vmatmul.f32.gmra.mxu0 %v869
      %v983 = vpop.f32.mrf.mxu0
      %v984 = vadd.f32 0.0, %v983
      %985 = vmatmul.f32.gmra.mxu0 %v872
      %v986 = vpop.f32.mrf.mxu0
      %v987 = vadd.f32 0.0, %v986
      %988 = vmatmul.f32.gmra.mxu0 %v875
      %v989 = vpop.f32.mrf.mxu0
      %v990 = vadd.f32 0.0, %v989
      %991 = vmatmul.f32.gmra.mxu0 %v878
      %v992 = vpop.f32.mrf.mxu0
      %v993 = vadd.f32 0.0, %v992
      %994 = vmatmul.f32.gmra.mxu0 %v881
      %v995 = vpop.f32.mrf.mxu0
      %v996 = vadd.f32 0.0, %v995
      %997 = vmatmul.f32.gmra.mxu0 %v884
      %v998 = vpop.f32.mrf.mxu0
      %v999 = vadd.f32 0.0, %v998
      %1000 = vmatmul.f32.gmra.mxu0 %v887
      %v1001 = vpop.f32.mrf.mxu0
      %v1002 = vadd.f32 0.0, %v1001
      %1003 = vdwg.mxu0
      %1004 = vmatpush.msra.mxu0 %v922
      %1005 = vmatpush.msra.mxu0 %v921
      %1006 = vmatpush.msra.mxu0 %v920
      %1007 = vmatpush.msra.mxu0 %v919
      %1008 = vmatpush.msra.mxu0 %v918
      %1009 = vmatpush.msra.mxu0 %v917
      %1010 = vmatpush.msra.mxu0 %v916
      %1011 = vmatpush.msra.mxu0 %v915
      %1012 = vmatpush.msra.mxu0 %v914
      %1013 = vmatpush.msra.mxu0 %v913
      %1014 = vmatpush.msra.mxu0 %v912
      %1015 = vmatpush.msra.mxu0 %v911
      %1016 = vmatpush.msra.mxu0 %v910
      %1017 = vmatpush.msra.mxu0 %v909
      %1018 = vmatpush.msra.mxu0 %v908
      %1019 = vmatpush.msra.mxu0 %v907
      %1020 = vmatmul.f32.gmra.mxu0 %v843
      %v1021 = vpop.f32.mrf.mxu0
      %v1022 = vadd.f32 %v957, %v1021
      %1023 = vmatmul.f32.gmra.mxu0 %v846
      %v1024 = vpop.f32.mrf.mxu0
      %v1025 = vadd.f32 %v960, %v1024
      %1026 = vmatmul.f32.gmra.mxu0 %v849
      %v1027 = vpop.f32.mrf.mxu0
      %v1028 = vadd.f32 %v963, %v1027
      %1029 = vmatmul.f32.gmra.mxu0 %v852
      %v1030 = vpop.f32.mrf.mxu0
      %v1031 = vadd.f32 %v966, %v1030
      %1032 = vmatmul.f32.gmra.mxu0 %v855
      %v1033 = vpop.f32.mrf.mxu0
      %v1034 = vadd.f32 %v969, %v1033
      %1035 = vmatmul.f32.gmra.mxu0 %v858
      %v1036 = vpop.f32.mrf.mxu0
      %v1037 = vadd.f32 %v972, %v1036
      %1038 = vmatmul.f32.gmra.mxu0 %v861
      %v1039 = vpop.f32.mrf.mxu0
      %v1040 = vadd.f32 %v975, %v1039
      %1041 = vmatmul.f32.gmra.mxu0 %v864
      %v1042 = vpop.f32.mrf.mxu0
      %v1043 = vadd.f32 %v978, %v1042
      %1044 = vmatmul.f32.gmra.mxu0 %v867
      %v1045 = vpop.f32.mrf.mxu0
      %v1046 = vadd.f32 %v981, %v1045
      %1047 = vmatmul.f32.gmra.mxu0 %v870
      %v1048 = vpop.f32.mrf.mxu0
      %v1049 = vadd.f32 %v984, %v1048
      %1050 = vmatmul.f32.gmra.mxu0 %v873
      %v1051 = vpop.f32.mrf.mxu0
      %v1052 = vadd.f32 %v987, %v1051
      %1053 = vmatmul.f32.gmra.mxu0 %v876
      %v1054 = vpop.f32.mrf.mxu0
      %v1055 = vadd.f32 %v990, %v1054
      %1056 = vmatmul.f32.gmra.mxu0 %v879
      %v1057 = vpop.f32.mrf.mxu0
      %v1058 = vadd.f32 %v993, %v1057
      %1059 = vmatmul.f32.gmra.mxu0 %v882
      %v1060 = vpop.f32.mrf.mxu0
      %v1061 = vadd.f32 %v996, %v1060
      %1062 = vmatmul.f32.gmra.mxu0 %v885
      %v1063 = vpop.f32.mrf.mxu0
      %v1064 = vadd.f32 %v999, %v1063
      %1065 = vmatmul.f32.gmra.mxu0 %v888
      %v1066 = vpop.f32.mrf.mxu0
      %v1067 = vadd.f32 %v1002, %v1066
      %1068 = vdwg.mxu0
      %1069 = vmatpush.msra.mxu0 %v938
      %1070 = vmatpush.msra.mxu0 %v937
      %1071 = vmatpush.msra.mxu0 %v936
      %1072 = vmatpush.msra.mxu0 %v935
      %1073 = vmatpush.msra.mxu0 %v934
      %1074 = vmatpush.msra.mxu0 %v933
      %1075 = vmatpush.msra.mxu0 %v932
      %1076 = vmatpush.msra.mxu0 %v931
      %1077 = vmatpush.msra.mxu0 %v930
      %1078 = vmatpush.msra.mxu0 %v929
      %1079 = vmatpush.msra.mxu0 %v928
      %1080 = vmatpush.msra.mxu0 %v927
      %1081 = vmatpush.msra.mxu0 %v926
      %1082 = vmatpush.msra.mxu0 %v925
      %1083 = vmatpush.msra.mxu0 %v924
      %1084 = vmatpush.msra.mxu0 %v923
      %1085 = vmatmul.f32.gmra.mxu0 %v844
      %v1086 = vpop.f32.mrf.mxu0
      %v1087 = vadd.f32 %v1022, %v1086
      %1088 = vmatmul.f32.gmra.mxu0 %v847
      %v1089 = vpop.f32.mrf.mxu0
      %v1090 = vadd.f32 %v1025, %v1089
      %1091 = vmatmul.f32.gmra.mxu0 %v850
      %v1092 = vpop.f32.mrf.mxu0
      %v1093 = vadd.f32 %v1028, %v1092
      %1094 = vmatmul.f32.gmra.mxu0 %v853
      %v1095 = vpop.f32.mrf.mxu0
      %v1096 = vadd.f32 %v1031, %v1095
      %1097 = vmatmul.f32.gmra.mxu0 %v856
      %v1098 = vpop.f32.mrf.mxu0
      %v1099 = vadd.f32 %v1034, %v1098
      %1100 = vmatmul.f32.gmra.mxu0 %v859
      %v1101 = vpop.f32.mrf.mxu0
      %v1102 = vadd.f32 %v1037, %v1101
      %1103 = vmatmul.f32.gmra.mxu0 %v862
      %v1104 = vpop.f32.mrf.mxu0
      %v1105 = vadd.f32 %v1040, %v1104
      %1106 = vmatmul.f32.gmra.mxu0 %v865
      %v1107 = vpop.f32.mrf.mxu0
      %v1108 = vadd.f32 %v1043, %v1107
      %1109 = vmatmul.f32.gmra.mxu0 %v868
      %v1110 = vpop.f32.mrf.mxu0
      %v1111 = vadd.f32 %v1046, %v1110
      %1112 = vmatmul.f32.gmra.mxu0 %v871
      %v1113 = vpop.f32.mrf.mxu0
      %v1114 = vadd.f32 %v1049, %v1113
      %1115 = vmatmul.f32.gmra.mxu0 %v874
      %v1116 = vpop.f32.mrf.mxu0
      %v1117 = vadd.f32 %v1052, %v1116
      %1118 = vmatmul.f32.gmra.mxu0 %v877
      %v1119 = vpop.f32.mrf.mxu0
      %v1120 = vadd.f32 %v1055, %v1119
      %1121 = vmatmul.f32.gmra.mxu0 %v880
      %v1122 = vpop.f32.mrf.mxu0
      %v1123 = vadd.f32 %v1058, %v1122
      %1124 = vmatmul.f32.gmra.mxu0 %v883
      %v1125 = vpop.f32.mrf.mxu0
      %v1126 = vadd.f32 %v1061, %v1125
      %1127 = vmatmul.f32.gmra.mxu0 %v886
      %v1128 = vpop.f32.mrf.mxu0
      %v1129 = vadd.f32 %v1064, %v1128
      %1130 = vmatmul.f32.gmra.mxu0 %v889
      %v1131 = vpop.f32.mrf.mxu0
      %v1132 = vadd.f32 %v1067, %v1131
      %1133 = vdwg.mxu0
      %1134 = vmatpush.msra.mxu0 %v809
      %1135 = vmatpush.msra.mxu0 %v808
      %1136 = vmatpush.msra.mxu0 %v807
      %1137 = vmatpush.msra.mxu0 %v806
      %1138 = vmatpush.msra.mxu0 %v805
      %1139 = vmatpush.msra.mxu0 %v804
      %1140 = vmatpush.msra.mxu0 %v803
      %1141 = vmatpush.msra.mxu0 %v802
      %1142 = vmatpush.msra.mxu0 %v801
      %1143 = vmatpush.msra.mxu0 %v800
      %1144 = vmatpush.msra.mxu0 %v799
      %1145 = vmatpush.msra.mxu0 %v798
      %1146 = vmatpush.msra.mxu0 %v797
      %1147 = vmatpush.msra.mxu0 %v796
      %1148 = vmatpush.msra.mxu0 %v795
      %1149 = vmatpush.msra.mxu0 %v794
      %1150 = vmatmul.f32.gmra.mxu0 %v746
      %v1151 = vpop.f32.mrf.mxu0
      %v1152 = vadd.f32 %v1087, %v1151
      %1153 = vmatmul.f32.gmra.mxu0 %v749
      %v1154 = vpop.f32.mrf.mxu0
      %v1155 = vadd.f32 %v1090, %v1154
      %1156 = vmatmul.f32.gmra.mxu0 %v752
      %v1157 = vpop.f32.mrf.mxu0
      %v1158 = vadd.f32 %v1093, %v1157
      %1159 = vmatmul.f32.gmra.mxu0 %v755
      %v1160 = vpop.f32.mrf.mxu0
      %v1161 = vadd.f32 %v1096, %v1160
      %1162 = vmatmul.f32.gmra.mxu0 %v758
      %v1163 = vpop.f32.mrf.mxu0
      %v1164 = vadd.f32 %v1099, %v1163
      %1165 = vmatmul.f32.gmra.mxu0 %v761
      %v1166 = vpop.f32.mrf.mxu0
      %v1167 = vadd.f32 %v1102, %v1166
      %1168 = vmatmul.f32.gmra.mxu0 %v764
      %v1169 = vpop.f32.mrf.mxu0
      %v1170 = vadd.f32 %v1105, %v1169
      %1171 = vmatmul.f32.gmra.mxu0 %v767
      %v1172 = vpop.f32.mrf.mxu0
      %v1173 = vadd.f32 %v1108, %v1172
      %1174 = vmatmul.f32.gmra.mxu0 %v770
      %v1175 = vpop.f32.mrf.mxu0
      %v1176 = vadd.f32 %v1111, %v1175
      %1177 = vmatmul.f32.gmra.mxu0 %v773
      %v1178 = vpop.f32.mrf.mxu0
      %v1179 = vadd.f32 %v1114, %v1178
      %1180 = vmatmul.f32.gmra.mxu0 %v776
      %v1181 = vpop.f32.mrf.mxu0
      %v1182 = vadd.f32 %v1117, %v1181
      %1183 = vmatmul.f32.gmra.mxu0 %v779
      %v1184 = vpop.f32.mrf.mxu0
      %v1185 = vadd.f32 %v1120, %v1184
      %1186 = vmatmul.f32.gmra.mxu0 %v782
      %v1187 = vpop.f32.mrf.mxu0
      %v1188 = vadd.f32 %v1123, %v1187
      %1189 = vmatmul.f32.gmra.mxu0 %v785
      %v1190 = vpop.f32.mrf.mxu0
      %v1191 = vadd.f32 %v1126, %v1190
      %1192 = vmatmul.f32.gmra.mxu0 %v788
      %v1193 = vpop.f32.mrf.mxu0
      %v1194 = vadd.f32 %v1129, %v1193
      %1195 = vmatmul.f32.gmra.mxu0 %v791
      %v1196 = vpop.f32.mrf.mxu0
      %v1197 = vadd.f32 %v1132, %v1196
      %1198 = vdwg.mxu0
      %1199 = vmatpush.msra.mxu0 %v825
      %1200 = vmatpush.msra.mxu0 %v824
      %1201 = vmatpush.msra.mxu0 %v823
      %1202 = vmatpush.msra.mxu0 %v822
      %1203 = vmatpush.msra.mxu0 %v821
      %1204 = vmatpush.msra.mxu0 %v820
      %1205 = vmatpush.msra.mxu0 %v819
      %1206 = vmatpush.msra.mxu0 %v818
      %1207 = vmatpush.msra.mxu0 %v817
      %1208 = vmatpush.msra.mxu0 %v816
      %1209 = vmatpush.msra.mxu0 %v815
      %1210 = vmatpush.msra.mxu0 %v814
      %1211 = vmatpush.msra.mxu0 %v813
      %1212 = vmatpush.msra.mxu0 %v812
      %1213 = vmatpush.msra.mxu0 %v811
      %1214 = vmatpush.msra.mxu0 %v810
      %1215 = vmatmul.f32.gmra.mxu0 %v747
      %v1216 = vpop.f32.mrf.mxu0
      %v1217 = vadd.f32 %v1152, %v1216
      %1218 = vmatmul.f32.gmra.mxu0 %v750
      %v1219 = vpop.f32.mrf.mxu0
      %v1220 = vadd.f32 %v1155, %v1219
      %1221 = vmatmul.f32.gmra.mxu0 %v753
      %v1222 = vpop.f32.mrf.mxu0
      %v1223 = vadd.f32 %v1158, %v1222
      %1224 = vmatmul.f32.gmra.mxu0 %v756
      %v1225 = vpop.f32.mrf.mxu0
      %v1226 = vadd.f32 %v1161, %v1225
      %1227 = vmatmul.f32.gmra.mxu0 %v759
      %v1228 = vpop.f32.mrf.mxu0
      %v1229 = vadd.f32 %v1164, %v1228
      %1230 = vmatmul.f32.gmra.mxu0 %v762
      %v1231 = vpop.f32.mrf.mxu0
      %v1232 = vadd.f32 %v1167, %v1231
      %1233 = vmatmul.f32.gmra.mxu0 %v765
      %v1234 = vpop.f32.mrf.mxu0
      %v1235 = vadd.f32 %v1170, %v1234
      %1236 = vmatmul.f32.gmra.mxu0 %v768
      %v1237 = vpop.f32.mrf.mxu0
      %v1238 = vadd.f32 %v1173, %v1237
      %1239 = vmatmul.f32.gmra.mxu0 %v771
      %v1240 = vpop.f32.mrf.mxu0
      %v1241 = vadd.f32 %v1176, %v1240
      %1242 = vmatmul.f32.gmra.mxu0 %v774
      %v1243 = vpop.f32.mrf.mxu0
      %v1244 = vadd.f32 %v1179, %v1243
      %1245 = vmatmul.f32.gmra.mxu0 %v777
      %v1246 = vpop.f32.mrf.mxu0
      %v1247 = vadd.f32 %v1182, %v1246
      %1248 = vmatmul.f32.gmra.mxu0 %v780
      %v1249 = vpop.f32.mrf.mxu0
      %v1250 = vadd.f32 %v1185, %v1249
      %1251 = vmatmul.f32.gmra.mxu0 %v783
      %v1252 = vpop.f32.mrf.mxu0
      %v1253 = vadd.f32 %v1188, %v1252
      %1254 = vmatmul.f32.gmra.mxu0 %v786
      %v1255 = vpop.f32.mrf.mxu0
      %v1256 = vadd.f32 %v1191, %v1255
      %1257 = vmatmul.f32.gmra.mxu0 %v789
      %v1258 = vpop.f32.mrf.mxu0
      %v1259 = vadd.f32 %v1194, %v1258
      %1260 = vmatmul.f32.gmra.mxu0 %v792
      %v1261 = vpop.f32.mrf.mxu0
      %v1262 = vadd.f32 %v1197, %v1261
      %1263 = vdwg.mxu0
      %1264 = vmatpush.msra.mxu0 %v841
      %1265 = vmatpush.msra.mxu0 %v840
      %1266 = vmatpush.msra.mxu0 %v839
      %1267 = vmatpush.msra.mxu0 %v838
      %1268 = vmatpush.msra.mxu0 %v837
      %1269 = vmatpush.msra.mxu0 %v836
      %1270 = vmatpush.msra.mxu0 %v835
      %1271 = vmatpush.msra.mxu0 %v834
      %1272 = vmatpush.msra.mxu0 %v833
      %1273 = vmatpush.msra.mxu0 %v832
      %1274 = vmatpush.msra.mxu0 %v831
      %1275 = vmatpush.msra.mxu0 %v830
      %1276 = vmatpush.msra.mxu0 %v829
      %1277 = vmatpush.msra.mxu0 %v828
      %1278 = vmatpush.msra.mxu0 %v827
      %1279 = vmatpush.msra.mxu0 %v826
      %1280 = vmatmul.f32.gmra.mxu0 %v748
      %v1281 = vpop.f32.mrf.mxu0
      %v1282 = vadd.f32 %v1217, %v1281
      %1283 = vmatmul.f32.gmra.mxu0 %v751
      %v1284 = vpop.f32.mrf.mxu0
      %v1285 = vadd.f32 %v1220, %v1284
      %1286 = vmatmul.f32.gmra.mxu0 %v754
      %v1287 = vpop.f32.mrf.mxu0
      %v1288 = vadd.f32 %v1223, %v1287
      %1289 = vmatmul.f32.gmra.mxu0 %v757
      %v1290 = vpop.f32.mrf.mxu0
      %v1291 = vadd.f32 %v1226, %v1290
      %1292 = vmatmul.f32.gmra.mxu0 %v760
      %v1293 = vpop.f32.mrf.mxu0
      %v1294 = vadd.f32 %v1229, %v1293
      %1295 = vmatmul.f32.gmra.mxu0 %v763
      %v1296 = vpop.f32.mrf.mxu0
      %v1297 = vadd.f32 %v1232, %v1296
      %1298 = vmatmul.f32.gmra.mxu0 %v766
      %v1299 = vpop.f32.mrf.mxu0
      %v1300 = vadd.f32 %v1235, %v1299
      %1301 = vmatmul.f32.gmra.mxu0 %v769
      %v1302 = vpop.f32.mrf.mxu0
      %v1303 = vadd.f32 %v1238, %v1302
      %1304 = vmatmul.f32.gmra.mxu0 %v772
      %v1305 = vpop.f32.mrf.mxu0
      %v1306 = vadd.f32 %v1241, %v1305
      %1307 = vmatmul.f32.gmra.mxu0 %v775
      %v1308 = vpop.f32.mrf.mxu0
      %v1309 = vadd.f32 %v1244, %v1308
      %1310 = vmatmul.f32.gmra.mxu0 %v778
      %v1311 = vpop.f32.mrf.mxu0
      %v1312 = vadd.f32 %v1247, %v1311
      %1313 = vmatmul.f32.gmra.mxu0 %v781
      %v1314 = vpop.f32.mrf.mxu0
      %v1315 = vadd.f32 %v1250, %v1314
      %1316 = vmatmul.f32.gmra.mxu0 %v784
      %v1317 = vpop.f32.mrf.mxu0
      %v1318 = vadd.f32 %v1253, %v1317
      %1319 = vmatmul.f32.gmra.mxu0 %v787
      %v1320 = vpop.f32.mrf.mxu0
      %v1321 = vadd.f32 %v1256, %v1320
      %1322 = vmatmul.f32.gmra.mxu0 %v790
      %v1323 = vpop.f32.mrf.mxu0
      %v1324 = vadd.f32 %v1259, %v1323
      %1325 = vmatmul.f32.gmra.mxu0 %v793
      %v1326 = vpop.f32.mrf.mxu0
      %v1327 = vadd.f32 %v1262, %v1326
      %1328 = vdwg.mxu0
      %s1329 = scalar_lea.vmem [#allocation2], 96
      %v1330 = vld [vmem:[%s1329] sm:$0xff]
      %v1331 = vld [vmem:[%s1329 + $0x8] sm:$0xff]
      %v1332 = vld [vmem:[%s1329 + $0x10] sm:$0xff]
      %v1333 = vld [vmem:[%s1329 + $0x18] sm:$0xff]
      %v1334 = vld [vmem:[%s1329 + $0x20] sm:$0xff]
      %v1335 = vld [vmem:[%s1329 + $0x28] sm:$0xff]
      %v1336 = vld [vmem:[%s1329 + $0x30] sm:$0xff]
      %v1337 = vld [vmem:[%s1329 + $0x38] sm:$0xff]
      %v1338 = vld [vmem:[%s1329 + $0x40] sm:$0xff]
      %v1339 = vld [vmem:[%s1329 + $0x48] sm:$0xff]
      %v1340 = vld [vmem:[%s1329 + $0x50] sm:$0xff]
      %v1341 = vld [vmem:[%s1329 + $0x58] sm:$0xff]
      %v1342 = vld [vmem:[%s1329 + $0x60] sm:$0xff]
      %v1343 = vld [vmem:[%s1329 + $0x68] sm:$0xff]
      %v1344 = vld [vmem:[%s1329 + $0x70] sm:$0xff]
      %v1345 = vld [vmem:[%s1329 + $0x78] sm:$0xff]
      %v1346 = vld [vmem:[%s1329 + $0x80] sm:$0xff]
      %v1347 = vld [vmem:[%s1329 + $0x88] sm:$0xff]
      %v1348 = vld [vmem:[%s1329 + $0x90] sm:$0xff]
      %v1349 = vld [vmem:[%s1329 + $0x98] sm:$0xff]
      %v1350 = vld [vmem:[%s1329 + $0xa0] sm:$0xff]
      %v1351 = vld [vmem:[%s1329 + $0xa8] sm:$0xff]
      %v1352 = vld [vmem:[%s1329 + $0xb0] sm:$0xff]
      %v1353 = vld [vmem:[%s1329 + $0xb8] sm:$0xff]
      %v1354 = vld [vmem:[%s1329 + $0xc0] sm:$0xff]
      %v1355 = vld [vmem:[%s1329 + $0xc8] sm:$0xff]
      %v1356 = vld [vmem:[%s1329 + $0xd0] sm:$0xff]
      %v1357 = vld [vmem:[%s1329 + $0xd8] sm:$0xff]
      %v1358 = vld [vmem:[%s1329 + $0xe0] sm:$0xff]
      %v1359 = vld [vmem:[%s1329 + $0xe8] sm:$0xff]
      %v1360 = vld [vmem:[%s1329 + $0xf0] sm:$0xff]
      %v1361 = vld [vmem:[%s1329 + $0xf8] sm:$0xff]
      %v1362 = vld [vmem:[%s1329 + $0x100] sm:$0xff]
      %v1363 = vld [vmem:[%s1329 + $0x108] sm:$0xff]
      %v1364 = vld [vmem:[%s1329 + $0x110] sm:$0xff]
      %v1365 = vld [vmem:[%s1329 + $0x118] sm:$0xff]
      %v1366 = vld [vmem:[%s1329 + $0x120] sm:$0xff]
      %v1367 = vld [vmem:[%s1329 + $0x128] sm:$0xff]
      %v1368 = vld [vmem:[%s1329 + $0x130] sm:$0xff]
      %v1369 = vld [vmem:[%s1329 + $0x138] sm:$0xff]
      %v1370 = vld [vmem:[%s1329 + $0x140] sm:$0xff]
      %v1371 = vld [vmem:[%s1329 + $0x148] sm:$0xff]
      %v1372 = vld [vmem:[%s1329 + $0x150] sm:$0xff]
      %v1373 = vld [vmem:[%s1329 + $0x158] sm:$0xff]
      %v1374 = vld [vmem:[%s1329 + $0x160] sm:$0xff]
      %v1375 = vld [vmem:[%s1329 + $0x168] sm:$0xff]
      %v1376 = vld [vmem:[%s1329 + $0x170] sm:$0xff]
      %v1377 = vld [vmem:[%s1329 + $0x178] sm:$0xff]
      %s1378 = scalar_lea.vmem %s3, 768
      %v1379 = vld [vmem:[%s1378] sm:$0xff]
      %v1380 = vld [vmem:[%s1378 + $0x8] sm:$0xff]
      %v1381 = vld [vmem:[%s1378 + $0x10] sm:$0xff]
      %v1382 = vld [vmem:[%s1378 + $0x18] sm:$0xff]
      %v1383 = vld [vmem:[%s1378 + $0x20] sm:$0xff]
      %v1384 = vld [vmem:[%s1378 + $0x28] sm:$0xff]
      %v1385 = vld [vmem:[%s1378 + $0x30] sm:$0xff]
      %v1386 = vld [vmem:[%s1378 + $0x38] sm:$0xff]
      %v1387 = vld [vmem:[%s1378 + $0x40] sm:$0xff]
      %v1388 = vld [vmem:[%s1378 + $0x48] sm:$0xff]
      %v1389 = vld [vmem:[%s1378 + $0x50] sm:$0xff]
      %v1390 = vld [vmem:[%s1378 + $0x58] sm:$0xff]
      %v1391 = vld [vmem:[%s1378 + $0x60] sm:$0xff]
      %v1392 = vld [vmem:[%s1378 + $0x68] sm:$0xff]
      %v1393 = vld [vmem:[%s1378 + $0x70] sm:$0xff]
      %v1394 = vld [vmem:[%s1378 + $0x78] sm:$0xff]
      %v1395 = vld [vmem:[%s1378 + $0x80] sm:$0xff]
      %v1396 = vld [vmem:[%s1378 + $0x88] sm:$0xff]
      %v1397 = vld [vmem:[%s1378 + $0x90] sm:$0xff]
      %v1398 = vld [vmem:[%s1378 + $0x98] sm:$0xff]
      %v1399 = vld [vmem:[%s1378 + $0xa0] sm:$0xff]
      %v1400 = vld [vmem:[%s1378 + $0xa8] sm:$0xff]
      %v1401 = vld [vmem:[%s1378 + $0xb0] sm:$0xff]
      %v1402 = vld [vmem:[%s1378 + $0xb8] sm:$0xff]
      %v1403 = vld [vmem:[%s1378 + $0xc0] sm:$0xff]
      %v1404 = vld [vmem:[%s1378 + $0xc8] sm:$0xff]
      %v1405 = vld [vmem:[%s1378 + $0xd0] sm:$0xff]
      %v1406 = vld [vmem:[%s1378 + $0xd8] sm:$0xff]
      %v1407 = vld [vmem:[%s1378 + $0xe0] sm:$0xff]
      %v1408 = vld [vmem:[%s1378 + $0xe8] sm:$0xff]
      %v1409 = vld [vmem:[%s1378 + $0xf0] sm:$0xff]
      %v1410 = vld [vmem:[%s1378 + $0xf8] sm:$0xff]
      %v1411 = vld [vmem:[%s1378 + $0x100] sm:$0xff]
      %v1412 = vld [vmem:[%s1378 + $0x108] sm:$0xff]
      %v1413 = vld [vmem:[%s1378 + $0x110] sm:$0xff]
      %v1414 = vld [vmem:[%s1378 + $0x118] sm:$0xff]
      %v1415 = vld [vmem:[%s1378 + $0x120] sm:$0xff]
      %v1416 = vld [vmem:[%s1378 + $0x128] sm:$0xff]
      %v1417 = vld [vmem:[%s1378 + $0x130] sm:$0xff]
      %v1418 = vld [vmem:[%s1378 + $0x138] sm:$0xff]
      %v1419 = vld [vmem:[%s1378 + $0x140] sm:$0xff]
      %v1420 = vld [vmem:[%s1378 + $0x148] sm:$0xff]
      %v1421 = vld [vmem:[%s1378 + $0x150] sm:$0xff]
      %v1422 = vld [vmem:[%s1378 + $0x158] sm:$0xff]
      %v1423 = vld [vmem:[%s1378 + $0x160] sm:$0xff]
      %v1424 = vld [vmem:[%s1378 + $0x168] sm:$0xff]
      %v1425 = vld [vmem:[%s1378 + $0x170] sm:$0xff]
      %v1426 = vld [vmem:[%s1378 + $0x178] sm:$0xff]
      %1427 = vmatpush.msra.mxu0 %v1394
      %1428 = vmatpush.msra.mxu0 %v1393
      %1429 = vmatpush.msra.mxu0 %v1392
      %1430 = vmatpush.msra.mxu0 %v1391
      %1431 = vmatpush.msra.mxu0 %v1390
      %1432 = vmatpush.msra.mxu0 %v1389
      %1433 = vmatpush.msra.mxu0 %v1388
      %1434 = vmatpush.msra.mxu0 %v1387
      %1435 = vmatpush.msra.mxu0 %v1386
      %1436 = vmatpush.msra.mxu0 %v1385
      %1437 = vmatpush.msra.mxu0 %v1384
      %1438 = vmatpush.msra.mxu0 %v1383
      %1439 = vmatpush.msra.mxu0 %v1382
      %1440 = vmatpush.msra.mxu0 %v1381
      %1441 = vmatpush.msra.mxu0 %v1380
      %1442 = vmatpush.msra.mxu0 %v1379
      %1443 = vmatmul.f32.gmra.mxu0 %v1330
      %v1444 = vpop.f32.mrf.mxu0
      %v1445 = vadd.f32 0.0, %v1444
      %1446 = vmatmul.f32.gmra.mxu0 %v1333
      %v1447 = vpop.f32.mrf.mxu0
      %v1448 = vadd.f32 0.0, %v1447
      %1449 = vmatmul.f32.gmra.mxu0 %v1336
      %v1450 = vpop.f32.mrf.mxu0
      %v1451 = vadd.f32 0.0, %v1450
      %1452 = vmatmul.f32.gmra.mxu0 %v1339
      %v1453 = vpop.f32.mrf.mxu0
      %v1454 = vadd.f32 0.0, %v1453
      %1455 = vmatmul.f32.gmra.mxu0 %v1342
      %v1456 = vpop.f32.mrf.mxu0
      %v1457 = vadd.f32 0.0, %v1456
      %1458 = vmatmul.f32.gmra.mxu0 %v1345
      %v1459 = vpop.f32.mrf.mxu0
      %v1460 = vadd.f32 0.0, %v1459
      %1461 = vmatmul.f32.gmra.mxu0 %v1348
      %v1462 = vpop.f32.mrf.mxu0
      %v1463 = vadd.f32 0.0, %v1462
      %1464 = vmatmul.f32.gmra.mxu0 %v1351
      %v1465 = vpop.f32.mrf.mxu0
      %v1466 = vadd.f32 0.0, %v1465
      %1467 = vmatmul.f32.gmra.mxu0 %v1354
      %v1468 = vpop.f32.mrf.mxu0
      %v1469 = vadd.f32 0.0, %v1468
      %1470 = vmatmul.f32.gmra.mxu0 %v1357
      %v1471 = vpop.f32.mrf.mxu0
      %v1472 = vadd.f32 0.0, %v1471
      %1473 = vmatmul.f32.gmra.mxu0 %v1360
      %v1474 = vpop.f32.mrf.mxu0
      %v1475 = vadd.f32 0.0, %v1474
      %1476 = vmatmul.f32.gmra.mxu0 %v1363
      %v1477 = vpop.f32.mrf.mxu0
      %v1478 = vadd.f32 0.0, %v1477
      %1479 = vmatmul.f32.gmra.mxu0 %v1366
      %v1480 = vpop.f32.mrf.mxu0
      %v1481 = vadd.f32 0.0, %v1480
      %1482 = vmatmul.f32.gmra.mxu0 %v1369
      %v1483 = vpop.f32.mrf.mxu0
      %v1484 = vadd.f32 0.0, %v1483
      %1485 = vmatmul.f32.gmra.mxu0 %v1372
      %v1486 = vpop.f32.mrf.mxu0
      %v1487 = vadd.f32 0.0, %v1486
      %1488 = vmatmul.f32.gmra.mxu0 %v1375
      %v1489 = vpop.f32.mrf.mxu0
      %v1490 = vadd.f32 0.0, %v1489
      %1491 = vdwg.mxu0
      %1492 = vmatpush.msra.mxu0 %v1410
      %1493 = vmatpush.msra.mxu0 %v1409
      %1494 = vmatpush.msra.mxu0 %v1408
      %1495 = vmatpush.msra.mxu0 %v1407
      %1496 = vmatpush.msra.mxu0 %v1406
      %1497 = vmatpush.msra.mxu0 %v1405
      %1498 = vmatpush.msra.mxu0 %v1404
      %1499 = vmatpush.msra.mxu0 %v1403
      %1500 = vmatpush.msra.mxu0 %v1402
      %1501 = vmatpush.msra.mxu0 %v1401
      %1502 = vmatpush.msra.mxu0 %v1400
      %1503 = vmatpush.msra.mxu0 %v1399
      %1504 = vmatpush.msra.mxu0 %v1398
      %1505 = vmatpush.msra.mxu0 %v1397
      %1506 = vmatpush.msra.mxu0 %v1396
      %1507 = vmatpush.msra.mxu0 %v1395
      %1508 = vmatmul.f32.gmra.mxu0 %v1331
      %v1509 = vpop.f32.mrf.mxu0
      %v1510 = vadd.f32 %v1445, %v1509
      %1511 = vmatmul.f32.gmra.mxu0 %v1334
      %v1512 = vpop.f32.mrf.mxu0
      %v1513 = vadd.f32 %v1448, %v1512
      %1514 = vmatmul.f32.gmra.mxu0 %v1337
      %v1515 = vpop.f32.mrf.mxu0
      %v1516 = vadd.f32 %v1451, %v1515
      %1517 = vmatmul.f32.gmra.mxu0 %v1340
      %v1518 = vpop.f32.mrf.mxu0
      %v1519 = vadd.f32 %v1454, %v1518
      %1520 = vmatmul.f32.gmra.mxu0 %v1343
      %v1521 = vpop.f32.mrf.mxu0
      %v1522 = vadd.f32 %v1457, %v1521
      %1523 = vmatmul.f32.gmra.mxu0 %v1346
      %v1524 = vpop.f32.mrf.mxu0
      %v1525 = vadd.f32 %v1460, %v1524
      %1526 = vmatmul.f32.gmra.mxu0 %v1349
      %v1527 = vpop.f32.mrf.mxu0
      %v1528 = vadd.f32 %v1463, %v1527
      %1529 = vmatmul.f32.gmra.mxu0 %v1352
      %v1530 = vpop.f32.mrf.mxu0
      %v1531 = vadd.f32 %v1466, %v1530
      %1532 = vmatmul.f32.gmra.mxu0 %v1355
      %v1533 = vpop.f32.mrf.mxu0
      %v1534 = vadd.f32 %v1469, %v1533
      %1535 = vmatmul.f32.gmra.mxu0 %v1358
      %v1536 = vpop.f32.mrf.mxu0
      %v1537 = vadd.f32 %v1472, %v1536
      %1538 = vmatmul.f32.gmra.mxu0 %v1361
      %v1539 = vpop.f32.mrf.mxu0
      %v1540 = vadd.f32 %v1475, %v1539
      %1541 = vmatmul.f32.gmra.mxu0 %v1364
      %v1542 = vpop.f32.mrf.mxu0
      %v1543 = vadd.f32 %v1478, %v1542
      %1544 = vmatmul.f32.gmra.mxu0 %v1367
      %v1545 = vpop.f32.mrf.mxu0
      %v1546 = vadd.f32 %v1481, %v1545
      %1547 = vmatmul.f32.gmra.mxu0 %v1370
      %v1548 = vpop.f32.mrf.mxu0
      %v1549 = vadd.f32 %v1484, %v1548
      %1550 = vmatmul.f32.gmra.mxu0 %v1373
      %v1551 = vpop.f32.mrf.mxu0
      %v1552 = vadd.f32 %v1487, %v1551
      %1553 = vmatmul.f32.gmra.mxu0 %v1376
      %v1554 = vpop.f32.mrf.mxu0
      %v1555 = vadd.f32 %v1490, %v1554
      %1556 = vdwg.mxu0
      %1557 = vmatpush.msra.mxu0 %v1426
      %1558 = vmatpush.msra.mxu0 %v1425
      %1559 = vmatpush.msra.mxu0 %v1424
      %1560 = vmatpush.msra.mxu0 %v1423
      %1561 = vmatpush.msra.mxu0 %v1422
      %1562 = vmatpush.msra.mxu0 %v1421
      %1563 = vmatpush.msra.mxu0 %v1420
      %1564 = vmatpush.msra.mxu0 %v1419
      %1565 = vmatpush.msra.mxu0 %v1418
      %1566 = vmatpush.msra.mxu0 %v1417
      %1567 = vmatpush.msra.mxu0 %v1416
      %1568 = vmatpush.msra.mxu0 %v1415
      %1569 = vmatpush.msra.mxu0 %v1414
      %1570 = vmatpush.msra.mxu0 %v1413
      %1571 = vmatpush.msra.mxu0 %v1412
      %1572 = vmatpush.msra.mxu0 %v1411
      %1573 = vmatmul.f32.gmra.mxu0 %v1332
      %v1574 = vpop.f32.mrf.mxu0
      %v1575 = vadd.f32 %v1510, %v1574
      %1576 = vmatmul.f32.gmra.mxu0 %v1335
      %v1577 = vpop.f32.mrf.mxu0
      %v1578 = vadd.f32 %v1513, %v1577
      %1579 = vmatmul.f32.gmra.mxu0 %v1338
      %v1580 = vpop.f32.mrf.mxu0
      %v1581 = vadd.f32 %v1516, %v1580
      %1582 = vmatmul.f32.gmra.mxu0 %v1341
      %v1583 = vpop.f32.mrf.mxu0
      %v1584 = vadd.f32 %v1519, %v1583
      %1585 = vmatmul.f32.gmra.mxu0 %v1344
      %v1586 = vpop.f32.mrf.mxu0
      %v1587 = vadd.f32 %v1522, %v1586
      %1588 = vmatmul.f32.gmra.mxu0 %v1347
      %v1589 = vpop.f32.mrf.mxu0
      %v1590 = vadd.f32 %v1525, %v1589
      %1591 = vmatmul.f32.gmra.mxu0 %v1350
      %v1592 = vpop.f32.mrf.mxu0
      %v1593 = vadd.f32 %v1528, %v1592
      %1594 = vmatmul.f32.gmra.mxu0 %v1353
      %v1595 = vpop.f32.mrf.mxu0
      %v1596 = vadd.f32 %v1531, %v1595
      %1597 = vmatmul.f32.gmra.mxu0 %v1356
      %v1598 = vpop.f32.mrf.mxu0
      %v1599 = vadd.f32 %v1534, %v1598
      %1600 = vmatmul.f32.gmra.mxu0 %v1359
      %v1601 = vpop.f32.mrf.mxu0
      %v1602 = vadd.f32 %v1537, %v1601
      %1603 = vmatmul.f32.gmra.mxu0 %v1362
      %v1604 = vpop.f32.mrf.mxu0
      %v1605 = vadd.f32 %v1540, %v1604
      %1606 = vmatmul.f32.gmra.mxu0 %v1365
      %v1607 = vpop.f32.mrf.mxu0
      %v1608 = vadd.f32 %v1543, %v1607
      %1609 = vmatmul.f32.gmra.mxu0 %v1368
      %v1610 = vpop.f32.mrf.mxu0
      %v1611 = vadd.f32 %v1546, %v1610
      %1612 = vmatmul.f32.gmra.mxu0 %v1371
      %v1613 = vpop.f32.mrf.mxu0
      %v1614 = vadd.f32 %v1549, %v1613
      %1615 = vmatmul.f32.gmra.mxu0 %v1374
      %v1616 = vpop.f32.mrf.mxu0
      %v1617 = vadd.f32 %v1552, %v1616
      %1618 = vmatmul.f32.gmra.mxu0 %v1377
      %v1619 = vpop.f32.mrf.mxu0
      %v1620 = vadd.f32 %v1555, %v1619
      %1621 = vdwg.mxu0
      %v1622 = vadd.f32 %v1282, %v1575
      %v1623 = vadd.f32 %v1285, %v1578
      %v1624 = vadd.f32 %v1288, %v1581
      %v1625 = vadd.f32 %v1291, %v1584
      %v1626 = vadd.f32 %v1294, %v1587
      %v1627 = vadd.f32 %v1297, %v1590
      %v1628 = vadd.f32 %v1300, %v1593
      %v1629 = vadd.f32 %v1303, %v1596
      %v1630 = vadd.f32 %v1306, %v1599
      %v1631 = vadd.f32 %v1309, %v1602
      %v1632 = vadd.f32 %v1312, %v1605
      %v1633 = vadd.f32 %v1315, %v1608
      %v1634 = vadd.f32 %v1318, %v1611
      %v1635 = vadd.f32 %v1321, %v1614
      %v1636 = vadd.f32 %v1324, %v1617
      %v1637 = vadd.f32 %v1327, %v1620
      %1638 = vst [vmem:[%s296] sm:$0xff] %v1622
      %1639 = vst [vmem:[%s296 + $0x8] sm:$0xff] %v1623
      %1640 = vst [vmem:[%s296 + $0x10] sm:$0xff] %v1624
      %1641 = vst [vmem:[%s296 + $0x18] sm:$0xff] %v1625
      %1642 = vst [vmem:[%s296 + $0x20] sm:$0xff] %v1626
      %1643 = vst [vmem:[%s296 + $0x28] sm:$0xff] %v1627
      %1644 = vst [vmem:[%s296 + $0x30] sm:$0xff] %v1628
      %1645 = vst [vmem:[%s296 + $0x38] sm:$0xff] %v1629
      %1646 = vst [vmem:[%s296 + $0x40] sm:$0xff] %v1630
      %1647 = vst [vmem:[%s296 + $0x48] sm:$0xff] %v1631
      %1648 = vst [vmem:[%s296 + $0x50] sm:$0xff] %v1632
      %1649 = vst [vmem:[%s296 + $0x58] sm:$0xff] %v1633
      %1650 = vst [vmem:[%s296 + $0x60] sm:$0xff] %v1634
      %1651 = vst [vmem:[%s296 + $0x68] sm:$0xff] %v1635
      %1652 = vst [vmem:[%s296 + $0x70] sm:$0xff] %v1636
      %1653 = vst [vmem:[%s296 + $0x78] sm:$0xff] %v1637
      %v1654 = vadd.f32 %v1622, %v1623
      %v1655 = vadd.f32 %v1654, %v1624
      %v1656 = vadd.f32 %v1655, %v1625
      %v1657 = vadd.f32 %v1656, %v1626
      %v1658 = vadd.f32 %v1657, %v1627
      %v1659 = vadd.f32 %v1658, %v1628
      %v1660 = vadd.f32 %v1659, %v1629
      %v1661 = vadd.f32 %v1660, %v1630
      %v1662 = vadd.f32 %v1661, %v1631
      %v1663 = vadd.f32 %v1662, %v1632
      %v1664 = vadd.f32 %v1663, %v1633
      %v1665 = vadd.f32 %v1664, %v1634
      %v1666 = vadd.f32 %v1665, %v1635
      %v1667 = vadd.f32 %v1666, %v1636
      %v1668 = vadd.f32 %v1667, %v1637
      %v1669 = vrot.slane %v1668, 4
      %v1670 = vadd.f32 %v1668, %v1669
      %v1671 = vrot.slane %v1670, 2
      %v1672 = vadd.f32 %v1670, %v1671
      %v1673 = vrot.slane %v1672, 1
      %v1674 = vadd.f32 %v1672, %v1673
      %1675 = vst [vmem:[%s304] sm:$0x1] %v1674
      %v1676 = vmul.f32 %v1622, %v1622
      %v1677 = vmul.f32 %v1623, %v1623
      %v1678 = vmul.f32 %v1624, %v1624
      %v1679 = vmul.f32 %v1625, %v1625
      %v1680 = vmul.f32 %v1626, %v1626
      %v1681 = vmul.f32 %v1627, %v1627
      %v1682 = vmul.f32 %v1628, %v1628
      %v1683 = vmul.f32 %v1629, %v1629
      %v1684 = vmul.f32 %v1630, %v1630
      %v1685 = vmul.f32 %v1631, %v1631
      %v1686 = vmul.f32 %v1632, %v1632
      %v1687 = vmul.f32 %v1633, %v1633
      %v1688 = vmul.f32 %v1634, %v1634
      %v1689 = vmul.f32 %v1635, %v1635
      %v1690 = vmul.f32 %v1636, %v1636
      %v1691 = vmul.f32 %v1637, %v1637
      %v1692 = vadd.f32 %v1676, %v1677
      %v1693 = vadd.f32 %v1692, %v1678
      %v1694 = vadd.f32 %v1693, %v1679
      %v1695 = vadd.f32 %v1694, %v1680
      %v1696 = vadd.f32 %v1695, %v1681
      %v1697 = vadd.f32 %v1696, %v1682
      %v1698 = vadd.f32 %v1697, %v1683
      %v1699 = vadd.f32 %v1698, %v1684
      %v1700 = vadd.f32 %v1699, %v1685
      %v1701 = vadd.f32 %v1700, %v1686
      %v1702 = vadd.f32 %v1701, %v1687
      %v1703 = vadd.f32 %v1702, %v1688
      %v1704 = vadd.f32 %v1703, %v1689
      %v1705 = vadd.f32 %v1704, %v1690
      %v1706 = vadd.f32 %v1705, %v1691
      %v1707 = vrot.slane %v1706, 4
      %v1708 = vadd.f32 %v1706, %v1707
      %v1709 = vrot.slane %v1708, 2
      %v1710 = vadd.f32 %v1708, %v1709
      %v1711 = vrot.slane %v1710, 1
      %v1712 = vadd.f32 %v1710, %v1711
      %1713 = vst [vmem:[%s311] sm:$0x1] %v1712
      %s1714 = smul.u32 16, %s23
      %p1715 = scmp.lt.s32.totalorder %s22, 1
      %s1716 = scalar_select %p1715, %s22, 1
      %p1717 = scmp.lt.s32.totalorder %s1714, 31
      %s1718 = scalar_select %p1717, %s1714, 31
      %s1719 = smul.addr %s1716, 32
      %s1720 = sadd.s32 %s1718, %s1719
      %s1721 = smul.addr %s1720, 8
      %s1722 = scalar_lea.vmem %s4, %s1721
      %p1723 = scmp.lt.s32.totalorder %s22, 1
      %s1724 = scalar_select %p1723, %s22, 1
      %p1725 = scmp.lt.s32.totalorder %s23, 1
      %s1726 = scalar_select %p1725, %s23, 1
      %s1727 = smul.addr %s1724, 2
      %s1728 = sadd.s32 %s1726, %s1727
      %s1729 = scalar_lea.vmem %s5, %s1728
      %p1730 = scmp.lt.s32.totalorder %s22, 1
      %s1731 = scalar_select %p1730, %s22, 1
      %p1732 = scmp.lt.s32.totalorder %s23, 1
      %s1733 = scalar_select %p1732, %s23, 1
      %s1734 = smul.addr %s1731, 2
      %s1735 = sadd.s32 %s1733, %s1734
      %s1736 = scalar_lea.vmem %s6, %s1735
      // Predicated region
      $region37: #{double_conv_pallas.3} parent=35 // pred_check
        %p1737 = pneg %p139
      $region38: #{double_conv_pallas.3} parent=35 // pred_check_branch
        %1739 = sbr.rel (%p1737) target = $region40
      $region39: #{double_conv_pallas.3} parent=35 // pred_region
        %s1740 = smul.u32 16, %s23
      $region40: #{double_conv_pallas.3} parent=35 // pred_fallthru
        _
      // Predicated region
      $region41: #{double_conv_pallas.3} parent=35 // pred_check
        %p1741 = pneg %p167
      $region42: #{double_conv_pallas.3} parent=35 // pred_check_branch
        %1743 = sbr.rel (%p1741) target = $region44
      $region43: #{double_conv_pallas.3} parent=35 // pred_region
        _
      $region44: #{double_conv_pallas.3} parent=35 // pred_fallthru
        _
      // Predicated region
      $region45: #{double_conv_pallas.3} parent=35 // pred_check
        %p1744 = pneg %p195
      $region46: #{double_conv_pallas.3} parent=35 // pred_check_branch
        %1746 = sbr.rel (%p1744) target = $region48
      $region47: #{double_conv_pallas.3} parent=35 // pred_region
        _
      $region48: #{double_conv_pallas.3} parent=35 // pred_fallthru
        _
    $region36: #{double_conv_pallas.3} parent=5 // pred_fallthru
      _
    %p1747 = scmp.le.s32.totalorder 2, %s13
    // Predicated region
    $region49: #{double_conv_pallas.3} parent=5 // pred_check
      %p1748 = pneg %p1747
    $region50: #{double_conv_pallas.3} parent=5 // pred_check_branch
      %1750 = sbr.rel (%p1748) target = $region52
    $region51: #{double_conv_pallas.3} parent=5 // pred_region
      %s1751 = ssub.s32 %s13, 2
      // Predicated region
      $region53: #{double_conv_pallas.3} parent=51 // pred_check
        %p1752 = pneg %p145
      $region54: #{double_conv_pallas.3} parent=51 // pred_check_branch
        %1754 = sbr.rel (%p1752) target = $region56
      $region55: #{double_conv_pallas.3} parent=51 // pred_region
        %s1755 = smul.u32 16, %s25
        %p1756 = scmp.lt.s32.totalorder %s24, 1
        %s1757 = scalar_select %p1756, %s24, 1
        %p1758 = scmp.lt.s32.totalorder %s1755, 31
        %s1759 = scalar_select %p1758, %s1755, 31
        %s1760 = smul.addr %s1757, 32
        %s1761 = sadd.s32 %s1759, %s1760
        %s1762 = smul.addr %s1761, 8
        %s1763 = scalar_lea.vmem %s4, %s1762
      $region56: #{double_conv_pallas.3} parent=51 // pred_fallthru
        _
      // Predicated region
      $region57: #{double_conv_pallas.3} parent=51 // pred_check
        %p1764 = pneg %p173
      $region58: #{double_conv_pallas.3} parent=51 // pred_check_branch
        %1766 = sbr.rel (%p1764) target = $region60
      $region59: #{double_conv_pallas.3} parent=51 // pred_region
        %p1767 = scmp.lt.s32.totalorder %s24, 1
        %s1768 = scalar_select %p1767, %s24, 1
        %p1769 = scmp.lt.s32.totalorder %s25, 1
        %s1770 = scalar_select %p1769, %s25, 1
        %s1771 = smul.addr %s1768, 2
        %s1772 = sadd.s32 %s1770, %s1771
        %s1773 = scalar_lea.vmem %s5, %s1772
      $region60: #{double_conv_pallas.3} parent=51 // pred_fallthru
        _
      // Predicated region
      $region61: #{double_conv_pallas.3} parent=51 // pred_check
        %p1774 = pneg %p201
      $region62: #{double_conv_pallas.3} parent=51 // pred_check_branch
        %1776 = sbr.rel (%p1774) target = $region64
      $region63: #{double_conv_pallas.3} parent=51 // pred_region
        %p1777 = scmp.lt.s32.totalorder %s24, 1
        %s1778 = scalar_select %p1777, %s24, 1
        %p1779 = scmp.lt.s32.totalorder %s25, 1
        %s1780 = scalar_select %p1779, %s25, 1
        %s1781 = smul.addr %s1778, 2
        %s1782 = sadd.s32 %s1780, %s1781
        %s1783 = scalar_lea.vmem %s6, %s1782
      $region64: #{double_conv_pallas.3} parent=51 // pred_fallthru
        _
    $region52: #{double_conv_pallas.3} parent=5 // pred_fallthru
      _
  $region6: #{double_conv_pallas.3} parent=0 // loop_footer
    %s17 = sadd.s32 1, %s13
  $region7: #{double_conv_pallas.3} parent=0 // loop_footer_branch
    %12 = sbr.rel target = $region3
  $region8: #{double_conv_pallas.3} parent=0 // loop_exit
    _

</llo_original>
